<compile_context>
chip_gen: v7x
topology: tpu7x:2x2x1
jax: 0.10.0
libtpu: 0.0.40
codegen_flags: <defaults>
</compile_context>

<pallas_src>
import functools
import math

import jax
import jax.numpy as jnp
from jax.experimental import pallas as pl
from jax.experimental.pallas import tpu as pltpu


# ---------------------------------------------------------------------------
# helpers
# ---------------------------------------------------------------------------

def _round_up(x: int, m: int) -> int:
    return -(-x // m) * m


def _sublane(dtype) -> int:
    # Rows packed per vreg: 8 for 4-byte, 16 for 2-byte, 32 for 1-byte dtypes.
    return max(8, 32 // jnp.dtype(dtype).itemsize)


def _vmem_capacity_bytes() -> int:
    try:
        info = pltpu.get_tpu_info()
        cap = getattr(info, "vmem_capacity_bytes", None)
        if cap:
            return int(cap)
    except Exception:
        pass
    return 64 * 1024 * 1024            # conservative default (v7x per-TC VMEM)


def _budgets():
    cap = _vmem_capacity_bytes()
    # 48 MiB limit on v7x (64 MiB VMEM), 96 MiB on v5e/v6e (128 MiB VMEM).
    vmem_limit = min(int(cap * 0.75), 100 * 1024 * 1024)
    budget = max(16 * 1024 * 1024,
                 min(vmem_limit - 12 * 1024 * 1024, 72 * 1024 * 1024))
    return budget, vmem_limit


def _src_index(out_size: int, in_size: int) -> jnp.ndarray:
    # Exact integer formula for PyTorch mode='nearest': src = floor(dst*in/out).
    return (jnp.arange(out_size, dtype=jnp.int32) * in_size) // out_size


def _pick_batch(NC: int, per_img: int, resident: int, budget: int, mult: int):
    """Images per grid step and step count, from padding-aware VMEM budget."""
    avail = max(budget - resident, per_img * mult)
    b_max = max(mult, (avail // per_img) // mult * mult)
    steps = max(1, -(-NC // b_max))
    if NC >= 4 * mult:
        steps = max(steps, 4)          # >=2 per v7x core + load/store overlap
    elif NC >= 2 * mult:
        steps = max(steps, 2)
    if steps > 1 and steps % 2:
        steps += 1                     # balanced work for the two v7x cores
    B = _round_up(-(-NC // steps), mult)
    return int(B), int(steps)


# ---------------------------------------------------------------------------
# Path A: combined one-hot matmul (lane-dense input and output slabs)
# ---------------------------------------------------------------------------

def _combined_kernel(s_ref, x_ref, o_ref, *, precision):
    xv = x_ref[...]
    if xv.dtype != s_ref.dtype:
        xv = xv.astype(s_ref.dtype)
    out = jnp.dot(xv, s_ref[...],
                  preferred_element_type=jnp.float32, precision=precision)
    o_ref[...] = out.astype(o_ref.dtype)


@functools.partial(jax.jit, static_argnums=(1,))
def _resize_combined(x, size):
    N, C, H_in, W_in = x.shape
    H_out, W_out = size
    NC, K, M = N * C, H_in * W_in, H_out * W_out

    s_dtype = jnp.bfloat16 if x.dtype == jnp.bfloat16 else jnp.float32
    s_item = jnp.dtype(s_dtype).itemsize
    x_item = jnp.dtype(x.dtype).itemsize
    precision = (jax.lax.Precision.HIGHEST if s_dtype == jnp.float32
                 else jax.lax.Precision.DEFAULT)

    # Combined one-hot selection matrix: S[(i,j), (r,c)] = 1 iff source pixel
    # (i,j) is the nearest neighbour of output pixel (r,c).  0/1 entries are
    # exact in bf16, so S is stored in bf16 when the input is bf16.
    row_idx = _src_index(H_out, H_in)
    col_idx = _src_index(W_out, W_in)
    flat_src = (row_idx[:, None] * W_in + col_idx[None, :]).reshape(-1)   # (M,)
    s_mat = (jnp.arange(K, dtype=jnp.int32)[:, None]
             == flat_src[None, :]).astype(s_dtype)                        # (K, M)

    budget, vmem_limit = _budgets()
    # Physically padded ((sublane, 128)-tiled) VMEM footprints.
    s_resident = 2 * _round_up(K, _sublane(s_dtype)) * _round_up(M, 128) * s_item
    per_img = (2 * _round_up(K, 128) * x_item      # x block, 2 pipeline buffers
               + 2 * _round_up(M, 128) * x_item    # out block, 2 pipeline buffers
               + _round_up(M, 128) * 4)            # f32 matmul result before cast
    mult = _sublane(x.dtype)                       # B is second-minor of x / out
    B, steps = _pick_batch(NC, per_img, s_resident, budget, mult)
    nc_pad = B * steps

    x_flat = x.reshape(NC, K)                      # free row-major reinterpretation
    if nc_pad != NC:
        x_flat = jnp.pad(x_flat, ((0, nc_pad - NC), (0, 0)))

    out = pl.pallas_call(
        functools.partial(_combined_kernel, precision=precision),
        out_shape=jax.ShapeDtypeStruct((nc_pad, M), x.dtype),
        grid_spec=pltpu.PrefetchScalarGridSpec(
            num_scalar_prefetch=0,
            grid=(steps,),
            in_specs=[
                # Grid-invariant selection matrix: constant block index, so it
                # is DMA'd only once (budget still charges 2 buffers for it).
                pl.BlockSpec((K, M), lambda i: (0, 0)),
                # Lane-dense contiguous input slab: B whole images per step.
                pl.BlockSpec((B, K), lambda i: (i, 0)),
            ],
            # Lane-dense contiguous output slab (unmasked stores, contiguous
            # writeback DMA) — (NC, H_out*W_out) is the natural HBM layout.
            out_specs=pl.BlockSpec((B, M), lambda i: (i, 0)),
        ),
        compiler_params=pltpu.CompilerParams(
            dimension_semantics=("parallel",),
            vmem_limit_bytes=vmem_limit,
        ),
    )(s_mat, x_flat)

    return out[:NC].reshape(N, C, H_out, W_out)


# ---------------------------------------------------------------------------
# Path B: separable fallback (only for feature maps whose S would not fit VMEM)
# ---------------------------------------------------------------------------

def _separable_kernel(r_ref, ct_ref, x_ref, o_ref, *, precision):
    # r_ref : (H_out, H_in)   one-hot row-selection matrix (f32)
    # ct_ref: (W_in, W_out)   one-hot col-selection matrix, pre-transposed (f32)
    # x_ref : (B*H_in, W_in)  block of B images, H folded into rows
    # o_ref : (B, H_out, W_out)
    B, H_out, W_out = o_ref.shape
    H_in = r_ref.shape[1]

    x2 = x_ref[...]
    if x2.dtype != jnp.float32:
        x2 = x2.astype(jnp.float32)

    # Column (W) selection: one folded MXU matmul, batch folded into M.
    cw = jnp.dot(x2, ct_ref[...],
                 preferred_element_type=jnp.float32, precision=precision)
    cw3 = cw.reshape(B, H_in, W_out)          # stays f32 (no narrowing cast)

    # Row (H) selection.
    # TODO(synk): for very large feature maps replace this batched dot
    # (small K = H_in) with a DMA-side row table / sublane gather.
    r_b = jnp.broadcast_to(r_ref[...][None, :, :], (B, H_out, H_in))
    out = jax.lax.dot_general(
        r_b, cw3,
        dimension_numbers=(((2,), (1,)), ((0,), (0,))),
        preferred_element_type=jnp.float32, precision=precision)

    o_ref[...] = out.astype(o_ref.dtype)


@functools.partial(jax.jit, static_argnums=(1,))
def _resize_separable(x, size):
    N, C, H_in, W_in = x.shape
    H_out, W_out = size
    NC = N * C

    x_item = jnp.dtype(x.dtype).itemsize
    precision = jax.lax.Precision.HIGHEST      # all-f32 dots: exact selection

    row_idx = _src_index(H_out, H_in)
    col_idx = _src_index(W_out, W_in)
    r_mat = (row_idx[:, None] ==
             jnp.arange(H_in, dtype=jnp.int32)[None, :]).astype(jnp.float32)
    ct_mat = (jnp.arange(W_in, dtype=jnp.int32)[:, None] ==
              col_idx[None, :]).astype(jnp.float32)

    budget, vmem_limit = _budgets()
    resident = 2 * 4 * (_round_up(H_out, 8) * _round_up(H_in, 128)
                        + _round_up(W_in, 8) * _round_up(W_out, 128))
    per_img = (2 * H_in * _round_up(W_in, 128) * x_item       # x block
               + 2 * H_in * _round_up(W_out, 128) * 4         # cw + reshape copy
               + H_out * _round_up(H_in, 128) * 4             # broadcast R slice
               + H_out * _round_up(W_out, 128) * 4            # f32 result
               + 2 * H_out * _round_up(W_out, 128) * x_item)  # out block
    sub_x = _sublane(x.dtype)
    mult = sub_x // math.gcd(H_in, sub_x)      # keeps B*H_in sublane-aligned
    B, steps = _pick_batch(NC, per_img, resident, budget, mult)
    nc_pad = B * steps

    x2d = x.reshape(NC * H_in, W_in)
    if nc_pad != NC:
        x2d = jnp.pad(x2d, ((0, (nc_pad - NC) * H_in), (0, 0)))

    out = pl.pallas_call(
        functools.partial(_separable_kernel, precision=precision),
        out_shape=jax.ShapeDtypeStruct((nc_pad, H_out, W_out), x.dtype),
        grid_spec=pltpu.PrefetchScalarGridSpec(
            num_scalar_prefetch=0,
            grid=(steps,),
            in_specs=[
                pl.BlockSpec((H_out, H_in), lambda i: (0, 0)),
                pl.BlockSpec((W_in, W_out), lambda i: (0, 0)),
                pl.BlockSpec((B * H_in, W_in), lambda i: (i, 0)),
            ],
            out_specs=pl.BlockSpec((B, H_out, W_out), lambda i: (i, 0, 0)),
        ),
        compiler_params=pltpu.CompilerParams(
            dimension_semantics=("parallel",),
            vmem_limit_bytes=vmem_limit,
        ),
    )(r_mat, ct_mat, x2d)

    return out[:NC].reshape(N, C, H_out, W_out)


# ---------------------------------------------------------------------------
# public wrapper
# ---------------------------------------------------------------------------

def resize_nearest(x, size, *, force_separable: bool = False):
    """Equivalent of _Resize(*size)(x): F.interpolate(x, size) (default
    'nearest' mode) for 4D NCHW input."""
    size = tuple(int(s) for s in size)
    assert x.ndim == 4 and len(size) == 2
    _, _, H_in, W_in = x.shape
    H_out, W_out = size

    s_dtype = jnp.bfloat16 if x.dtype == jnp.bfloat16 else jnp.float32
    s_item = jnp.dtype(s_dtype).itemsize
    budget, _ = _budgets()
    s_resident = (2 * _round_up(H_in * W_in, _sublane(s_dtype))
                  * _round_up(H_out * W_out, 128) * s_item)
    use_combined = (not force_separable
                    and s_resident <= min(24 * 1024 * 1024, budget // 2))
    if use_combined:
        return _resize_combined(x, size)
    return _resize_separable(x, size)


def _reference(x, size):
    H_in, W_in = x.shape[2], x.shape[3]
    row_idx = _src_index(size[0], H_in)
    col_idx = _src_index(size[1], W_in)
    return x[:, :, row_idx[:, None], col_idx[None, :]]


if __name__ == "__main__":
    key = jax.random.PRNGKey(0)
    # Small NCHW input, consistent with _Resize being applied to conv features.
    x = jax.random.normal(key, (2, 4, 16, 16), dtype=jnp.float32)

    # Integer-scale upsample (the typical _Resize(32, 32) case).
    out = jax.block_until_ready(resize_nearest(x, (32, 32)))
    assert out.shape == (2, 4, 32, 32), out.shape
    assert jnp.allclose(out, _reference(x, (32, 32)), atol=1e-6), \
        "mismatch vs reference nearest resize (32, 32)"

    # Non-integer scale exercises the general one-hot selection.
    out2 = jax.block_until_ready(resize_nearest(x, (24, 20)))
    assert out2.shape == (2, 4, 24, 20), out2.shape
    assert jnp.allclose(out2, _reference(x, (24, 20)), atol=1e-6), \
        "mismatch vs reference nearest resize (24, 20)"

    # Exercise the separable fallback path (used for large feature maps).
    out3 = jax.block_until_ready(resize_nearest(x, (24, 20), force_separable=True))
    assert jnp.allclose(out3, _reference(x, (24, 20)), atol=1e-6), \
        "mismatch vs reference nearest resize (24, 20) [separable path]"

    # bf16 input exercises the bf16 selection-matrix / 16-sublane path.
    xb = x.astype(jnp.bfloat16)
    out4 = jax.block_until_ready(resize_nearest(xb, (32, 32)))
    assert out4.dtype == jnp.bfloat16
    assert jnp.allclose(out4.astype(jnp.float32),
                        _reference(xb, (32, 32)).astype(jnp.float32), atol=1e-6), \
        "mismatch vs reference nearest resize (32, 32) [bf16]"

    print("KERNEL_OK")
</pallas_src>

<mosaic_0001>
module attributes {stable_mosaic.version = 11 : i64} {
  func.func @_combined_kernel(%arg0: i32, %arg1: memref<256x1024xf32, #tpu.memory_space<vmem>>, %arg2: memref<8x256xf32, #tpu.memory_space<vmem>>, %arg3: memref<8x1024xf32, #tpu.memory_space<vmem>>) attributes {dimension_semantics = [#tpu.dimension_semantics<parallel>], iteration_bounds = array<i64: 1>, scalar_prefetch = 0 : i64, scratch_operands = 0 : i64, tpu.core_type = #tpu.core_type<tc>, window_params = [{pipeline_mode = #tpu.pipeline_mode<synchronous>, transform_indices = @transform_0, window_bounds = array<i64: 256, 1024>}, {transform_indices = @transform_1, window_bounds = array<i64: 8, 256>}, {transform_indices = @transform_2, window_bounds = array<i64: 8, 1024>}]} {
    %c0 = arith.constant 0 : index
    %c0_0 = arith.constant 0 : index
    %0 = vector.load %arg2[%c0, %c0_0] : memref<8x256xf32, #tpu.memory_space<vmem>>, vector<8x256xf32>
    %c0_1 = arith.constant 0 : index
    %c0_2 = arith.constant 0 : index
    %1 = vector.load %arg1[%c0_1, %c0_2] : memref<256x1024xf32, #tpu.memory_space<vmem>>, vector<256x1024xf32>
    %cst = arith.constant dense<0.000000e+00> : vector<8x1024xf32>
    %2 = tpu.matmul %0, %1, %cst {dimension_numbers = #tpu.dot_dimension_numbers<[1], [0], [0], [1], [0, 0, 1, 1], [], []>, precision = #tpu.contract_precision<fp32>} : vector<8x256xf32>, vector<256x1024xf32>, vector<8x1024xf32> -> vector<8x1024xf32>
    %c0_3 = arith.constant 0 : index
    %c0_4 = arith.constant 0 : index
    %3 = vector.load %arg3[%c0_3, %c0_4] : memref<8x1024xf32, #tpu.memory_space<vmem>>, vector<8x1024xf32>
    tpu.vector_store %arg3[%c0_3, %c0_4], %2 {strides = array<i32>} : memref<8x1024xf32, #tpu.memory_space<vmem>>, vector<8x1024xf32>,
    return
  }
  func.func @transform_0(%arg0: i32) -> (i32, i32) {
    %c0_i32 = arith.constant 0 : i32
    %c0_i32_0 = arith.constant 0 : i32
    %c0_i32_1 = arith.constant 0 : i32
    return %c0_i32, %c0_i32_0 : i32, i32
  }
  func.func @transform_1(%arg0: i32) -> (i32, i32) {
    %c0_i32 = arith.constant 0 : i32
    %c0_i32_0 = arith.constant 0 : i32
    return %arg0, %c0_i32 : i32, i32
  }
  func.func @transform_2(%arg0: i32) -> (i32, i32) {
    %c0_i32 = arith.constant 0 : i32
    %c0_i32_0 = arith.constant 0 : i32
    return %arg0, %c0_i32 : i32, i32
  }
}

</mosaic_0001>

<llo_original>
// kernel: _resize_combined.1
$region0: #{_resize_combined.1}
  #allocation0 [shape = 'u32[]', space=smem, size = 0x4, offset = 0x4, fixed_abs, tag = 'smem constant byte address 0x4 - core index']
  #allocation1 [shape = 'u32[144,128]{1,0:T(1,128)}', space=vmem, size = 0x12000, scoped, tag = 'internal scratch']
  %s0 = inlined_call_operand.vmem [shape: f32[256,1024], index: 0, kind: input, shape index: {}]
  %s1 = inlined_call_operand.vmem [shape: f32[8,256], index: 1, kind: input, shape index: {}]
  %s2 = inlined_call_operand.vmem [shape: f32[8,1024], index: 2, kind: output, shape index: {}]
  %s3 = sld [smem:[#allocation0]]
  $region18: #{_resize_combined.1} parent=0
    _
  %s5 = ssub.s32 1, %s3
  %s6 = scalar_select 0, %s5, %s3
  // Predicated region
  $region2: #{_resize_combined.1} parent=0 // pred_check
    _
  $region3: #{_resize_combined.1} parent=0 // pred_check_branch
    %8 = sbr.rel (0) target = $region5
  $region4: #{_resize_combined.1} parent=0 // pred_region
    _
  $region5: #{_resize_combined.1} parent=0 // pred_fallthru
    _
  // Predicated region
  $region6: #{_resize_combined.1} parent=0 // pred_check
    _
  $region7: #{_resize_combined.1} parent=0 // pred_check_branch
    %10 = sbr.rel (0) target = $region9
  $region8: #{_resize_combined.1} parent=0 // pred_region
    _
  $region9: #{_resize_combined.1} parent=0 // pred_fallthru
    _
  %v11 = vld [vmem:[%s1] sm:$0xff]
  %v12 = vld [vmem:[%s1 + $0x8] sm:$0xff]
  %v13 = vld [vmem:[%s0] sm:$0xff]
  %v14 = vld [vmem:[%s0 + $0x8] sm:$0xff]
  %v15 = vld [vmem:[%s0 + $0x10] sm:$0xff]
  %v16 = vld [vmem:[%s0 + $0x18] sm:$0xff]
  %v17 = vld [vmem:[%s0 + $0x20] sm:$0xff]
  %v18 = vld [vmem:[%s0 + $0x28] sm:$0xff]
  %v19 = vld [vmem:[%s0 + $0x30] sm:$0xff]
  %v20 = vld [vmem:[%s0 + $0x38] sm:$0xff]
  %v21 = vld [vmem:[%s0 + $0x40] sm:$0xff]
  %v22 = vld [vmem:[%s0 + $0x48] sm:$0xff]
  %v23 = vld [vmem:[%s0 + $0x50] sm:$0xff]
  %v24 = vld [vmem:[%s0 + $0x58] sm:$0xff]
  %v25 = vld [vmem:[%s0 + $0x60] sm:$0xff]
  %v26 = vld [vmem:[%s0 + $0x68] sm:$0xff]
  %v27 = vld [vmem:[%s0 + $0x70] sm:$0xff]
  %v28 = vld [vmem:[%s0 + $0x78] sm:$0xff]
  %v29 = vld [vmem:[%s0 + $0x80] sm:$0xff]
  %v30 = vld [vmem:[%s0 + $0x88] sm:$0xff]
  %v31 = vld [vmem:[%s0 + $0x90] sm:$0xff]
  %v32 = vld [vmem:[%s0 + $0x98] sm:$0xff]
  %v33 = vld [vmem:[%s0 + $0xa0] sm:$0xff]
  %v34 = vld [vmem:[%s0 + $0xa8] sm:$0xff]
  %v35 = vld [vmem:[%s0 + $0xb0] sm:$0xff]
  %v36 = vld [vmem:[%s0 + $0xb8] sm:$0xff]
  %v37 = vld [vmem:[%s0 + $0xc0] sm:$0xff]
  %v38 = vld [vmem:[%s0 + $0xc8] sm:$0xff]
  %v39 = vld [vmem:[%s0 + $0xd0] sm:$0xff]
  %v40 = vld [vmem:[%s0 + $0xd8] sm:$0xff]
  %v41 = vld [vmem:[%s0 + $0xe0] sm:$0xff]
  %v42 = vld [vmem:[%s0 + $0xe8] sm:$0xff]
  %v43 = vld [vmem:[%s0 + $0xf0] sm:$0xff]
  %v44 = vld [vmem:[%s0 + $0xf8] sm:$0xff]
  %v45 = vld [vmem:[%s0 + $0x100] sm:$0xff]
  %v46 = vld [vmem:[%s0 + $0x108] sm:$0xff]
  %v47 = vld [vmem:[%s0 + $0x110] sm:$0xff]
  %v48 = vld [vmem:[%s0 + $0x118] sm:$0xff]
  %v49 = vld [vmem:[%s0 + $0x120] sm:$0xff]
  %v50 = vld [vmem:[%s0 + $0x128] sm:$0xff]
  %v51 = vld [vmem:[%s0 + $0x130] sm:$0xff]
  %v52 = vld [vmem:[%s0 + $0x138] sm:$0xff]
  %v53 = vld [vmem:[%s0 + $0x140] sm:$0xff]
  %v54 = vld [vmem:[%s0 + $0x148] sm:$0xff]
  %v55 = vld [vmem:[%s0 + $0x150] sm:$0xff]
  %v56 = vld [vmem:[%s0 + $0x158] sm:$0xff]
  %v57 = vld [vmem:[%s0 + $0x160] sm:$0xff]
  %v58 = vld [vmem:[%s0 + $0x168] sm:$0xff]
  %v59 = vld [vmem:[%s0 + $0x170] sm:$0xff]
  %v60 = vld [vmem:[%s0 + $0x178] sm:$0xff]
  %v61 = vld [vmem:[%s0 + $0x180] sm:$0xff]
  %v62 = vld [vmem:[%s0 + $0x188] sm:$0xff]
  %v63 = vld [vmem:[%s0 + $0x190] sm:$0xff]
  %v64 = vld [vmem:[%s0 + $0x198] sm:$0xff]
  %v65 = vld [vmem:[%s0 + $0x1a0] sm:$0xff]
  %v66 = vld [vmem:[%s0 + $0x1a8] sm:$0xff]
  %v67 = vld [vmem:[%s0 + $0x1b0] sm:$0xff]
  %v68 = vld [vmem:[%s0 + $0x1b8] sm:$0xff]
  %v69 = vld [vmem:[%s0 + $0x1c0] sm:$0xff]
  %v70 = vld [vmem:[%s0 + $0x1c8] sm:$0xff]
  %v71 = vld [vmem:[%s0 + $0x1d0] sm:$0xff]
  %v72 = vld [vmem:[%s0 + $0x1d8] sm:$0xff]
  %v73 = vld [vmem:[%s0 + $0x1e0] sm:$0xff]
  %v74 = vld [vmem:[%s0 + $0x1e8] sm:$0xff]
  %v75 = vld [vmem:[%s0 + $0x1f0] sm:$0xff]
  %v76 = vld [vmem:[%s0 + $0x1f8] sm:$0xff]
  %v77 = vld [vmem:[%s0 + $0x200] sm:$0xff]
  %v78 = vld [vmem:[%s0 + $0x208] sm:$0xff]
  %v79 = vld [vmem:[%s0 + $0x210] sm:$0xff]
  %v80 = vld [vmem:[%s0 + $0x218] sm:$0xff]
  %v81 = vld [vmem:[%s0 + $0x220] sm:$0xff]
  %v82 = vld [vmem:[%s0 + $0x228] sm:$0xff]
  %v83 = vld [vmem:[%s0 + $0x230] sm:$0xff]
  %v84 = vld [vmem:[%s0 + $0x238] sm:$0xff]
  %v85 = vld [vmem:[%s0 + $0x240] sm:$0xff]
  %v86 = vld [vmem:[%s0 + $0x248] sm:$0xff]
  %v87 = vld [vmem:[%s0 + $0x250] sm:$0xff]
  %v88 = vld [vmem:[%s0 + $0x258] sm:$0xff]
  %v89 = vld [vmem:[%s0 + $0x260] sm:$0xff]
  %v90 = vld [vmem:[%s0 + $0x268] sm:$0xff]
  %v91 = vld [vmem:[%s0 + $0x270] sm:$0xff]
  %v92 = vld [vmem:[%s0 + $0x278] sm:$0xff]
  %v93 = vld [vmem:[%s0 + $0x280] sm:$0xff]
  %v94 = vld [vmem:[%s0 + $0x288] sm:$0xff]
  %v95 = vld [vmem:[%s0 + $0x290] sm:$0xff]
  %v96 = vld [vmem:[%s0 + $0x298] sm:$0xff]
  %v97 = vld [vmem:[%s0 + $0x2a0] sm:$0xff]
  %v98 = vld [vmem:[%s0 + $0x2a8] sm:$0xff]
  %v99 = vld [vmem:[%s0 + $0x2b0] sm:$0xff]
  %v100 = vld [vmem:[%s0 + $0x2b8] sm:$0xff]
  %v101 = vld [vmem:[%s0 + $0x2c0] sm:$0xff]
  %v102 = vld [vmem:[%s0 + $0x2c8] sm:$0xff]
  %v103 = vld [vmem:[%s0 + $0x2d0] sm:$0xff]
  %v104 = vld [vmem:[%s0 + $0x2d8] sm:$0xff]
  %v105 = vld [vmem:[%s0 + $0x2e0] sm:$0xff]
  %v106 = vld [vmem:[%s0 + $0x2e8] sm:$0xff]
  %v107 = vld [vmem:[%s0 + $0x2f0] sm:$0xff]
  %v108 = vld [vmem:[%s0 + $0x2f8] sm:$0xff]
  %v109 = vld [vmem:[%s0 + $0x300] sm:$0xff]
  %v110 = vld [vmem:[%s0 + $0x308] sm:$0xff]
  %v111 = vld [vmem:[%s0 + $0x310] sm:$0xff]
  %v112 = vld [vmem:[%s0 + $0x318] sm:$0xff]
  %v113 = vld [vmem:[%s0 + $0x320] sm:$0xff]
  %v114 = vld [vmem:[%s0 + $0x328] sm:$0xff]
  %v115 = vld [vmem:[%s0 + $0x330] sm:$0xff]
  %v116 = vld [vmem:[%s0 + $0x338] sm:$0xff]
  %v117 = vld [vmem:[%s0 + $0x340] sm:$0xff]
  %v118 = vld [vmem:[%s0 + $0x348] sm:$0xff]
  %v119 = vld [vmem:[%s0 + $0x350] sm:$0xff]
  %v120 = vld [vmem:[%s0 + $0x358] sm:$0xff]
  %v121 = vld [vmem:[%s0 + $0x360] sm:$0xff]
  %v122 = vld [vmem:[%s0 + $0x368] sm:$0xff]
  %v123 = vld [vmem:[%s0 + $0x370] sm:$0xff]
  %v124 = vld [vmem:[%s0 + $0x378] sm:$0xff]
  %v125 = vld [vmem:[%s0 + $0x380] sm:$0xff]
  %v126 = vld [vmem:[%s0 + $0x388] sm:$0xff]
  %v127 = vld [vmem:[%s0 + $0x390] sm:$0xff]
  %v128 = vld [vmem:[%s0 + $0x398] sm:$0xff]
  %v129 = vld [vmem:[%s0 + $0x3a0] sm:$0xff]
  %v130 = vld [vmem:[%s0 + $0x3a8] sm:$0xff]
  %v131 = vld [vmem:[%s0 + $0x3b0] sm:$0xff]
  %v132 = vld [vmem:[%s0 + $0x3b8] sm:$0xff]
  %v133 = vld [vmem:[%s0 + $0x3c0] sm:$0xff]
  %v134 = vld [vmem:[%s0 + $0x3c8] sm:$0xff]
  %v135 = vld [vmem:[%s0 + $0x3d0] sm:$0xff]
  %v136 = vld [vmem:[%s0 + $0x3d8] sm:$0xff]
  %v137 = vld [vmem:[%s0 + $0x3e0] sm:$0xff]
  %v138 = vld [vmem:[%s0 + $0x3e8] sm:$0xff]
  %v139 = vld [vmem:[%s0 + $0x3f0] sm:$0xff]
  %v140 = vld [vmem:[%s0 + $0x3f8] sm:$0xff]
  %v141 = vld [vmem:[%s0 + $0x400] sm:$0xff]
  %v142 = vld [vmem:[%s0 + $0x408] sm:$0xff]
  %v143 = vld [vmem:[%s0 + $0x410] sm:$0xff]
  %v144 = vld [vmem:[%s0 + $0x418] sm:$0xff]
  %v145 = vld [vmem:[%s0 + $0x420] sm:$0xff]
  %v146 = vld [vmem:[%s0 + $0x428] sm:$0xff]
  %v147 = vld [vmem:[%s0 + $0x430] sm:$0xff]
  %v148 = vld [vmem:[%s0 + $0x438] sm:$0xff]
  %v149 = vld [vmem:[%s0 + $0x440] sm:$0xff]
  %v150 = vld [vmem:[%s0 + $0x448] sm:$0xff]
  %v151 = vld [vmem:[%s0 + $0x450] sm:$0xff]
  %v152 = vld [vmem:[%s0 + $0x458] sm:$0xff]
  %v153 = vld [vmem:[%s0 + $0x460] sm:$0xff]
  %v154 = vld [vmem:[%s0 + $0x468] sm:$0xff]
  %v155 = vld [vmem:[%s0 + $0x470] sm:$0xff]
  %v156 = vld [vmem:[%s0 + $0x478] sm:$0xff]
  %v157 = vld [vmem:[%s0 + $0x480] sm:$0xff]
  %v158 = vld [vmem:[%s0 + $0x488] sm:$0xff]
  %v159 = vld [vmem:[%s0 + $0x490] sm:$0xff]
  %v160 = vld [vmem:[%s0 + $0x498] sm:$0xff]
  %v161 = vld [vmem:[%s0 + $0x4a0] sm:$0xff]
  %v162 = vld [vmem:[%s0 + $0x4a8] sm:$0xff]
  %v163 = vld [vmem:[%s0 + $0x4b0] sm:$0xff]
  %v164 = vld [vmem:[%s0 + $0x4b8] sm:$0xff]
  %v165 = vld [vmem:[%s0 + $0x4c0] sm:$0xff]
  %v166 = vld [vmem:[%s0 + $0x4c8] sm:$0xff]
  %v167 = vld [vmem:[%s0 + $0x4d0] sm:$0xff]
  %v168 = vld [vmem:[%s0 + $0x4d8] sm:$0xff]
  %v169 = vld [vmem:[%s0 + $0x4e0] sm:$0xff]
  %v170 = vld [vmem:[%s0 + $0x4e8] sm:$0xff]
  %v171 = vld [vmem:[%s0 + $0x4f0] sm:$0xff]
  %v172 = vld [vmem:[%s0 + $0x4f8] sm:$0xff]
  %v173 = vld [vmem:[%s0 + $0x500] sm:$0xff]
  %v174 = vld [vmem:[%s0 + $0x508] sm:$0xff]
  %v175 = vld [vmem:[%s0 + $0x510] sm:$0xff]
  %v176 = vld [vmem:[%s0 + $0x518] sm:$0xff]
  %v177 = vld [vmem:[%s0 + $0x520] sm:$0xff]
  %v178 = vld [vmem:[%s0 + $0x528] sm:$0xff]
  %v179 = vld [vmem:[%s0 + $0x530] sm:$0xff]
  %v180 = vld [vmem:[%s0 + $0x538] sm:$0xff]
  %v181 = vld [vmem:[%s0 + $0x540] sm:$0xff]
  %v182 = vld [vmem:[%s0 + $0x548] sm:$0xff]
  %v183 = vld [vmem:[%s0 + $0x550] sm:$0xff]
  %v184 = vld [vmem:[%s0 + $0x558] sm:$0xff]
  %v185 = vld [vmem:[%s0 + $0x560] sm:$0xff]
  %v186 = vld [vmem:[%s0 + $0x568] sm:$0xff]
  %v187 = vld [vmem:[%s0 + $0x570] sm:$0xff]
  %v188 = vld [vmem:[%s0 + $0x578] sm:$0xff]
  %v189 = vld [vmem:[%s0 + $0x580] sm:$0xff]
  %v190 = vld [vmem:[%s0 + $0x588] sm:$0xff]
  %v191 = vld [vmem:[%s0 + $0x590] sm:$0xff]
  %v192 = vld [vmem:[%s0 + $0x598] sm:$0xff]
  %v193 = vld [vmem:[%s0 + $0x5a0] sm:$0xff]
  %v194 = vld [vmem:[%s0 + $0x5a8] sm:$0xff]
  %v195 = vld [vmem:[%s0 + $0x5b0] sm:$0xff]
  %v196 = vld [vmem:[%s0 + $0x5b8] sm:$0xff]
  %v197 = vld [vmem:[%s0 + $0x5c0] sm:$0xff]
  %v198 = vld [vmem:[%s0 + $0x5c8] sm:$0xff]
  %v199 = vld [vmem:[%s0 + $0x5d0] sm:$0xff]
  %v200 = vld [vmem:[%s0 + $0x5d8] sm:$0xff]
  %v201 = vld [vmem:[%s0 + $0x5e0] sm:$0xff]
  %v202 = vld [vmem:[%s0 + $0x5e8] sm:$0xff]
  %v203 = vld [vmem:[%s0 + $0x5f0] sm:$0xff]
  %v204 = vld [vmem:[%s0 + $0x5f8] sm:$0xff]
  %v205 = vld [vmem:[%s0 + $0x600] sm:$0xff]
  %v206 = vld [vmem:[%s0 + $0x608] sm:$0xff]
  %v207 = vld [vmem:[%s0 + $0x610] sm:$0xff]
  %v208 = vld [vmem:[%s0 + $0x618] sm:$0xff]
  %v209 = vld [vmem:[%s0 + $0x620] sm:$0xff]
  %v210 = vld [vmem:[%s0 + $0x628] sm:$0xff]
  %v211 = vld [vmem:[%s0 + $0x630] sm:$0xff]
  %v212 = vld [vmem:[%s0 + $0x638] sm:$0xff]
  %v213 = vld [vmem:[%s0 + $0x640] sm:$0xff]
  %v214 = vld [vmem:[%s0 + $0x648] sm:$0xff]
  %v215 = vld [vmem:[%s0 + $0x650] sm:$0xff]
  %v216 = vld [vmem:[%s0 + $0x658] sm:$0xff]
  %v217 = vld [vmem:[%s0 + $0x660] sm:$0xff]
  %v218 = vld [vmem:[%s0 + $0x668] sm:$0xff]
  %v219 = vld [vmem:[%s0 + $0x670] sm:$0xff]
  %v220 = vld [vmem:[%s0 + $0x678] sm:$0xff]
  %v221 = vld [vmem:[%s0 + $0x680] sm:$0xff]
  %v222 = vld [vmem:[%s0 + $0x688] sm:$0xff]
  %v223 = vld [vmem:[%s0 + $0x690] sm:$0xff]
  %v224 = vld [vmem:[%s0 + $0x698] sm:$0xff]
  %v225 = vld [vmem:[%s0 + $0x6a0] sm:$0xff]
  %v226 = vld [vmem:[%s0 + $0x6a8] sm:$0xff]
  %v227 = vld [vmem:[%s0 + $0x6b0] sm:$0xff]
  %v228 = vld [vmem:[%s0 + $0x6b8] sm:$0xff]
  %v229 = vld [vmem:[%s0 + $0x6c0] sm:$0xff]
  %v230 = vld [vmem:[%s0 + $0x6c8] sm:$0xff]
  %v231 = vld [vmem:[%s0 + $0x6d0] sm:$0xff]
  %v232 = vld [vmem:[%s0 + $0x6d8] sm:$0xff]
  %v233 = vld [vmem:[%s0 + $0x6e0] sm:$0xff]
  %v234 = vld [vmem:[%s0 + $0x6e8] sm:$0xff]
  %v235 = vld [vmem:[%s0 + $0x6f0] sm:$0xff]
  %v236 = vld [vmem:[%s0 + $0x6f8] sm:$0xff]
  %v237 = vld [vmem:[%s0 + $0x700] sm:$0xff]
  %v238 = vld [vmem:[%s0 + $0x708] sm:$0xff]
  %v239 = vld [vmem:[%s0 + $0x710] sm:$0xff]
  %v240 = vld [vmem:[%s0 + $0x718] sm:$0xff]
  %v241 = vld [vmem:[%s0 + $0x720] sm:$0xff]
  %v242 = vld [vmem:[%s0 + $0x728] sm:$0xff]
  %v243 = vld [vmem:[%s0 + $0x730] sm:$0xff]
  %v244 = vld [vmem:[%s0 + $0x738] sm:$0xff]
  %v245 = vld [vmem:[%s0 + $0x740] sm:$0xff]
  %v246 = vld [vmem:[%s0 + $0x748] sm:$0xff]
  %v247 = vld [vmem:[%s0 + $0x750] sm:$0xff]
  %v248 = vld [vmem:[%s0 + $0x758] sm:$0xff]
  %v249 = vld [vmem:[%s0 + $0x760] sm:$0xff]
  %v250 = vld [vmem:[%s0 + $0x768] sm:$0xff]
  %v251 = vld [vmem:[%s0 + $0x770] sm:$0xff]
  %v252 = vld [vmem:[%s0 + $0x778] sm:$0xff]
  %v253 = vld [vmem:[%s0 + $0x780] sm:$0xff]
  %v254 = vld [vmem:[%s0 + $0x788] sm:$0xff]
  %v255 = vld [vmem:[%s0 + $0x790] sm:$0xff]
  %v256 = vld [vmem:[%s0 + $0x798] sm:$0xff]
  %v257 = vld [vmem:[%s0 + $0x7a0] sm:$0xff]
  %v258 = vld [vmem:[%s0 + $0x7a8] sm:$0xff]
  %v259 = vld [vmem:[%s0 + $0x7b0] sm:$0xff]
  %v260 = vld [vmem:[%s0 + $0x7b8] sm:$0xff]
  %v261 = vld [vmem:[%s0 + $0x7c0] sm:$0xff]
  %v262 = vld [vmem:[%s0 + $0x7c8] sm:$0xff]
  %v263 = vld [vmem:[%s0 + $0x7d0] sm:$0xff]
  %v264 = vld [vmem:[%s0 + $0x7d8] sm:$0xff]
  %v265 = vld [vmem:[%s0 + $0x7e0] sm:$0xff]
  %v266 = vld [vmem:[%s0 + $0x7e8] sm:$0xff]
  %v267 = vld [vmem:[%s0 + $0x7f0] sm:$0xff]
  %v268 = vld [vmem:[%s0 + $0x7f8] sm:$0xff]
  %v269 = vand.u32 %v14, 4294901760
  %270 = vmatprep.subr.mxu0 %v269
  %v271 = vand.u32 %v13, 4294901760
  %272 = vmatpush1.msra.mxu0 %v271
  %v273 = vand.u32 %v22, 4294901760
  %274 = vmatprep.subr.mxu0 %v273
  %v275 = vand.u32 %v21, 4294901760
  %276 = vmatpush1.msra.mxu0 %v275
  %v277 = vand.u32 %v30, 4294901760
  %278 = vmatprep.subr.mxu0 %v277
  %v279 = vand.u32 %v29, 4294901760
  %280 = vmatpush1.msra.mxu0 %v279
  %v281 = vand.u32 %v38, 4294901760
  %282 = vmatprep.subr.mxu0 %v281
  %v283 = vand.u32 %v37, 4294901760
  %284 = vmatpush1.msra.mxu0 %v283
  %v285 = vand.u32 %v46, 4294901760
  %286 = vmatprep.subr.mxu0 %v285
  %v287 = vand.u32 %v45, 4294901760
  %288 = vmatpush1.msra.mxu0 %v287
  %v289 = vand.u32 %v54, 4294901760
  %290 = vmatprep.subr.mxu0 %v289
  %v291 = vand.u32 %v53, 4294901760
  %292 = vmatpush1.msra.mxu0 %v291
  %v293 = vand.u32 %v62, 4294901760
  %294 = vmatprep.subr.mxu0 %v293
  %v295 = vand.u32 %v61, 4294901760
  %296 = vmatpush1.msra.mxu0 %v295
  %v297 = vand.u32 %v70, 4294901760
  %298 = vmatprep.subr.mxu0 %v297
  %v299 = vand.u32 %v69, 4294901760
  %300 = vmatpush1.msra.mxu0 %v299
  %v301 = vand.u32 %v78, 4294901760
  %302 = vmatprep.subr.mxu0 %v301
  %v303 = vand.u32 %v77, 4294901760
  %304 = vmatpush1.msra.mxu0 %v303
  %v305 = vand.u32 %v86, 4294901760
  %306 = vmatprep.subr.mxu0 %v305
  %v307 = vand.u32 %v85, 4294901760
  %308 = vmatpush1.msra.mxu0 %v307
  %v309 = vand.u32 %v94, 4294901760
  %310 = vmatprep.subr.mxu0 %v309
  %v311 = vand.u32 %v93, 4294901760
  %312 = vmatpush1.msra.mxu0 %v311
  %v313 = vand.u32 %v102, 4294901760
  %314 = vmatprep.subr.mxu0 %v313
  %v315 = vand.u32 %v101, 4294901760
  %316 = vmatpush1.msra.mxu0 %v315
  %v317 = vand.u32 %v110, 4294901760
  %318 = vmatprep.subr.mxu0 %v317
  %v319 = vand.u32 %v109, 4294901760
  %320 = vmatpush1.msra.mxu0 %v319
  %v321 = vand.u32 %v118, 4294901760
  %322 = vmatprep.subr.mxu0 %v321
  %v323 = vand.u32 %v117, 4294901760
  %324 = vmatpush1.msra.mxu0 %v323
  %v325 = vand.u32 %v126, 4294901760
  %326 = vmatprep.subr.mxu0 %v325
  %v327 = vand.u32 %v125, 4294901760
  %328 = vmatpush1.msra.mxu0 %v327
  %v329 = vand.u32 %v134, 4294901760
  %330 = vmatprep.subr.mxu0 %v329
  %v331 = vand.u32 %v133, 4294901760
  %332 = vmatpush1.msra.mxu0 %v331
  %v333 = vand.u32 %v142, 4294901760
  %334 = vmatprep.subr.mxu0 %v333
  %v335 = vand.u32 %v141, 4294901760
  %336 = vmatpush1.msra.mxu0 %v335
  %v337 = vand.u32 %v150, 4294901760
  %338 = vmatprep.subr.mxu0 %v337
  %v339 = vand.u32 %v149, 4294901760
  %340 = vmatpush1.msra.mxu0 %v339
  %v341 = vand.u32 %v158, 4294901760
  %342 = vmatprep.subr.mxu0 %v341
  %v343 = vand.u32 %v157, 4294901760
  %344 = vmatpush1.msra.mxu0 %v343
  %v345 = vand.u32 %v166, 4294901760
  %346 = vmatprep.subr.mxu0 %v345
  %v347 = vand.u32 %v165, 4294901760
  %348 = vmatpush1.msra.mxu0 %v347
  %v349 = vand.u32 %v174, 4294901760
  %350 = vmatprep.subr.mxu0 %v349
  %v351 = vand.u32 %v173, 4294901760
  %352 = vmatpush1.msra.mxu0 %v351
  %v353 = vand.u32 %v182, 4294901760
  %354 = vmatprep.subr.mxu0 %v353
  %v355 = vand.u32 %v181, 4294901760
  %356 = vmatpush1.msra.mxu0 %v355
  %v357 = vand.u32 %v190, 4294901760
  %358 = vmatprep.subr.mxu0 %v357
  %v359 = vand.u32 %v189, 4294901760
  %360 = vmatpush1.msra.mxu0 %v359
  %v361 = vand.u32 %v198, 4294901760
  %362 = vmatprep.subr.mxu0 %v361
  %v363 = vand.u32 %v197, 4294901760
  %364 = vmatpush1.msra.mxu0 %v363
  %v365 = vand.u32 %v206, 4294901760
  %366 = vmatprep.subr.mxu0 %v365
  %v367 = vand.u32 %v205, 4294901760
  %368 = vmatpush1.msra.mxu0 %v367
  %v369 = vand.u32 %v214, 4294901760
  %370 = vmatprep.subr.mxu0 %v369
  %v371 = vand.u32 %v213, 4294901760
  %372 = vmatpush1.msra.mxu0 %v371
  %v373 = vand.u32 %v222, 4294901760
  %374 = vmatprep.subr.mxu0 %v373
  %v375 = vand.u32 %v221, 4294901760
  %376 = vmatpush1.msra.mxu0 %v375
  %v377 = vand.u32 %v230, 4294901760
  %378 = vmatprep.subr.mxu0 %v377
  %v379 = vand.u32 %v229, 4294901760
  %380 = vmatpush1.msra.mxu0 %v379
  %v381 = vand.u32 %v238, 4294901760
  %382 = vmatprep.subr.mxu0 %v381
  %v383 = vand.u32 %v237, 4294901760
  %384 = vmatpush1.msra.mxu0 %v383
  %v385 = vand.u32 %v246, 4294901760
  %386 = vmatprep.subr.mxu0 %v385
  %v387 = vand.u32 %v245, 4294901760
  %388 = vmatpush1.msra.mxu0 %v387
  %v389 = vand.u32 %v254, 4294901760
  %390 = vmatprep.subr.mxu0 %v389
  %v391 = vand.u32 %v253, 4294901760
  %392 = vmatpush1.msra.mxu0 %v391
  %v393 = vand.u32 %v262, 4294901760
  %394 = vmatprep.subr.mxu0 %v393
  %v395 = vand.u32 %v261, 4294901760
  %396 = vmatpush1.msra.mxu0 %v395
  %v397 = vand.u32 %v12, 4294901760
  %v398 = vsub.f32 %v12, %v397
  %v399 = vand.u32 %v398, 4294901760
  %v400 = vsub.f32 %v398, %v399
  %v401 = vand.u32 %v400, 4294901760
  %402 = vmatprep.mubr.f32.mxu0 %v401
  %v403 = vand.u32 %v11, 4294901760
  %v404 = vsub.f32 %v11, %v403
  %v405 = vand.u32 %v404, 4294901760
  %v406 = vsub.f32 %v404, %v405
  %v407 = vand.u32 %v406, 4294901760
  %408 = vmatmul.mubr.f32.gmra.mrb[0].mxu0 %v407
  %v409 = vpop.f32.mrb[0].mxu0
  %v410 = vadd.f32 0.0, %v409
  %v411 = vpop.f32.mrb[0].mxu0
  %v412 = vadd.f32 0.0, %v411
  %413 = vdwg.mxu0
  %v414 = vand.u32 %v14, 4294901760
  %v415 = vsub.f32 %v14, %v414
  %v416 = vand.u32 %v415, 4294901760
  %v417 = vsub.f32 %v415, %v416
  %v418 = vand.u32 %v417, 4294901760
  %419 = vmatprep.subr.mxu0 %v418
  %v420 = vand.u32 %v13, 4294901760
  %v421 = vsub.f32 %v13, %v420
  %v422 = vand.u32 %v421, 4294901760
  %v423 = vsub.f32 %v421, %v422
  %v424 = vand.u32 %v423, 4294901760
  %425 = vmatpush1.msra.mxu0 %v424
  %v426 = vand.u32 %v22, 4294901760
  %v427 = vsub.f32 %v22, %v426
  %v428 = vand.u32 %v427, 4294901760
  %v429 = vsub.f32 %v427, %v428
  %v430 = vand.u32 %v429, 4294901760
  %431 = vmatprep.subr.mxu0 %v430
  %v432 = vand.u32 %v21, 4294901760
  %v433 = vsub.f32 %v21, %v432
  %v434 = vand.u32 %v433, 4294901760
  %v435 = vsub.f32 %v433, %v434
  %v436 = vand.u32 %v435, 4294901760
  %437 = vmatpush1.msra.mxu0 %v436
  %v438 = vand.u32 %v30, 4294901760
  %v439 = vsub.f32 %v30, %v438
  %v440 = vand.u32 %v439, 4294901760
  %v441 = vsub.f32 %v439, %v440
  %v442 = vand.u32 %v441, 4294901760
  %443 = vmatprep.subr.mxu0 %v442
  %v444 = vand.u32 %v29, 4294901760
  %v445 = vsub.f32 %v29, %v444
  %v446 = vand.u32 %v445, 4294901760
  %v447 = vsub.f32 %v445, %v446
  %v448 = vand.u32 %v447, 4294901760
  %449 = vmatpush1.msra.mxu0 %v448
  %v450 = vand.u32 %v38, 4294901760
  %v451 = vsub.f32 %v38, %v450
  %v452 = vand.u32 %v451, 4294901760
  %v453 = vsub.f32 %v451, %v452
  %v454 = vand.u32 %v453, 4294901760
  %455 = vmatprep.subr.mxu0 %v454
  %v456 = vand.u32 %v37, 4294901760
  %v457 = vsub.f32 %v37, %v456
  %v458 = vand.u32 %v457, 4294901760
  %v459 = vsub.f32 %v457, %v458
  %v460 = vand.u32 %v459, 4294901760
  %461 = vmatpush1.msra.mxu0 %v460
  %v462 = vand.u32 %v46, 4294901760
  %v463 = vsub.f32 %v46, %v462
  %v464 = vand.u32 %v463, 4294901760
  %v465 = vsub.f32 %v463, %v464
  %v466 = vand.u32 %v465, 4294901760
  %467 = vmatprep.subr.mxu0 %v466
  %v468 = vand.u32 %v45, 4294901760
  %v469 = vsub.f32 %v45, %v468
  %v470 = vand.u32 %v469, 4294901760
  %v471 = vsub.f32 %v469, %v470
  %v472 = vand.u32 %v471, 4294901760
  %473 = vmatpush1.msra.mxu0 %v472
  %v474 = vand.u32 %v54, 4294901760
  %v475 = vsub.f32 %v54, %v474
  %v476 = vand.u32 %v475, 4294901760
  %v477 = vsub.f32 %v475, %v476
  %v478 = vand.u32 %v477, 4294901760
  %479 = vmatprep.subr.mxu0 %v478
  %v480 = vand.u32 %v53, 4294901760
  %v481 = vsub.f32 %v53, %v480
  %v482 = vand.u32 %v481, 4294901760
  %v483 = vsub.f32 %v481, %v482
  %v484 = vand.u32 %v483, 4294901760
  %485 = vmatpush1.msra.mxu0 %v484
  %v486 = vand.u32 %v62, 4294901760
  %v487 = vsub.f32 %v62, %v486
  %v488 = vand.u32 %v487, 4294901760
  %v489 = vsub.f32 %v487, %v488
  %v490 = vand.u32 %v489, 4294901760
  %491 = vmatprep.subr.mxu0 %v490
  %v492 = vand.u32 %v61, 4294901760
  %v493 = vsub.f32 %v61, %v492
  %v494 = vand.u32 %v493, 4294901760
  %v495 = vsub.f32 %v493, %v494
  %v496 = vand.u32 %v495, 4294901760
  %497 = vmatpush1.msra.mxu0 %v496
  %v498 = vand.u32 %v70, 4294901760
  %v499 = vsub.f32 %v70, %v498
  %v500 = vand.u32 %v499, 4294901760
  %v501 = vsub.f32 %v499, %v500
  %v502 = vand.u32 %v501, 4294901760
  %503 = vmatprep.subr.mxu0 %v502
  %v504 = vand.u32 %v69, 4294901760
  %v505 = vsub.f32 %v69, %v504
  %v506 = vand.u32 %v505, 4294901760
  %v507 = vsub.f32 %v505, %v506
  %v508 = vand.u32 %v507, 4294901760
  %509 = vmatpush1.msra.mxu0 %v508
  %v510 = vand.u32 %v78, 4294901760
  %v511 = vsub.f32 %v78, %v510
  %v512 = vand.u32 %v511, 4294901760
  %v513 = vsub.f32 %v511, %v512
  %v514 = vand.u32 %v513, 4294901760
  %515 = vmatprep.subr.mxu0 %v514
  %v516 = vand.u32 %v77, 4294901760
  %v517 = vsub.f32 %v77, %v516
  %v518 = vand.u32 %v517, 4294901760
  %v519 = vsub.f32 %v517, %v518
  %v520 = vand.u32 %v519, 4294901760
  %521 = vmatpush1.msra.mxu0 %v520
  %v522 = vand.u32 %v86, 4294901760
  %v523 = vsub.f32 %v86, %v522
  %v524 = vand.u32 %v523, 4294901760
  %v525 = vsub.f32 %v523, %v524
  %v526 = vand.u32 %v525, 4294901760
  %527 = vmatprep.subr.mxu0 %v526
  %v528 = vand.u32 %v85, 4294901760
  %v529 = vsub.f32 %v85, %v528
  %v530 = vand.u32 %v529, 4294901760
  %v531 = vsub.f32 %v529, %v530
  %v532 = vand.u32 %v531, 4294901760
  %533 = vmatpush1.msra.mxu0 %v532
  %v534 = vand.u32 %v94, 4294901760
  %v535 = vsub.f32 %v94, %v534
  %v536 = vand.u32 %v535, 4294901760
  %v537 = vsub.f32 %v535, %v536
  %v538 = vand.u32 %v537, 4294901760
  %539 = vmatprep.subr.mxu0 %v538
  %v540 = vand.u32 %v93, 4294901760
  %v541 = vsub.f32 %v93, %v540
  %v542 = vand.u32 %v541, 4294901760
  %v543 = vsub.f32 %v541, %v542
  %v544 = vand.u32 %v543, 4294901760
  %545 = vmatpush1.msra.mxu0 %v544
  %v546 = vand.u32 %v102, 4294901760
  %v547 = vsub.f32 %v102, %v546
  %v548 = vand.u32 %v547, 4294901760
  %v549 = vsub.f32 %v547, %v548
  %v550 = vand.u32 %v549, 4294901760
  %551 = vmatprep.subr.mxu0 %v550
  %v552 = vand.u32 %v101, 4294901760
  %v553 = vsub.f32 %v101, %v552
  %v554 = vand.u32 %v553, 4294901760
  %v555 = vsub.f32 %v553, %v554
  %v556 = vand.u32 %v555, 4294901760
  %557 = vmatpush1.msra.mxu0 %v556
  %v558 = vand.u32 %v110, 4294901760
  %v559 = vsub.f32 %v110, %v558
  %v560 = vand.u32 %v559, 4294901760
  %v561 = vsub.f32 %v559, %v560
  %v562 = vand.u32 %v561, 4294901760
  %563 = vmatprep.subr.mxu0 %v562
  %v564 = vand.u32 %v109, 4294901760
  %v565 = vsub.f32 %v109, %v564
  %v566 = vand.u32 %v565, 4294901760
  %v567 = vsub.f32 %v565, %v566
  %v568 = vand.u32 %v567, 4294901760
  %569 = vmatpush1.msra.mxu0 %v568
  %v570 = vand.u32 %v118, 4294901760
  %v571 = vsub.f32 %v118, %v570
  %v572 = vand.u32 %v571, 4294901760
  %v573 = vsub.f32 %v571, %v572
  %v574 = vand.u32 %v573, 4294901760
  %575 = vmatprep.subr.mxu0 %v574
  %v576 = vand.u32 %v117, 4294901760
  %v577 = vsub.f32 %v117, %v576
  %v578 = vand.u32 %v577, 4294901760
  %v579 = vsub.f32 %v577, %v578
  %v580 = vand.u32 %v579, 4294901760
  %581 = vmatpush1.msra.mxu0 %v580
  %v582 = vand.u32 %v126, 4294901760
  %v583 = vsub.f32 %v126, %v582
  %v584 = vand.u32 %v583, 4294901760
  %v585 = vsub.f32 %v583, %v584
  %v586 = vand.u32 %v585, 4294901760
  %587 = vmatprep.subr.mxu0 %v586
  %v588 = vand.u32 %v125, 4294901760
  %v589 = vsub.f32 %v125, %v588
  %v590 = vand.u32 %v589, 4294901760
  %v591 = vsub.f32 %v589, %v590
  %v592 = vand.u32 %v591, 4294901760
  %593 = vmatpush1.msra.mxu0 %v592
  %v594 = vand.u32 %v134, 4294901760
  %v595 = vsub.f32 %v134, %v594
  %v596 = vand.u32 %v595, 4294901760
  %v597 = vsub.f32 %v595, %v596
  %v598 = vand.u32 %v597, 4294901760
  %599 = vmatprep.subr.mxu0 %v598
  %v600 = vand.u32 %v133, 4294901760
  %v601 = vsub.f32 %v133, %v600
  %v602 = vand.u32 %v601, 4294901760
  %v603 = vsub.f32 %v601, %v602
  %v604 = vand.u32 %v603, 4294901760
  %605 = vmatpush1.msra.mxu0 %v604
  %v606 = vand.u32 %v142, 4294901760
  %v607 = vsub.f32 %v142, %v606
  %v608 = vand.u32 %v607, 4294901760
  %v609 = vsub.f32 %v607, %v608
  %v610 = vand.u32 %v609, 4294901760
  %611 = vmatprep.subr.mxu0 %v610
  %v612 = vand.u32 %v141, 4294901760
  %v613 = vsub.f32 %v141, %v612
  %v614 = vand.u32 %v613, 4294901760
  %v615 = vsub.f32 %v613, %v614
  %v616 = vand.u32 %v615, 4294901760
  %617 = vmatpush1.msra.mxu0 %v616
  %v618 = vand.u32 %v150, 4294901760
  %v619 = vsub.f32 %v150, %v618
  %v620 = vand.u32 %v619, 4294901760
  %v621 = vsub.f32 %v619, %v620
  %v622 = vand.u32 %v621, 4294901760
  %623 = vmatprep.subr.mxu0 %v622
  %v624 = vand.u32 %v149, 4294901760
  %v625 = vsub.f32 %v149, %v624
  %v626 = vand.u32 %v625, 4294901760
  %v627 = vsub.f32 %v625, %v626
  %v628 = vand.u32 %v627, 4294901760
  %629 = vmatpush1.msra.mxu0 %v628
  %v630 = vand.u32 %v158, 4294901760
  %v631 = vsub.f32 %v158, %v630
  %v632 = vand.u32 %v631, 4294901760
  %v633 = vsub.f32 %v631, %v632
  %v634 = vand.u32 %v633, 4294901760
  %635 = vmatprep.subr.mxu0 %v634
  %v636 = vand.u32 %v157, 4294901760
  %v637 = vsub.f32 %v157, %v636
  %v638 = vand.u32 %v637, 4294901760
  %v639 = vsub.f32 %v637, %v638
  %v640 = vand.u32 %v639, 4294901760
  %641 = vmatpush1.msra.mxu0 %v640
  %v642 = vand.u32 %v166, 4294901760
  %v643 = vsub.f32 %v166, %v642
  %v644 = vand.u32 %v643, 4294901760
  %v645 = vsub.f32 %v643, %v644
  %v646 = vand.u32 %v645, 4294901760
  %647 = vmatprep.subr.mxu0 %v646
  %v648 = vand.u32 %v165, 4294901760
  %v649 = vsub.f32 %v165, %v648
  %v650 = vand.u32 %v649, 4294901760
  %v651 = vsub.f32 %v649, %v650
  %v652 = vand.u32 %v651, 4294901760
  %653 = vmatpush1.msra.mxu0 %v652
  %v654 = vand.u32 %v174, 4294901760
  %v655 = vsub.f32 %v174, %v654
  %v656 = vand.u32 %v655, 4294901760
  %v657 = vsub.f32 %v655, %v656
  %v658 = vand.u32 %v657, 4294901760
  %659 = vmatprep.subr.mxu0 %v658
  %v660 = vand.u32 %v173, 4294901760
  %v661 = vsub.f32 %v173, %v660
  %v662 = vand.u32 %v661, 4294901760
  %v663 = vsub.f32 %v661, %v662
  %v664 = vand.u32 %v663, 4294901760
  %665 = vmatpush1.msra.mxu0 %v664
  %v666 = vand.u32 %v182, 4294901760
  %v667 = vsub.f32 %v182, %v666
  %v668 = vand.u32 %v667, 4294901760
  %v669 = vsub.f32 %v667, %v668
  %v670 = vand.u32 %v669, 4294901760
  %671 = vmatprep.subr.mxu0 %v670
  %v672 = vand.u32 %v181, 4294901760
  %v673 = vsub.f32 %v181, %v672
  %v674 = vand.u32 %v673, 4294901760
  %v675 = vsub.f32 %v673, %v674
  %v676 = vand.u32 %v675, 4294901760
  %677 = vmatpush1.msra.mxu0 %v676
  %v678 = vand.u32 %v190, 4294901760
  %v679 = vsub.f32 %v190, %v678
  %v680 = vand.u32 %v679, 4294901760
  %v681 = vsub.f32 %v679, %v680
  %v682 = vand.u32 %v681, 4294901760
  %683 = vmatprep.subr.mxu0 %v682
  %v684 = vand.u32 %v189, 4294901760
  %v685 = vsub.f32 %v189, %v684
  %v686 = vand.u32 %v685, 4294901760
  %v687 = vsub.f32 %v685, %v686
  %v688 = vand.u32 %v687, 4294901760
  %689 = vmatpush1.msra.mxu0 %v688
  %v690 = vand.u32 %v198, 4294901760
  %v691 = vsub.f32 %v198, %v690
  %v692 = vand.u32 %v691, 4294901760
  %v693 = vsub.f32 %v691, %v692
  %v694 = vand.u32 %v693, 4294901760
  %695 = vmatprep.subr.mxu0 %v694
  %v696 = vand.u32 %v197, 4294901760
  %v697 = vsub.f32 %v197, %v696
  %v698 = vand.u32 %v697, 4294901760
  %v699 = vsub.f32 %v697, %v698
  %v700 = vand.u32 %v699, 4294901760
  %701 = vmatpush1.msra.mxu0 %v700
  %v702 = vand.u32 %v206, 4294901760
  %v703 = vsub.f32 %v206, %v702
  %v704 = vand.u32 %v703, 4294901760
  %v705 = vsub.f32 %v703, %v704
  %v706 = vand.u32 %v705, 4294901760
  %707 = vmatprep.subr.mxu0 %v706
  %v708 = vand.u32 %v205, 4294901760
  %v709 = vsub.f32 %v205, %v708
  %v710 = vand.u32 %v709, 4294901760
  %v711 = vsub.f32 %v709, %v710
  %v712 = vand.u32 %v711, 4294901760
  %713 = vmatpush1.msra.mxu0 %v712
  %v714 = vand.u32 %v214, 4294901760
  %v715 = vsub.f32 %v214, %v714
  %v716 = vand.u32 %v715, 4294901760
  %v717 = vsub.f32 %v715, %v716
  %v718 = vand.u32 %v717, 4294901760
  %719 = vmatprep.subr.mxu0 %v718
  %v720 = vand.u32 %v213, 4294901760
  %v721 = vsub.f32 %v213, %v720
  %v722 = vand.u32 %v721, 4294901760
  %v723 = vsub.f32 %v721, %v722
  %v724 = vand.u32 %v723, 4294901760
  %725 = vmatpush1.msra.mxu0 %v724
  %v726 = vand.u32 %v222, 4294901760
  %v727 = vsub.f32 %v222, %v726
  %v728 = vand.u32 %v727, 4294901760
  %v729 = vsub.f32 %v727, %v728
  %v730 = vand.u32 %v729, 4294901760
  %731 = vmatprep.subr.mxu0 %v730
  %v732 = vand.u32 %v221, 4294901760
  %v733 = vsub.f32 %v221, %v732
  %v734 = vand.u32 %v733, 4294901760
  %v735 = vsub.f32 %v733, %v734
  %v736 = vand.u32 %v735, 4294901760
  %737 = vmatpush1.msra.mxu0 %v736
  %v738 = vand.u32 %v230, 4294901760
  %v739 = vsub.f32 %v230, %v738
  %v740 = vand.u32 %v739, 4294901760
  %v741 = vsub.f32 %v739, %v740
  %v742 = vand.u32 %v741, 4294901760
  %743 = vmatprep.subr.mxu0 %v742
  %v744 = vand.u32 %v229, 4294901760
  %v745 = vsub.f32 %v229, %v744
  %v746 = vand.u32 %v745, 4294901760
  %v747 = vsub.f32 %v745, %v746
  %v748 = vand.u32 %v747, 4294901760
  %749 = vmatpush1.msra.mxu0 %v748
  %v750 = vand.u32 %v238, 4294901760
  %v751 = vsub.f32 %v238, %v750
  %v752 = vand.u32 %v751, 4294901760
  %v753 = vsub.f32 %v751, %v752
  %v754 = vand.u32 %v753, 4294901760
  %755 = vmatprep.subr.mxu0 %v754
  %v756 = vand.u32 %v237, 4294901760
  %v757 = vsub.f32 %v237, %v756
  %v758 = vand.u32 %v757, 4294901760
  %v759 = vsub.f32 %v757, %v758
  %v760 = vand.u32 %v759, 4294901760
  %761 = vmatpush1.msra.mxu0 %v760
  %v762 = vand.u32 %v246, 4294901760
  %v763 = vsub.f32 %v246, %v762
  %v764 = vand.u32 %v763, 4294901760
  %v765 = vsub.f32 %v763, %v764
  %v766 = vand.u32 %v765, 4294901760
  %767 = vmatprep.subr.mxu0 %v766
  %v768 = vand.u32 %v245, 4294901760
  %v769 = vsub.f32 %v245, %v768
  %v770 = vand.u32 %v769, 4294901760
  %v771 = vsub.f32 %v769, %v770
  %v772 = vand.u32 %v771, 4294901760
  %773 = vmatpush1.msra.mxu0 %v772
  %v774 = vand.u32 %v254, 4294901760
  %v775 = vsub.f32 %v254, %v774
  %v776 = vand.u32 %v775, 4294901760
  %v777 = vsub.f32 %v775, %v776
  %v778 = vand.u32 %v777, 4294901760
  %779 = vmatprep.subr.mxu0 %v778
  %v780 = vand.u32 %v253, 4294901760
  %v781 = vsub.f32 %v253, %v780
  %v782 = vand.u32 %v781, 4294901760
  %v783 = vsub.f32 %v781, %v782
  %v784 = vand.u32 %v783, 4294901760
  %785 = vmatpush1.msra.mxu0 %v784
  %v786 = vand.u32 %v262, 4294901760
  %v787 = vsub.f32 %v262, %v786
  %v788 = vand.u32 %v787, 4294901760
  %v789 = vsub.f32 %v787, %v788
  %v790 = vand.u32 %v789, 4294901760
  %791 = vmatprep.subr.mxu0 %v790
  %v792 = vand.u32 %v261, 4294901760
  %v793 = vsub.f32 %v261, %v792
  %v794 = vand.u32 %v793, 4294901760
  %v795 = vsub.f32 %v793, %v794
  %v796 = vand.u32 %v795, 4294901760
  %797 = vmatpush1.msra.mxu0 %v796
  %v798 = vand.u32 %v12, 4294901760
  %799 = vmatprep.mubr.f32.mxu0 %v798
  %v800 = vand.u32 %v11, 4294901760
  %801 = vmatmul.mubr.f32.gmra.mrb[0].mxu0 %v800
  %v802 = vpop.f32.mrb[0].mxu0
  %v803 = vadd.f32 %v410, %v802
  %v804 = vpop.f32.mrb[0].mxu0
  %v805 = vadd.f32 %v412, %v804
  %806 = vdwg.mxu0
  %v807 = vand.u32 %v14, 4294901760
  %v808 = vsub.f32 %v14, %v807
  %809 = vmatprep.subr.mxu0 %v808
  %v810 = vand.u32 %v13, 4294901760
  %v811 = vsub.f32 %v13, %v810
  %812 = vmatpush1.msra.mxu0 %v811
  %v813 = vand.u32 %v22, 4294901760
  %v814 = vsub.f32 %v22, %v813
  %815 = vmatprep.subr.mxu0 %v814
  %v816 = vand.u32 %v21, 4294901760
  %v817 = vsub.f32 %v21, %v816
  %818 = vmatpush1.msra.mxu0 %v817
  %v819 = vand.u32 %v30, 4294901760
  %v820 = vsub.f32 %v30, %v819
  %821 = vmatprep.subr.mxu0 %v820
  %v822 = vand.u32 %v29, 4294901760
  %v823 = vsub.f32 %v29, %v822
  %824 = vmatpush1.msra.mxu0 %v823
  %v825 = vand.u32 %v38, 4294901760
  %v826 = vsub.f32 %v38, %v825
  %827 = vmatprep.subr.mxu0 %v826
  %v828 = vand.u32 %v37, 4294901760
  %v829 = vsub.f32 %v37, %v828
  %830 = vmatpush1.msra.mxu0 %v829
  %v831 = vand.u32 %v46, 4294901760
  %v832 = vsub.f32 %v46, %v831
  %833 = vmatprep.subr.mxu0 %v832
  %v834 = vand.u32 %v45, 4294901760
  %v835 = vsub.f32 %v45, %v834
  %836 = vmatpush1.msra.mxu0 %v835
  %v837 = vand.u32 %v54, 4294901760
  %v838 = vsub.f32 %v54, %v837
  %839 = vmatprep.subr.mxu0 %v838
  %v840 = vand.u32 %v53, 4294901760
  %v841 = vsub.f32 %v53, %v840
  %842 = vmatpush1.msra.mxu0 %v841
  %v843 = vand.u32 %v62, 4294901760
  %v844 = vsub.f32 %v62, %v843
  %845 = vmatprep.subr.mxu0 %v844
  %v846 = vand.u32 %v61, 4294901760
  %v847 = vsub.f32 %v61, %v846
  %848 = vmatpush1.msra.mxu0 %v847
  %v849 = vand.u32 %v70, 4294901760
  %v850 = vsub.f32 %v70, %v849
  %851 = vmatprep.subr.mxu0 %v850
  %v852 = vand.u32 %v69, 4294901760
  %v853 = vsub.f32 %v69, %v852
  %854 = vmatpush1.msra.mxu0 %v853
  %v855 = vand.u32 %v78, 4294901760
  %v856 = vsub.f32 %v78, %v855
  %857 = vmatprep.subr.mxu0 %v856
  %v858 = vand.u32 %v77, 4294901760
  %v859 = vsub.f32 %v77, %v858
  %860 = vmatpush1.msra.mxu0 %v859
  %v861 = vand.u32 %v86, 4294901760
  %v862 = vsub.f32 %v86, %v861
  %863 = vmatprep.subr.mxu0 %v862
  %v864 = vand.u32 %v85, 4294901760
  %v865 = vsub.f32 %v85, %v864
  %866 = vmatpush1.msra.mxu0 %v865
  %v867 = vand.u32 %v94, 4294901760
  %v868 = vsub.f32 %v94, %v867
  %869 = vmatprep.subr.mxu0 %v868
  %v870 = vand.u32 %v93, 4294901760
  %v871 = vsub.f32 %v93, %v870
  %872 = vmatpush1.msra.mxu0 %v871
  %v873 = vand.u32 %v102, 4294901760
  %v874 = vsub.f32 %v102, %v873
  %875 = vmatprep.subr.mxu0 %v874
  %v876 = vand.u32 %v101, 4294901760
  %v877 = vsub.f32 %v101, %v876
  %878 = vmatpush1.msra.mxu0 %v877
  %v879 = vand.u32 %v110, 4294901760
  %v880 = vsub.f32 %v110, %v879
  %881 = vmatprep.subr.mxu0 %v880
  %v882 = vand.u32 %v109, 4294901760
  %v883 = vsub.f32 %v109, %v882
  %884 = vmatpush1.msra.mxu0 %v883
  %v885 = vand.u32 %v118, 4294901760
  %v886 = vsub.f32 %v118, %v885
  %887 = vmatprep.subr.mxu0 %v886
  %v888 = vand.u32 %v117, 4294901760
  %v889 = vsub.f32 %v117, %v888
  %890 = vmatpush1.msra.mxu0 %v889
  %v891 = vand.u32 %v126, 4294901760
  %v892 = vsub.f32 %v126, %v891
  %893 = vmatprep.subr.mxu0 %v892
  %v894 = vand.u32 %v125, 4294901760
  %v895 = vsub.f32 %v125, %v894
  %896 = vmatpush1.msra.mxu0 %v895
  %v897 = vand.u32 %v134, 4294901760
  %v898 = vsub.f32 %v134, %v897
  %899 = vmatprep.subr.mxu0 %v898
  %v900 = vand.u32 %v133, 4294901760
  %v901 = vsub.f32 %v133, %v900
  %902 = vmatpush1.msra.mxu0 %v901
  %v903 = vand.u32 %v142, 4294901760
  %v904 = vsub.f32 %v142, %v903
  %905 = vmatprep.subr.mxu0 %v904
  %v906 = vand.u32 %v141, 4294901760
  %v907 = vsub.f32 %v141, %v906
  %908 = vmatpush1.msra.mxu0 %v907
  %v909 = vand.u32 %v150, 4294901760
  %v910 = vsub.f32 %v150, %v909
  %911 = vmatprep.subr.mxu0 %v910
  %v912 = vand.u32 %v149, 4294901760
  %v913 = vsub.f32 %v149, %v912
  %914 = vmatpush1.msra.mxu0 %v913
  %v915 = vand.u32 %v158, 4294901760
  %v916 = vsub.f32 %v158, %v915
  %917 = vmatprep.subr.mxu0 %v916
  %v918 = vand.u32 %v157, 4294901760
  %v919 = vsub.f32 %v157, %v918
  %920 = vmatpush1.msra.mxu0 %v919
  %v921 = vand.u32 %v166, 4294901760
  %v922 = vsub.f32 %v166, %v921
  %923 = vmatprep.subr.mxu0 %v922
  %v924 = vand.u32 %v165, 4294901760
  %v925 = vsub.f32 %v165, %v924
  %926 = vmatpush1.msra.mxu0 %v925
  %v927 = vand.u32 %v174, 4294901760
  %v928 = vsub.f32 %v174, %v927
  %929 = vmatprep.subr.mxu0 %v928
  %v930 = vand.u32 %v173, 4294901760
  %v931 = vsub.f32 %v173, %v930
  %932 = vmatpush1.msra.mxu0 %v931
  %v933 = vand.u32 %v182, 4294901760
  %v934 = vsub.f32 %v182, %v933
  %935 = vmatprep.subr.mxu0 %v934
  %v936 = vand.u32 %v181, 4294901760
  %v937 = vsub.f32 %v181, %v936
  %938 = vmatpush1.msra.mxu0 %v937
  %v939 = vand.u32 %v190, 4294901760
  %v940 = vsub.f32 %v190, %v939
  %941 = vmatprep.subr.mxu0 %v940
  %v942 = vand.u32 %v189, 4294901760
  %v943 = vsub.f32 %v189, %v942
  %944 = vmatpush1.msra.mxu0 %v943
  %v945 = vand.u32 %v198, 4294901760
  %v946 = vsub.f32 %v198, %v945
  %947 = vmatprep.subr.mxu0 %v946
  %v948 = vand.u32 %v197, 4294901760
  %v949 = vsub.f32 %v197, %v948
  %950 = vmatpush1.msra.mxu0 %v949
  %v951 = vand.u32 %v206, 4294901760
  %v952 = vsub.f32 %v206, %v951
  %953 = vmatprep.subr.mxu0 %v952
  %v954 = vand.u32 %v205, 4294901760
  %v955 = vsub.f32 %v205, %v954
  %956 = vmatpush1.msra.mxu0 %v955
  %v957 = vand.u32 %v214, 4294901760
  %v958 = vsub.f32 %v214, %v957
  %959 = vmatprep.subr.mxu0 %v958
  %v960 = vand.u32 %v213, 4294901760
  %v961 = vsub.f32 %v213, %v960
  %962 = vmatpush1.msra.mxu0 %v961
  %v963 = vand.u32 %v222, 4294901760
  %v964 = vsub.f32 %v222, %v963
  %965 = vmatprep.subr.mxu0 %v964
  %v966 = vand.u32 %v221, 4294901760
  %v967 = vsub.f32 %v221, %v966
  %968 = vmatpush1.msra.mxu0 %v967
  %v969 = vand.u32 %v230, 4294901760
  %v970 = vsub.f32 %v230, %v969
  %971 = vmatprep.subr.mxu0 %v970
  %v972 = vand.u32 %v229, 4294901760
  %v973 = vsub.f32 %v229, %v972
  %974 = vmatpush1.msra.mxu0 %v973
  %v975 = vand.u32 %v238, 4294901760
  %v976 = vsub.f32 %v238, %v975
  %977 = vmatprep.subr.mxu0 %v976
  %v978 = vand.u32 %v237, 4294901760
  %v979 = vsub.f32 %v237, %v978
  %980 = vmatpush1.msra.mxu0 %v979
  %v981 = vand.u32 %v246, 4294901760
  %v982 = vsub.f32 %v246, %v981
  %983 = vmatprep.subr.mxu0 %v982
  %v984 = vand.u32 %v245, 4294901760
  %v985 = vsub.f32 %v245, %v984
  %986 = vmatpush1.msra.mxu0 %v985
  %v987 = vand.u32 %v254, 4294901760
  %v988 = vsub.f32 %v254, %v987
  %989 = vmatprep.subr.mxu0 %v988
  %v990 = vand.u32 %v253, 4294901760
  %v991 = vsub.f32 %v253, %v990
  %992 = vmatpush1.msra.mxu0 %v991
  %v993 = vand.u32 %v262, 4294901760
  %v994 = vsub.f32 %v262, %v993
  %995 = vmatprep.subr.mxu0 %v994
  %v996 = vand.u32 %v261, 4294901760
  %v997 = vsub.f32 %v261, %v996
  %998 = vmatpush1.msra.mxu0 %v997
  %v999 = vand.u32 %v12, 4294901760
  %v1000 = vsub.f32 %v12, %v999
  %1001 = vmatprep.mubr.f32.mxu0 %v1000
  %v1002 = vand.u32 %v11, 4294901760
  %v1003 = vsub.f32 %v11, %v1002
  %1004 = vmatmul.mubr.f32.gmra.mrb[0].mxu0 %v1003
  %v1005 = vpop.f32.mrb[0].mxu0
  %v1006 = vadd.f32 %v803, %v1005
  %v1007 = vpop.f32.mrb[0].mxu0
  %v1008 = vadd.f32 %v805, %v1007
  %1009 = vdwg.mxu0
  %v1010 = vand.u32 %v14, 4294901760
  %1011 = vmatprep.subr.mxu0 %v1010
  %v1012 = vand.u32 %v13, 4294901760
  %1013 = vmatpush1.msra.mxu0 %v1012
  %v1014 = vand.u32 %v22, 4294901760
  %1015 = vmatprep.subr.mxu0 %v1014
  %v1016 = vand.u32 %v21, 4294901760
  %1017 = vmatpush1.msra.mxu0 %v1016
  %v1018 = vand.u32 %v30, 4294901760
  %1019 = vmatprep.subr.mxu0 %v1018
  %v1020 = vand.u32 %v29, 4294901760
  %1021 = vmatpush1.msra.mxu0 %v1020
  %v1022 = vand.u32 %v38, 4294901760
  %1023 = vmatprep.subr.mxu0 %v1022
  %v1024 = vand.u32 %v37, 4294901760
  %1025 = vmatpush1.msra.mxu0 %v1024
  %v1026 = vand.u32 %v46, 4294901760
  %1027 = vmatprep.subr.mxu0 %v1026
  %v1028 = vand.u32 %v45, 4294901760
  %1029 = vmatpush1.msra.mxu0 %v1028
  %v1030 = vand.u32 %v54, 4294901760
  %1031 = vmatprep.subr.mxu0 %v1030
  %v1032 = vand.u32 %v53, 4294901760
  %1033 = vmatpush1.msra.mxu0 %v1032
  %v1034 = vand.u32 %v62, 4294901760
  %1035 = vmatprep.subr.mxu0 %v1034
  %v1036 = vand.u32 %v61, 4294901760
  %1037 = vmatpush1.msra.mxu0 %v1036
  %v1038 = vand.u32 %v70, 4294901760
  %1039 = vmatprep.subr.mxu0 %v1038
  %v1040 = vand.u32 %v69, 4294901760
  %1041 = vmatpush1.msra.mxu0 %v1040
  %v1042 = vand.u32 %v78, 4294901760
  %1043 = vmatprep.subr.mxu0 %v1042
  %v1044 = vand.u32 %v77, 4294901760
  %1045 = vmatpush1.msra.mxu0 %v1044
  %v1046 = vand.u32 %v86, 4294901760
  %1047 = vmatprep.subr.mxu0 %v1046
  %v1048 = vand.u32 %v85, 4294901760
  %1049 = vmatpush1.msra.mxu0 %v1048
  %v1050 = vand.u32 %v94, 4294901760
  %1051 = vmatprep.subr.mxu0 %v1050
  %v1052 = vand.u32 %v93, 4294901760
  %1053 = vmatpush1.msra.mxu0 %v1052
  %v1054 = vand.u32 %v102, 4294901760
  %1055 = vmatprep.subr.mxu0 %v1054
  %v1056 = vand.u32 %v101, 4294901760
  %1057 = vmatpush1.msra.mxu0 %v1056
  %v1058 = vand.u32 %v110, 4294901760
  %1059 = vmatprep.subr.mxu0 %v1058
  %v1060 = vand.u32 %v109, 4294901760
  %1061 = vmatpush1.msra.mxu0 %v1060
  %v1062 = vand.u32 %v118, 4294901760
  %1063 = vmatprep.subr.mxu0 %v1062
  %v1064 = vand.u32 %v117, 4294901760
  %1065 = vmatpush1.msra.mxu0 %v1064
  %v1066 = vand.u32 %v126, 4294901760
  %1067 = vmatprep.subr.mxu0 %v1066
  %v1068 = vand.u32 %v125, 4294901760
  %1069 = vmatpush1.msra.mxu0 %v1068
  %v1070 = vand.u32 %v134, 4294901760
  %1071 = vmatprep.subr.mxu0 %v1070
  %v1072 = vand.u32 %v133, 4294901760
  %1073 = vmatpush1.msra.mxu0 %v1072
  %v1074 = vand.u32 %v142, 4294901760
  %1075 = vmatprep.subr.mxu0 %v1074
  %v1076 = vand.u32 %v141, 4294901760
  %1077 = vmatpush1.msra.mxu0 %v1076
  %v1078 = vand.u32 %v150, 4294901760
  %1079 = vmatprep.subr.mxu0 %v1078
  %v1080 = vand.u32 %v149, 4294901760
  %1081 = vmatpush1.msra.mxu0 %v1080
  %v1082 = vand.u32 %v158, 4294901760
  %1083 = vmatprep.subr.mxu0 %v1082
  %v1084 = vand.u32 %v157, 4294901760
  %1085 = vmatpush1.msra.mxu0 %v1084
  %v1086 = vand.u32 %v166, 4294901760
  %1087 = vmatprep.subr.mxu0 %v1086
  %v1088 = vand.u32 %v165, 4294901760
  %1089 = vmatpush1.msra.mxu0 %v1088
  %v1090 = vand.u32 %v174, 4294901760
  %1091 = vmatprep.subr.mxu0 %v1090
  %v1092 = vand.u32 %v173, 4294901760
  %1093 = vmatpush1.msra.mxu0 %v1092
  %v1094 = vand.u32 %v182, 4294901760
  %1095 = vmatprep.subr.mxu0 %v1094
  %v1096 = vand.u32 %v181, 4294901760
  %1097 = vmatpush1.msra.mxu0 %v1096
  %v1098 = vand.u32 %v190, 4294901760
  %1099 = vmatprep.subr.mxu0 %v1098
  %v1100 = vand.u32 %v189, 4294901760
  %1101 = vmatpush1.msra.mxu0 %v1100
  %v1102 = vand.u32 %v198, 4294901760
  %1103 = vmatprep.subr.mxu0 %v1102
  %v1104 = vand.u32 %v197, 4294901760
  %1105 = vmatpush1.msra.mxu0 %v1104
  %v1106 = vand.u32 %v206, 4294901760
  %1107 = vmatprep.subr.mxu0 %v1106
  %v1108 = vand.u32 %v205, 4294901760
  %1109 = vmatpush1.msra.mxu0 %v1108
  %v1110 = vand.u32 %v214, 4294901760
  %1111 = vmatprep.subr.mxu0 %v1110
  %v1112 = vand.u32 %v213, 4294901760
  %1113 = vmatpush1.msra.mxu0 %v1112
  %v1114 = vand.u32 %v222, 4294901760
  %1115 = vmatprep.subr.mxu0 %v1114
  %v1116 = vand.u32 %v221, 4294901760
  %1117 = vmatpush1.msra.mxu0 %v1116
  %v1118 = vand.u32 %v230, 4294901760
  %1119 = vmatprep.subr.mxu0 %v1118
  %v1120 = vand.u32 %v229, 4294901760
  %1121 = vmatpush1.msra.mxu0 %v1120
  %v1122 = vand.u32 %v238, 4294901760
  %1123 = vmatprep.subr.mxu0 %v1122
  %v1124 = vand.u32 %v237, 4294901760
  %1125 = vmatpush1.msra.mxu0 %v1124
  %v1126 = vand.u32 %v246, 4294901760
  %1127 = vmatprep.subr.mxu0 %v1126
  %v1128 = vand.u32 %v245, 4294901760
  %1129 = vmatpush1.msra.mxu0 %v1128
  %v1130 = vand.u32 %v254, 4294901760
  %1131 = vmatprep.subr.mxu0 %v1130
  %v1132 = vand.u32 %v253, 4294901760
  %1133 = vmatpush1.msra.mxu0 %v1132
  %v1134 = vand.u32 %v262, 4294901760
  %1135 = vmatprep.subr.mxu0 %v1134
  %v1136 = vand.u32 %v261, 4294901760
  %1137 = vmatpush1.msra.mxu0 %v1136
  %v1138 = vand.u32 %v12, 4294901760
  %v1139 = vsub.f32 %v12, %v1138
  %v1140 = vand.u32 %v1139, 4294901760
  %1141 = vmatprep.mubr.f32.mxu0 %v1140
  %v1142 = vand.u32 %v11, 4294901760
  %v1143 = vsub.f32 %v11, %v1142
  %v1144 = vand.u32 %v1143, 4294901760
  %1145 = vmatmul.mubr.f32.gmra.mrb[0].mxu0 %v1144
  %v1146 = vpop.f32.mrb[0].mxu0
  %v1147 = vadd.f32 %v1006, %v1146
  %v1148 = vpop.f32.mrb[0].mxu0
  %v1149 = vadd.f32 %v1008, %v1148
  %1150 = vdwg.mxu0
  %v1151 = vand.u32 %v14, 4294901760
  %v1152 = vsub.f32 %v14, %v1151
  %v1153 = vand.u32 %v1152, 4294901760
  %1154 = vmatprep.subr.mxu0 %v1153
  %v1155 = vand.u32 %v13, 4294901760
  %v1156 = vsub.f32 %v13, %v1155
  %v1157 = vand.u32 %v1156, 4294901760
  %1158 = vmatpush1.msra.mxu0 %v1157
  %v1159 = vand.u32 %v22, 4294901760
  %v1160 = vsub.f32 %v22, %v1159
  %v1161 = vand.u32 %v1160, 4294901760
  %1162 = vmatprep.subr.mxu0 %v1161
  %v1163 = vand.u32 %v21, 4294901760
  %v1164 = vsub.f32 %v21, %v1163
  %v1165 = vand.u32 %v1164, 4294901760
  %1166 = vmatpush1.msra.mxu0 %v1165
  %v1167 = vand.u32 %v30, 4294901760
  %v1168 = vsub.f32 %v30, %v1167
  %v1169 = vand.u32 %v1168, 4294901760
  %1170 = vmatprep.subr.mxu0 %v1169
  %v1171 = vand.u32 %v29, 4294901760
  %v1172 = vsub.f32 %v29, %v1171
  %v1173 = vand.u32 %v1172, 4294901760
  %1174 = vmatpush1.msra.mxu0 %v1173
  %v1175 = vand.u32 %v38, 4294901760
  %v1176 = vsub.f32 %v38, %v1175
  %v1177 = vand.u32 %v1176, 4294901760
  %1178 = vmatprep.subr.mxu0 %v1177
  %v1179 = vand.u32 %v37, 4294901760
  %v1180 = vsub.f32 %v37, %v1179
  %v1181 = vand.u32 %v1180, 4294901760
  %1182 = vmatpush1.msra.mxu0 %v1181
  %v1183 = vand.u32 %v46, 4294901760
  %v1184 = vsub.f32 %v46, %v1183
  %v1185 = vand.u32 %v1184, 4294901760
  %1186 = vmatprep.subr.mxu0 %v1185
  %v1187 = vand.u32 %v45, 4294901760
  %v1188 = vsub.f32 %v45, %v1187
  %v1189 = vand.u32 %v1188, 4294901760
  %1190 = vmatpush1.msra.mxu0 %v1189
  %v1191 = vand.u32 %v54, 4294901760
  %v1192 = vsub.f32 %v54, %v1191
  %v1193 = vand.u32 %v1192, 4294901760
  %1194 = vmatprep.subr.mxu0 %v1193
  %v1195 = vand.u32 %v53, 4294901760
  %v1196 = vsub.f32 %v53, %v1195
  %v1197 = vand.u32 %v1196, 4294901760
  %1198 = vmatpush1.msra.mxu0 %v1197
  %v1199 = vand.u32 %v62, 4294901760
  %v1200 = vsub.f32 %v62, %v1199
  %v1201 = vand.u32 %v1200, 4294901760
  %1202 = vmatprep.subr.mxu0 %v1201
  %v1203 = vand.u32 %v61, 4294901760
  %v1204 = vsub.f32 %v61, %v1203
  %v1205 = vand.u32 %v1204, 4294901760
  %1206 = vmatpush1.msra.mxu0 %v1205
  %v1207 = vand.u32 %v70, 4294901760
  %v1208 = vsub.f32 %v70, %v1207
  %v1209 = vand.u32 %v1208, 4294901760
  %1210 = vmatprep.subr.mxu0 %v1209
  %v1211 = vand.u32 %v69, 4294901760
  %v1212 = vsub.f32 %v69, %v1211
  %v1213 = vand.u32 %v1212, 4294901760
  %1214 = vmatpush1.msra.mxu0 %v1213
  %v1215 = vand.u32 %v78, 4294901760
  %v1216 = vsub.f32 %v78, %v1215
  %v1217 = vand.u32 %v1216, 4294901760
  %1218 = vmatprep.subr.mxu0 %v1217
  %v1219 = vand.u32 %v77, 4294901760
  %v1220 = vsub.f32 %v77, %v1219
  %v1221 = vand.u32 %v1220, 4294901760
  %1222 = vmatpush1.msra.mxu0 %v1221
  %v1223 = vand.u32 %v86, 4294901760
  %v1224 = vsub.f32 %v86, %v1223
  %v1225 = vand.u32 %v1224, 4294901760
  %1226 = vmatprep.subr.mxu0 %v1225
  %v1227 = vand.u32 %v85, 4294901760
  %v1228 = vsub.f32 %v85, %v1227
  %v1229 = vand.u32 %v1228, 4294901760
  %1230 = vmatpush1.msra.mxu0 %v1229
  %v1231 = vand.u32 %v94, 4294901760
  %v1232 = vsub.f32 %v94, %v1231
  %v1233 = vand.u32 %v1232, 4294901760
  %1234 = vmatprep.subr.mxu0 %v1233
  %v1235 = vand.u32 %v93, 4294901760
  %v1236 = vsub.f32 %v93, %v1235
  %v1237 = vand.u32 %v1236, 4294901760
  %1238 = vmatpush1.msra.mxu0 %v1237
  %v1239 = vand.u32 %v102, 4294901760
  %v1240 = vsub.f32 %v102, %v1239
  %v1241 = vand.u32 %v1240, 4294901760
  %1242 = vmatprep.subr.mxu0 %v1241
  %v1243 = vand.u32 %v101, 4294901760
  %v1244 = vsub.f32 %v101, %v1243
  %v1245 = vand.u32 %v1244, 4294901760
  %1246 = vmatpush1.msra.mxu0 %v1245
  %v1247 = vand.u32 %v110, 4294901760
  %v1248 = vsub.f32 %v110, %v1247
  %v1249 = vand.u32 %v1248, 4294901760
  %1250 = vmatprep.subr.mxu0 %v1249
  %v1251 = vand.u32 %v109, 4294901760
  %v1252 = vsub.f32 %v109, %v1251
  %v1253 = vand.u32 %v1252, 4294901760
  %1254 = vmatpush1.msra.mxu0 %v1253
  %v1255 = vand.u32 %v118, 4294901760
  %v1256 = vsub.f32 %v118, %v1255
  %v1257 = vand.u32 %v1256, 4294901760
  %1258 = vmatprep.subr.mxu0 %v1257
  %v1259 = vand.u32 %v117, 4294901760
  %v1260 = vsub.f32 %v117, %v1259
  %v1261 = vand.u32 %v1260, 4294901760
  %1262 = vmatpush1.msra.mxu0 %v1261
  %v1263 = vand.u32 %v126, 4294901760
  %v1264 = vsub.f32 %v126, %v1263
  %v1265 = vand.u32 %v1264, 4294901760
  %1266 = vmatprep.subr.mxu0 %v1265
  %v1267 = vand.u32 %v125, 4294901760
  %v1268 = vsub.f32 %v125, %v1267
  %v1269 = vand.u32 %v1268, 4294901760
  %1270 = vmatpush1.msra.mxu0 %v1269
  %v1271 = vand.u32 %v134, 4294901760
  %v1272 = vsub.f32 %v134, %v1271
  %v1273 = vand.u32 %v1272, 4294901760
  %1274 = vmatprep.subr.mxu0 %v1273
  %v1275 = vand.u32 %v133, 4294901760
  %v1276 = vsub.f32 %v133, %v1275
  %v1277 = vand.u32 %v1276, 4294901760
  %1278 = vmatpush1.msra.mxu0 %v1277
  %v1279 = vand.u32 %v142, 4294901760
  %v1280 = vsub.f32 %v142, %v1279
  %v1281 = vand.u32 %v1280, 4294901760
  %1282 = vmatprep.subr.mxu0 %v1281
  %v1283 = vand.u32 %v141, 4294901760
  %v1284 = vsub.f32 %v141, %v1283
  %v1285 = vand.u32 %v1284, 4294901760
  %1286 = vmatpush1.msra.mxu0 %v1285
  %v1287 = vand.u32 %v150, 4294901760
  %v1288 = vsub.f32 %v150, %v1287
  %v1289 = vand.u32 %v1288, 4294901760
  %1290 = vmatprep.subr.mxu0 %v1289
  %v1291 = vand.u32 %v149, 4294901760
  %v1292 = vsub.f32 %v149, %v1291
  %v1293 = vand.u32 %v1292, 4294901760
  %1294 = vmatpush1.msra.mxu0 %v1293
  %v1295 = vand.u32 %v158, 4294901760
  %v1296 = vsub.f32 %v158, %v1295
  %v1297 = vand.u32 %v1296, 4294901760
  %1298 = vmatprep.subr.mxu0 %v1297
  %v1299 = vand.u32 %v157, 4294901760
  %v1300 = vsub.f32 %v157, %v1299
  %v1301 = vand.u32 %v1300, 4294901760
  %1302 = vmatpush1.msra.mxu0 %v1301
  %v1303 = vand.u32 %v166, 4294901760
  %v1304 = vsub.f32 %v166, %v1303
  %v1305 = vand.u32 %v1304, 4294901760
  %1306 = vmatprep.subr.mxu0 %v1305
  %v1307 = vand.u32 %v165, 4294901760
  %v1308 = vsub.f32 %v165, %v1307
  %v1309 = vand.u32 %v1308, 4294901760
  %1310 = vmatpush1.msra.mxu0 %v1309
  %v1311 = vand.u32 %v174, 4294901760
  %v1312 = vsub.f32 %v174, %v1311
  %v1313 = vand.u32 %v1312, 4294901760
  %1314 = vmatprep.subr.mxu0 %v1313
  %v1315 = vand.u32 %v173, 4294901760
  %v1316 = vsub.f32 %v173, %v1315
  %v1317 = vand.u32 %v1316, 4294901760
  %1318 = vmatpush1.msra.mxu0 %v1317
  %v1319 = vand.u32 %v182, 4294901760
  %v1320 = vsub.f32 %v182, %v1319
  %v1321 = vand.u32 %v1320, 4294901760
  %1322 = vmatprep.subr.mxu0 %v1321
  %v1323 = vand.u32 %v181, 4294901760
  %v1324 = vsub.f32 %v181, %v1323
  %v1325 = vand.u32 %v1324, 4294901760
  %1326 = vmatpush1.msra.mxu0 %v1325
  %v1327 = vand.u32 %v190, 4294901760
  %v1328 = vsub.f32 %v190, %v1327
  %v1329 = vand.u32 %v1328, 4294901760
  %1330 = vmatprep.subr.mxu0 %v1329
  %v1331 = vand.u32 %v189, 4294901760
  %v1332 = vsub.f32 %v189, %v1331
  %v1333 = vand.u32 %v1332, 4294901760
  %1334 = vmatpush1.msra.mxu0 %v1333
  %v1335 = vand.u32 %v198, 4294901760
  %v1336 = vsub.f32 %v198, %v1335
  %v1337 = vand.u32 %v1336, 4294901760
  %1338 = vmatprep.subr.mxu0 %v1337
  %v1339 = vand.u32 %v197, 4294901760
  %v1340 = vsub.f32 %v197, %v1339
  %v1341 = vand.u32 %v1340, 4294901760
  %1342 = vmatpush1.msra.mxu0 %v1341
  %v1343 = vand.u32 %v206, 4294901760
  %v1344 = vsub.f32 %v206, %v1343
  %v1345 = vand.u32 %v1344, 4294901760
  %1346 = vmatprep.subr.mxu0 %v1345
  %v1347 = vand.u32 %v205, 4294901760
  %v1348 = vsub.f32 %v205, %v1347
  %v1349 = vand.u32 %v1348, 4294901760
  %1350 = vmatpush1.msra.mxu0 %v1349
  %v1351 = vand.u32 %v214, 4294901760
  %v1352 = vsub.f32 %v214, %v1351
  %v1353 = vand.u32 %v1352, 4294901760
  %1354 = vmatprep.subr.mxu0 %v1353
  %v1355 = vand.u32 %v213, 4294901760
  %v1356 = vsub.f32 %v213, %v1355
  %v1357 = vand.u32 %v1356, 4294901760
  %1358 = vmatpush1.msra.mxu0 %v1357
  %v1359 = vand.u32 %v222, 4294901760
  %v1360 = vsub.f32 %v222, %v1359
  %v1361 = vand.u32 %v1360, 4294901760
  %1362 = vmatprep.subr.mxu0 %v1361
  %v1363 = vand.u32 %v221, 4294901760
  %v1364 = vsub.f32 %v221, %v1363
  %v1365 = vand.u32 %v1364, 4294901760
  %1366 = vmatpush1.msra.mxu0 %v1365
  %v1367 = vand.u32 %v230, 4294901760
  %v1368 = vsub.f32 %v230, %v1367
  %v1369 = vand.u32 %v1368, 4294901760
  %1370 = vmatprep.subr.mxu0 %v1369
  %v1371 = vand.u32 %v229, 4294901760
  %v1372 = vsub.f32 %v229, %v1371
  %v1373 = vand.u32 %v1372, 4294901760
  %1374 = vmatpush1.msra.mxu0 %v1373
  %v1375 = vand.u32 %v238, 4294901760
  %v1376 = vsub.f32 %v238, %v1375
  %v1377 = vand.u32 %v1376, 4294901760
  %1378 = vmatprep.subr.mxu0 %v1377
  %v1379 = vand.u32 %v237, 4294901760
  %v1380 = vsub.f32 %v237, %v1379
  %v1381 = vand.u32 %v1380, 4294901760
  %1382 = vmatpush1.msra.mxu0 %v1381
  %v1383 = vand.u32 %v246, 4294901760
  %v1384 = vsub.f32 %v246, %v1383
  %v1385 = vand.u32 %v1384, 4294901760
  %1386 = vmatprep.subr.mxu0 %v1385
  %v1387 = vand.u32 %v245, 4294901760
  %v1388 = vsub.f32 %v245, %v1387
  %v1389 = vand.u32 %v1388, 4294901760
  %1390 = vmatpush1.msra.mxu0 %v1389
  %v1391 = vand.u32 %v254, 4294901760
  %v1392 = vsub.f32 %v254, %v1391
  %v1393 = vand.u32 %v1392, 4294901760
  %1394 = vmatprep.subr.mxu0 %v1393
  %v1395 = vand.u32 %v253, 4294901760
  %v1396 = vsub.f32 %v253, %v1395
  %v1397 = vand.u32 %v1396, 4294901760
  %1398 = vmatpush1.msra.mxu0 %v1397
  %v1399 = vand.u32 %v262, 4294901760
  %v1400 = vsub.f32 %v262, %v1399
  %v1401 = vand.u32 %v1400, 4294901760
  %1402 = vmatprep.subr.mxu0 %v1401
  %v1403 = vand.u32 %v261, 4294901760
  %v1404 = vsub.f32 %v261, %v1403
  %v1405 = vand.u32 %v1404, 4294901760
  %1406 = vmatpush1.msra.mxu0 %v1405
  %v1407 = vand.u32 %v12, 4294901760
  %1408 = vmatprep.mubr.f32.mxu0 %v1407
  %v1409 = vand.u32 %v11, 4294901760
  %1410 = vmatmul.mubr.f32.gmra.mrb[0].mxu0 %v1409
  %v1411 = vpop.f32.mrb[0].mxu0
  %v1412 = vadd.f32 %v1147, %v1411
  %v1413 = vpop.f32.mrb[0].mxu0
  %v1414 = vadd.f32 %v1149, %v1413
  %1415 = vdwg.mxu0
  %v1416 = vand.u32 %v14, 4294901760
  %1417 = vmatprep.subr.mxu0 %v1416
  %v1418 = vand.u32 %v13, 4294901760
  %1419 = vmatpush1.msra.mxu0 %v1418
  %v1420 = vand.u32 %v22, 4294901760
  %1421 = vmatprep.subr.mxu0 %v1420
  %v1422 = vand.u32 %v21, 4294901760
  %1423 = vmatpush1.msra.mxu0 %v1422
  %v1424 = vand.u32 %v30, 4294901760
  %1425 = vmatprep.subr.mxu0 %v1424
  %v1426 = vand.u32 %v29, 4294901760
  %1427 = vmatpush1.msra.mxu0 %v1426
  %v1428 = vand.u32 %v38, 4294901760
  %1429 = vmatprep.subr.mxu0 %v1428
  %v1430 = vand.u32 %v37, 4294901760
  %1431 = vmatpush1.msra.mxu0 %v1430
  %v1432 = vand.u32 %v46, 4294901760
  %1433 = vmatprep.subr.mxu0 %v1432
  %v1434 = vand.u32 %v45, 4294901760
  %1435 = vmatpush1.msra.mxu0 %v1434
  %v1436 = vand.u32 %v54, 4294901760
  %1437 = vmatprep.subr.mxu0 %v1436
  %v1438 = vand.u32 %v53, 4294901760
  %1439 = vmatpush1.msra.mxu0 %v1438
  %v1440 = vand.u32 %v62, 4294901760
  %1441 = vmatprep.subr.mxu0 %v1440
  %v1442 = vand.u32 %v61, 4294901760
  %1443 = vmatpush1.msra.mxu0 %v1442
  %v1444 = vand.u32 %v70, 4294901760
  %1445 = vmatprep.subr.mxu0 %v1444
  %v1446 = vand.u32 %v69, 4294901760
  %1447 = vmatpush1.msra.mxu0 %v1446
  %v1448 = vand.u32 %v78, 4294901760
  %1449 = vmatprep.subr.mxu0 %v1448
  %v1450 = vand.u32 %v77, 4294901760
  %1451 = vmatpush1.msra.mxu0 %v1450
  %v1452 = vand.u32 %v86, 4294901760
  %1453 = vmatprep.subr.mxu0 %v1452
  %v1454 = vand.u32 %v85, 4294901760
  %1455 = vmatpush1.msra.mxu0 %v1454
  %v1456 = vand.u32 %v94, 4294901760
  %1457 = vmatprep.subr.mxu0 %v1456
  %v1458 = vand.u32 %v93, 4294901760
  %1459 = vmatpush1.msra.mxu0 %v1458
  %v1460 = vand.u32 %v102, 4294901760
  %1461 = vmatprep.subr.mxu0 %v1460
  %v1462 = vand.u32 %v101, 4294901760
  %1463 = vmatpush1.msra.mxu0 %v1462
  %v1464 = vand.u32 %v110, 4294901760
  %1465 = vmatprep.subr.mxu0 %v1464
  %v1466 = vand.u32 %v109, 4294901760
  %1467 = vmatpush1.msra.mxu0 %v1466
  %v1468 = vand.u32 %v118, 4294901760
  %1469 = vmatprep.subr.mxu0 %v1468
  %v1470 = vand.u32 %v117, 4294901760
  %1471 = vmatpush1.msra.mxu0 %v1470
  %v1472 = vand.u32 %v126, 4294901760
  %1473 = vmatprep.subr.mxu0 %v1472
  %v1474 = vand.u32 %v125, 4294901760
  %1475 = vmatpush1.msra.mxu0 %v1474
  %v1476 = vand.u32 %v134, 4294901760
  %1477 = vmatprep.subr.mxu0 %v1476
  %v1478 = vand.u32 %v133, 4294901760
  %1479 = vmatpush1.msra.mxu0 %v1478
  %v1480 = vand.u32 %v142, 4294901760
  %1481 = vmatprep.subr.mxu0 %v1480
  %v1482 = vand.u32 %v141, 4294901760
  %1483 = vmatpush1.msra.mxu0 %v1482
  %v1484 = vand.u32 %v150, 4294901760
  %1485 = vmatprep.subr.mxu0 %v1484
  %v1486 = vand.u32 %v149, 4294901760
  %1487 = vmatpush1.msra.mxu0 %v1486
  %v1488 = vand.u32 %v158, 4294901760
  %1489 = vmatprep.subr.mxu0 %v1488
  %v1490 = vand.u32 %v157, 4294901760
  %1491 = vmatpush1.msra.mxu0 %v1490
  %v1492 = vand.u32 %v166, 4294901760
  %1493 = vmatprep.subr.mxu0 %v1492
  %v1494 = vand.u32 %v165, 4294901760
  %1495 = vmatpush1.msra.mxu0 %v1494
  %v1496 = vand.u32 %v174, 4294901760
  %1497 = vmatprep.subr.mxu0 %v1496
  %v1498 = vand.u32 %v173, 4294901760
  %1499 = vmatpush1.msra.mxu0 %v1498
  %v1500 = vand.u32 %v182, 4294901760
  %1501 = vmatprep.subr.mxu0 %v1500
  %v1502 = vand.u32 %v181, 4294901760
  %1503 = vmatpush1.msra.mxu0 %v1502
  %v1504 = vand.u32 %v190, 4294901760
  %1505 = vmatprep.subr.mxu0 %v1504
  %v1506 = vand.u32 %v189, 4294901760
  %1507 = vmatpush1.msra.mxu0 %v1506
  %v1508 = vand.u32 %v198, 4294901760
  %1509 = vmatprep.subr.mxu0 %v1508
  %v1510 = vand.u32 %v197, 4294901760
  %1511 = vmatpush1.msra.mxu0 %v1510
  %v1512 = vand.u32 %v206, 4294901760
  %1513 = vmatprep.subr.mxu0 %v1512
  %v1514 = vand.u32 %v205, 4294901760
  %1515 = vmatpush1.msra.mxu0 %v1514
  %v1516 = vand.u32 %v214, 4294901760
  %1517 = vmatprep.subr.mxu0 %v1516
  %v1518 = vand.u32 %v213, 4294901760
  %1519 = vmatpush1.msra.mxu0 %v1518
  %v1520 = vand.u32 %v222, 4294901760
  %1521 = vmatprep.subr.mxu0 %v1520
  %v1522 = vand.u32 %v221, 4294901760
  %1523 = vmatpush1.msra.mxu0 %v1522
  %v1524 = vand.u32 %v230, 4294901760
  %1525 = vmatprep.subr.mxu0 %v1524
  %v1526 = vand.u32 %v229, 4294901760
  %1527 = vmatpush1.msra.mxu0 %v1526
  %v1528 = vand.u32 %v238, 4294901760
  %1529 = vmatprep.subr.mxu0 %v1528
  %v1530 = vand.u32 %v237, 4294901760
  %1531 = vmatpush1.msra.mxu0 %v1530
  %v1532 = vand.u32 %v246, 4294901760
  %1533 = vmatprep.subr.mxu0 %v1532
  %v1534 = vand.u32 %v245, 4294901760
  %1535 = vmatpush1.msra.mxu0 %v1534
  %v1536 = vand.u32 %v254, 4294901760
  %1537 = vmatprep.subr.mxu0 %v1536
  %v1538 = vand.u32 %v253, 4294901760
  %1539 = vmatpush1.msra.mxu0 %v1538
  %v1540 = vand.u32 %v262, 4294901760
  %1541 = vmatprep.subr.mxu0 %v1540
  %v1542 = vand.u32 %v261, 4294901760
  %1543 = vmatpush1.msra.mxu0 %v1542
  %v1544 = vand.u32 %v12, 4294901760
  %1545 = vmatprep.mubr.f32.mxu0 %v1544
  %v1546 = vand.u32 %v11, 4294901760
  %1547 = vmatmul.mubr.f32.gmra.mrb[0].mxu0 %v1546
  %v1548 = vpop.f32.mrb[0].mxu0
  %v1549 = vadd.f32 %v1412, %v1548
  %v1550 = vpop.f32.mrb[0].mxu0
  %v1551 = vadd.f32 %v1414, %v1550
  %1552 = vdwg.mxu0
  %v1553 = vand.u32 %v16, 4294901760
  %1554 = vmatprep.subr.mxu0 %v1553
  %v1555 = vand.u32 %v15, 4294901760
  %1556 = vmatpush1.msra.mxu0 %v1555
  %v1557 = vand.u32 %v24, 4294901760
  %1558 = vmatprep.subr.mxu0 %v1557
  %v1559 = vand.u32 %v23, 4294901760
  %1560 = vmatpush1.msra.mxu0 %v1559
  %v1561 = vand.u32 %v32, 4294901760
  %1562 = vmatprep.subr.mxu0 %v1561
  %v1563 = vand.u32 %v31, 4294901760
  %1564 = vmatpush1.msra.mxu0 %v1563
  %v1565 = vand.u32 %v40, 4294901760
  %1566 = vmatprep.subr.mxu0 %v1565
  %v1567 = vand.u32 %v39, 4294901760
  %1568 = vmatpush1.msra.mxu0 %v1567
  %v1569 = vand.u32 %v48, 4294901760
  %1570 = vmatprep.subr.mxu0 %v1569
  %v1571 = vand.u32 %v47, 4294901760
  %1572 = vmatpush1.msra.mxu0 %v1571
  %v1573 = vand.u32 %v56, 4294901760
  %1574 = vmatprep.subr.mxu0 %v1573
  %v1575 = vand.u32 %v55, 4294901760
  %1576 = vmatpush1.msra.mxu0 %v1575
  %v1577 = vand.u32 %v64, 4294901760
  %1578 = vmatprep.subr.mxu0 %v1577
  %v1579 = vand.u32 %v63, 4294901760
  %1580 = vmatpush1.msra.mxu0 %v1579
  %v1581 = vand.u32 %v72, 4294901760
  %1582 = vmatprep.subr.mxu0 %v1581
  %v1583 = vand.u32 %v71, 4294901760
  %1584 = vmatpush1.msra.mxu0 %v1583
  %v1585 = vand.u32 %v80, 4294901760
  %1586 = vmatprep.subr.mxu0 %v1585
  %v1587 = vand.u32 %v79, 4294901760
  %1588 = vmatpush1.msra.mxu0 %v1587
  %v1589 = vand.u32 %v88, 4294901760
  %1590 = vmatprep.subr.mxu0 %v1589
  %v1591 = vand.u32 %v87, 4294901760
  %1592 = vmatpush1.msra.mxu0 %v1591
  %v1593 = vand.u32 %v96, 4294901760
  %1594 = vmatprep.subr.mxu0 %v1593
  %v1595 = vand.u32 %v95, 4294901760
  %1596 = vmatpush1.msra.mxu0 %v1595
  %v1597 = vand.u32 %v104, 4294901760
  %1598 = vmatprep.subr.mxu0 %v1597
  %v1599 = vand.u32 %v103, 4294901760
  %1600 = vmatpush1.msra.mxu0 %v1599
  %v1601 = vand.u32 %v112, 4294901760
  %1602 = vmatprep.subr.mxu0 %v1601
  %v1603 = vand.u32 %v111, 4294901760
  %1604 = vmatpush1.msra.mxu0 %v1603
  %v1605 = vand.u32 %v120, 4294901760
  %1606 = vmatprep.subr.mxu0 %v1605
  %v1607 = vand.u32 %v119, 4294901760
  %1608 = vmatpush1.msra.mxu0 %v1607
  %v1609 = vand.u32 %v128, 4294901760
  %1610 = vmatprep.subr.mxu0 %v1609
  %v1611 = vand.u32 %v127, 4294901760
  %1612 = vmatpush1.msra.mxu0 %v1611
  %v1613 = vand.u32 %v136, 4294901760
  %1614 = vmatprep.subr.mxu0 %v1613
  %v1615 = vand.u32 %v135, 4294901760
  %1616 = vmatpush1.msra.mxu0 %v1615
  %v1617 = vand.u32 %v144, 4294901760
  %1618 = vmatprep.subr.mxu0 %v1617
  %v1619 = vand.u32 %v143, 4294901760
  %1620 = vmatpush1.msra.mxu0 %v1619
  %v1621 = vand.u32 %v152, 4294901760
  %1622 = vmatprep.subr.mxu0 %v1621
  %v1623 = vand.u32 %v151, 4294901760
  %1624 = vmatpush1.msra.mxu0 %v1623
  %v1625 = vand.u32 %v160, 4294901760
  %1626 = vmatprep.subr.mxu0 %v1625
  %v1627 = vand.u32 %v159, 4294901760
  %1628 = vmatpush1.msra.mxu0 %v1627
  %v1629 = vand.u32 %v168, 4294901760
  %1630 = vmatprep.subr.mxu0 %v1629
  %v1631 = vand.u32 %v167, 4294901760
  %1632 = vmatpush1.msra.mxu0 %v1631
  %v1633 = vand.u32 %v176, 4294901760
  %1634 = vmatprep.subr.mxu0 %v1633
  %v1635 = vand.u32 %v175, 4294901760
  %1636 = vmatpush1.msra.mxu0 %v1635
  %v1637 = vand.u32 %v184, 4294901760
  %1638 = vmatprep.subr.mxu0 %v1637
  %v1639 = vand.u32 %v183, 4294901760
  %1640 = vmatpush1.msra.mxu0 %v1639
  %v1641 = vand.u32 %v192, 4294901760
  %1642 = vmatprep.subr.mxu0 %v1641
  %v1643 = vand.u32 %v191, 4294901760
  %1644 = vmatpush1.msra.mxu0 %v1643
  %v1645 = vand.u32 %v200, 4294901760
  %1646 = vmatprep.subr.mxu0 %v1645
  %v1647 = vand.u32 %v199, 4294901760
  %1648 = vmatpush1.msra.mxu0 %v1647
  %v1649 = vand.u32 %v208, 4294901760
  %1650 = vmatprep.subr.mxu0 %v1649
  %v1651 = vand.u32 %v207, 4294901760
  %1652 = vmatpush1.msra.mxu0 %v1651
  %v1653 = vand.u32 %v216, 4294901760
  %1654 = vmatprep.subr.mxu0 %v1653
  %v1655 = vand.u32 %v215, 4294901760
  %1656 = vmatpush1.msra.mxu0 %v1655
  %v1657 = vand.u32 %v224, 4294901760
  %1658 = vmatprep.subr.mxu0 %v1657
  %v1659 = vand.u32 %v223, 4294901760
  %1660 = vmatpush1.msra.mxu0 %v1659
  %v1661 = vand.u32 %v232, 4294901760
  %1662 = vmatprep.subr.mxu0 %v1661
  %v1663 = vand.u32 %v231, 4294901760
  %1664 = vmatpush1.msra.mxu0 %v1663
  %v1665 = vand.u32 %v240, 4294901760
  %1666 = vmatprep.subr.mxu0 %v1665
  %v1667 = vand.u32 %v239, 4294901760
  %1668 = vmatpush1.msra.mxu0 %v1667
  %v1669 = vand.u32 %v248, 4294901760
  %1670 = vmatprep.subr.mxu0 %v1669
  %v1671 = vand.u32 %v247, 4294901760
  %1672 = vmatpush1.msra.mxu0 %v1671
  %v1673 = vand.u32 %v256, 4294901760
  %1674 = vmatprep.subr.mxu0 %v1673
  %v1675 = vand.u32 %v255, 4294901760
  %1676 = vmatpush1.msra.mxu0 %v1675
  %v1677 = vand.u32 %v264, 4294901760
  %1678 = vmatprep.subr.mxu0 %v1677
  %v1679 = vand.u32 %v263, 4294901760
  %1680 = vmatpush1.msra.mxu0 %v1679
  %v1681 = vand.u32 %v12, 4294901760
  %v1682 = vsub.f32 %v12, %v1681
  %v1683 = vand.u32 %v1682, 4294901760
  %v1684 = vsub.f32 %v1682, %v1683
  %v1685 = vand.u32 %v1684, 4294901760
  %1686 = vmatprep.mubr.f32.mxu0 %v1685
  %v1687 = vand.u32 %v11, 4294901760
  %v1688 = vsub.f32 %v11, %v1687
  %v1689 = vand.u32 %v1688, 4294901760
  %v1690 = vsub.f32 %v1688, %v1689
  %v1691 = vand.u32 %v1690, 4294901760
  %1692 = vmatmul.mubr.f32.gmra.mrb[0].mxu0 %v1691
  %v1693 = vpop.f32.mrb[0].mxu0
  %v1694 = vadd.f32 0.0, %v1693
  %v1695 = vpop.f32.mrb[0].mxu0
  %v1696 = vadd.f32 0.0, %v1695
  %1697 = vdwg.mxu0
  %v1698 = vand.u32 %v16, 4294901760
  %v1699 = vsub.f32 %v16, %v1698
  %v1700 = vand.u32 %v1699, 4294901760
  %v1701 = vsub.f32 %v1699, %v1700
  %v1702 = vand.u32 %v1701, 4294901760
  %1703 = vmatprep.subr.mxu0 %v1702
  %v1704 = vand.u32 %v15, 4294901760
  %v1705 = vsub.f32 %v15, %v1704
  %v1706 = vand.u32 %v1705, 4294901760
  %v1707 = vsub.f32 %v1705, %v1706
  %v1708 = vand.u32 %v1707, 4294901760
  %1709 = vmatpush1.msra.mxu0 %v1708
  %v1710 = vand.u32 %v24, 4294901760
  %v1711 = vsub.f32 %v24, %v1710
  %v1712 = vand.u32 %v1711, 4294901760
  %v1713 = vsub.f32 %v1711, %v1712
  %v1714 = vand.u32 %v1713, 4294901760
  %1715 = vmatprep.subr.mxu0 %v1714
  %v1716 = vand.u32 %v23, 4294901760
  %v1717 = vsub.f32 %v23, %v1716
  %v1718 = vand.u32 %v1717, 4294901760
  %v1719 = vsub.f32 %v1717, %v1718
  %v1720 = vand.u32 %v1719, 4294901760
  %1721 = vmatpush1.msra.mxu0 %v1720
  %v1722 = vand.u32 %v32, 4294901760
  %v1723 = vsub.f32 %v32, %v1722
  %v1724 = vand.u32 %v1723, 4294901760
  %v1725 = vsub.f32 %v1723, %v1724
  %v1726 = vand.u32 %v1725, 4294901760
  %1727 = vmatprep.subr.mxu0 %v1726
  %v1728 = vand.u32 %v31, 4294901760
  %v1729 = vsub.f32 %v31, %v1728
  %v1730 = vand.u32 %v1729, 4294901760
  %v1731 = vsub.f32 %v1729, %v1730
  %v1732 = vand.u32 %v1731, 4294901760
  %1733 = vmatpush1.msra.mxu0 %v1732
  %v1734 = vand.u32 %v40, 4294901760
  %v1735 = vsub.f32 %v40, %v1734
  %v1736 = vand.u32 %v1735, 4294901760
  %v1737 = vsub.f32 %v1735, %v1736
  %v1738 = vand.u32 %v1737, 4294901760
  %1739 = vmatprep.subr.mxu0 %v1738
  %v1740 = vand.u32 %v39, 4294901760
  %v1741 = vsub.f32 %v39, %v1740
  %v1742 = vand.u32 %v1741, 4294901760
  %v1743 = vsub.f32 %v1741, %v1742
  %v1744 = vand.u32 %v1743, 4294901760
  %1745 = vmatpush1.msra.mxu0 %v1744
  %v1746 = vand.u32 %v48, 4294901760
  %v1747 = vsub.f32 %v48, %v1746
  %v1748 = vand.u32 %v1747, 4294901760
  %v1749 = vsub.f32 %v1747, %v1748
  %v1750 = vand.u32 %v1749, 4294901760
  %1751 = vmatprep.subr.mxu0 %v1750
  %v1752 = vand.u32 %v47, 4294901760
  %v1753 = vsub.f32 %v47, %v1752
  %v1754 = vand.u32 %v1753, 4294901760
  %v1755 = vsub.f32 %v1753, %v1754
  %v1756 = vand.u32 %v1755, 4294901760
  %1757 = vmatpush1.msra.mxu0 %v1756
  %v1758 = vand.u32 %v56, 4294901760
  %v1759 = vsub.f32 %v56, %v1758
  %v1760 = vand.u32 %v1759, 4294901760
  %v1761 = vsub.f32 %v1759, %v1760
  %v1762 = vand.u32 %v1761, 4294901760
  %1763 = vmatprep.subr.mxu0 %v1762
  %v1764 = vand.u32 %v55, 4294901760
  %v1765 = vsub.f32 %v55, %v1764
  %v1766 = vand.u32 %v1765, 4294901760
  %v1767 = vsub.f32 %v1765, %v1766
  %v1768 = vand.u32 %v1767, 4294901760
  %1769 = vmatpush1.msra.mxu0 %v1768
  %v1770 = vand.u32 %v64, 4294901760
  %v1771 = vsub.f32 %v64, %v1770
  %v1772 = vand.u32 %v1771, 4294901760
  %v1773 = vsub.f32 %v1771, %v1772
  %v1774 = vand.u32 %v1773, 4294901760
  %1775 = vmatprep.subr.mxu0 %v1774
  %v1776 = vand.u32 %v63, 4294901760
  %v1777 = vsub.f32 %v63, %v1776
  %v1778 = vand.u32 %v1777, 4294901760
  %v1779 = vsub.f32 %v1777, %v1778
  %v1780 = vand.u32 %v1779, 4294901760
  %1781 = vmatpush1.msra.mxu0 %v1780
  %v1782 = vand.u32 %v72, 4294901760
  %v1783 = vsub.f32 %v72, %v1782
  %v1784 = vand.u32 %v1783, 4294901760
  %v1785 = vsub.f32 %v1783, %v1784
  %v1786 = vand.u32 %v1785, 4294901760
  %1787 = vmatprep.subr.mxu0 %v1786
  %v1788 = vand.u32 %v71, 4294901760
  %v1789 = vsub.f32 %v71, %v1788
  %v1790 = vand.u32 %v1789, 4294901760
  %v1791 = vsub.f32 %v1789, %v1790
  %v1792 = vand.u32 %v1791, 4294901760
  %1793 = vmatpush1.msra.mxu0 %v1792
  %v1794 = vand.u32 %v80, 4294901760
  %v1795 = vsub.f32 %v80, %v1794
  %v1796 = vand.u32 %v1795, 4294901760
  %v1797 = vsub.f32 %v1795, %v1796
  %v1798 = vand.u32 %v1797, 4294901760
  %1799 = vmatprep.subr.mxu0 %v1798
  %v1800 = vand.u32 %v79, 4294901760
  %v1801 = vsub.f32 %v79, %v1800
  %v1802 = vand.u32 %v1801, 4294901760
  %v1803 = vsub.f32 %v1801, %v1802
  %v1804 = vand.u32 %v1803, 4294901760
  %1805 = vmatpush1.msra.mxu0 %v1804
  %v1806 = vand.u32 %v88, 4294901760
  %v1807 = vsub.f32 %v88, %v1806
  %v1808 = vand.u32 %v1807, 4294901760
  %v1809 = vsub.f32 %v1807, %v1808
  %v1810 = vand.u32 %v1809, 4294901760
  %1811 = vmatprep.subr.mxu0 %v1810
  %v1812 = vand.u32 %v87, 4294901760
  %v1813 = vsub.f32 %v87, %v1812
  %v1814 = vand.u32 %v1813, 4294901760
  %v1815 = vsub.f32 %v1813, %v1814
  %v1816 = vand.u32 %v1815, 4294901760
  %1817 = vmatpush1.msra.mxu0 %v1816
  %v1818 = vand.u32 %v96, 4294901760
  %v1819 = vsub.f32 %v96, %v1818
  %v1820 = vand.u32 %v1819, 4294901760
  %v1821 = vsub.f32 %v1819, %v1820
  %v1822 = vand.u32 %v1821, 4294901760
  %1823 = vmatprep.subr.mxu0 %v1822
  %v1824 = vand.u32 %v95, 4294901760
  %v1825 = vsub.f32 %v95, %v1824
  %v1826 = vand.u32 %v1825, 4294901760
  %v1827 = vsub.f32 %v1825, %v1826
  %v1828 = vand.u32 %v1827, 4294901760
  %1829 = vmatpush1.msra.mxu0 %v1828
  %v1830 = vand.u32 %v104, 4294901760
  %v1831 = vsub.f32 %v104, %v1830
  %v1832 = vand.u32 %v1831, 4294901760
  %v1833 = vsub.f32 %v1831, %v1832
  %v1834 = vand.u32 %v1833, 4294901760
  %1835 = vmatprep.subr.mxu0 %v1834
  %v1836 = vand.u32 %v103, 4294901760
  %v1837 = vsub.f32 %v103, %v1836
  %v1838 = vand.u32 %v1837, 4294901760
  %v1839 = vsub.f32 %v1837, %v1838
  %v1840 = vand.u32 %v1839, 4294901760
  %1841 = vmatpush1.msra.mxu0 %v1840
  %v1842 = vand.u32 %v112, 4294901760
  %v1843 = vsub.f32 %v112, %v1842
  %v1844 = vand.u32 %v1843, 4294901760
  %v1845 = vsub.f32 %v1843, %v1844
  %v1846 = vand.u32 %v1845, 4294901760
  %1847 = vmatprep.subr.mxu0 %v1846
  %v1848 = vand.u32 %v111, 4294901760
  %v1849 = vsub.f32 %v111, %v1848
  %v1850 = vand.u32 %v1849, 4294901760
  %v1851 = vsub.f32 %v1849, %v1850
  %v1852 = vand.u32 %v1851, 4294901760
  %1853 = vmatpush1.msra.mxu0 %v1852
  %v1854 = vand.u32 %v120, 4294901760
  %v1855 = vsub.f32 %v120, %v1854
  %v1856 = vand.u32 %v1855, 4294901760
  %v1857 = vsub.f32 %v1855, %v1856
  %v1858 = vand.u32 %v1857, 4294901760
  %1859 = vmatprep.subr.mxu0 %v1858
  %v1860 = vand.u32 %v119, 4294901760
  %v1861 = vsub.f32 %v119, %v1860
  %v1862 = vand.u32 %v1861, 4294901760
  %v1863 = vsub.f32 %v1861, %v1862
  %v1864 = vand.u32 %v1863, 4294901760
  %1865 = vmatpush1.msra.mxu0 %v1864
  %v1866 = vand.u32 %v128, 4294901760
  %v1867 = vsub.f32 %v128, %v1866
  %v1868 = vand.u32 %v1867, 4294901760
  %v1869 = vsub.f32 %v1867, %v1868
  %v1870 = vand.u32 %v1869, 4294901760
  %1871 = vmatprep.subr.mxu0 %v1870
  %v1872 = vand.u32 %v127, 4294901760
  %v1873 = vsub.f32 %v127, %v1872
  %v1874 = vand.u32 %v1873, 4294901760
  %v1875 = vsub.f32 %v1873, %v1874
  %v1876 = vand.u32 %v1875, 4294901760
  %1877 = vmatpush1.msra.mxu0 %v1876
  %v1878 = vand.u32 %v136, 4294901760
  %v1879 = vsub.f32 %v136, %v1878
  %v1880 = vand.u32 %v1879, 4294901760
  %v1881 = vsub.f32 %v1879, %v1880
  %v1882 = vand.u32 %v1881, 4294901760
  %1883 = vmatprep.subr.mxu0 %v1882
  %v1884 = vand.u32 %v135, 4294901760
  %v1885 = vsub.f32 %v135, %v1884
  %v1886 = vand.u32 %v1885, 4294901760
  %v1887 = vsub.f32 %v1885, %v1886
  %v1888 = vand.u32 %v1887, 4294901760
  %1889 = vmatpush1.msra.mxu0 %v1888
  %v1890 = vand.u32 %v144, 4294901760
  %v1891 = vsub.f32 %v144, %v1890
  %v1892 = vand.u32 %v1891, 4294901760
  %v1893 = vsub.f32 %v1891, %v1892
  %v1894 = vand.u32 %v1893, 4294901760
  %1895 = vmatprep.subr.mxu0 %v1894
  %v1896 = vand.u32 %v143, 4294901760
  %v1897 = vsub.f32 %v143, %v1896
  %v1898 = vand.u32 %v1897, 4294901760
  %v1899 = vsub.f32 %v1897, %v1898
  %v1900 = vand.u32 %v1899, 4294901760
  %1901 = vmatpush1.msra.mxu0 %v1900
  %v1902 = vand.u32 %v152, 4294901760
  %v1903 = vsub.f32 %v152, %v1902
  %v1904 = vand.u32 %v1903, 4294901760
  %v1905 = vsub.f32 %v1903, %v1904
  %v1906 = vand.u32 %v1905, 4294901760
  %1907 = vmatprep.subr.mxu0 %v1906
  %v1908 = vand.u32 %v151, 4294901760
  %v1909 = vsub.f32 %v151, %v1908
  %v1910 = vand.u32 %v1909, 4294901760
  %v1911 = vsub.f32 %v1909, %v1910
  %v1912 = vand.u32 %v1911, 4294901760
  %1913 = vmatpush1.msra.mxu0 %v1912
  %v1914 = vand.u32 %v160, 4294901760
  %v1915 = vsub.f32 %v160, %v1914
  %v1916 = vand.u32 %v1915, 4294901760
  %v1917 = vsub.f32 %v1915, %v1916
  %v1918 = vand.u32 %v1917, 4294901760
  %1919 = vmatprep.subr.mxu0 %v1918
  %v1920 = vand.u32 %v159, 4294901760
  %v1921 = vsub.f32 %v159, %v1920
  %v1922 = vand.u32 %v1921, 4294901760
  %v1923 = vsub.f32 %v1921, %v1922
  %v1924 = vand.u32 %v1923, 4294901760
  %1925 = vmatpush1.msra.mxu0 %v1924
  %v1926 = vand.u32 %v168, 4294901760
  %v1927 = vsub.f32 %v168, %v1926
  %v1928 = vand.u32 %v1927, 4294901760
  %v1929 = vsub.f32 %v1927, %v1928
  %v1930 = vand.u32 %v1929, 4294901760
  %1931 = vmatprep.subr.mxu0 %v1930
  %v1932 = vand.u32 %v167, 4294901760
  %v1933 = vsub.f32 %v167, %v1932
  %v1934 = vand.u32 %v1933, 4294901760
  %v1935 = vsub.f32 %v1933, %v1934
  %v1936 = vand.u32 %v1935, 4294901760
  %1937 = vmatpush1.msra.mxu0 %v1936
  %v1938 = vand.u32 %v176, 4294901760
  %v1939 = vsub.f32 %v176, %v1938
  %v1940 = vand.u32 %v1939, 4294901760
  %v1941 = vsub.f32 %v1939, %v1940
  %v1942 = vand.u32 %v1941, 4294901760
  %1943 = vmatprep.subr.mxu0 %v1942
  %v1944 = vand.u32 %v175, 4294901760
  %v1945 = vsub.f32 %v175, %v1944
  %v1946 = vand.u32 %v1945, 4294901760
  %v1947 = vsub.f32 %v1945, %v1946
  %v1948 = vand.u32 %v1947, 4294901760
  %1949 = vmatpush1.msra.mxu0 %v1948
  %v1950 = vand.u32 %v184, 4294901760
  %v1951 = vsub.f32 %v184, %v1950
  %v1952 = vand.u32 %v1951, 4294901760
  %v1953 = vsub.f32 %v1951, %v1952
  %v1954 = vand.u32 %v1953, 4294901760
  %1955 = vmatprep.subr.mxu0 %v1954
  %v1956 = vand.u32 %v183, 4294901760
  %v1957 = vsub.f32 %v183, %v1956
  %v1958 = vand.u32 %v1957, 4294901760
  %v1959 = vsub.f32 %v1957, %v1958
  %v1960 = vand.u32 %v1959, 4294901760
  %1961 = vmatpush1.msra.mxu0 %v1960
  %v1962 = vand.u32 %v192, 4294901760
  %v1963 = vsub.f32 %v192, %v1962
  %v1964 = vand.u32 %v1963, 4294901760
  %v1965 = vsub.f32 %v1963, %v1964
  %v1966 = vand.u32 %v1965, 4294901760
  %1967 = vmatprep.subr.mxu0 %v1966
  %v1968 = vand.u32 %v191, 4294901760
  %v1969 = vsub.f32 %v191, %v1968
  %v1970 = vand.u32 %v1969, 4294901760
  %v1971 = vsub.f32 %v1969, %v1970
  %v1972 = vand.u32 %v1971, 4294901760
  %1973 = vmatpush1.msra.mxu0 %v1972
  %v1974 = vand.u32 %v200, 4294901760
  %v1975 = vsub.f32 %v200, %v1974
  %v1976 = vand.u32 %v1975, 4294901760
  %v1977 = vsub.f32 %v1975, %v1976
  %v1978 = vand.u32 %v1977, 4294901760
  %1979 = vmatprep.subr.mxu0 %v1978
  %v1980 = vand.u32 %v199, 4294901760
  %v1981 = vsub.f32 %v199, %v1980
  %v1982 = vand.u32 %v1981, 4294901760
  %v1983 = vsub.f32 %v1981, %v1982
  %v1984 = vand.u32 %v1983, 4294901760
  %1985 = vmatpush1.msra.mxu0 %v1984
  %v1986 = vand.u32 %v208, 4294901760
  %v1987 = vsub.f32 %v208, %v1986
  %v1988 = vand.u32 %v1987, 4294901760
  %v1989 = vsub.f32 %v1987, %v1988
  %v1990 = vand.u32 %v1989, 4294901760
  %1991 = vmatprep.subr.mxu0 %v1990
  %v1992 = vand.u32 %v207, 4294901760
  %v1993 = vsub.f32 %v207, %v1992
  %v1994 = vand.u32 %v1993, 4294901760
  %v1995 = vsub.f32 %v1993, %v1994
  %v1996 = vand.u32 %v1995, 4294901760
  %1997 = vmatpush1.msra.mxu0 %v1996
  %v1998 = vand.u32 %v216, 4294901760
  %v1999 = vsub.f32 %v216, %v1998
  %v2000 = vand.u32 %v1999, 4294901760
  %v2001 = vsub.f32 %v1999, %v2000
  %v2002 = vand.u32 %v2001, 4294901760
  %2003 = vmatprep.subr.mxu0 %v2002
  %v2004 = vand.u32 %v215, 4294901760
  %v2005 = vsub.f32 %v215, %v2004
  %v2006 = vand.u32 %v2005, 4294901760
  %v2007 = vsub.f32 %v2005, %v2006
  %v2008 = vand.u32 %v2007, 4294901760
  %2009 = vmatpush1.msra.mxu0 %v2008
  %v2010 = vand.u32 %v224, 4294901760
  %v2011 = vsub.f32 %v224, %v2010
  %v2012 = vand.u32 %v2011, 4294901760
  %v2013 = vsub.f32 %v2011, %v2012
  %v2014 = vand.u32 %v2013, 4294901760
  %2015 = vmatprep.subr.mxu0 %v2014
  %v2016 = vand.u32 %v223, 4294901760
  %v2017 = vsub.f32 %v223, %v2016
  %v2018 = vand.u32 %v2017, 4294901760
  %v2019 = vsub.f32 %v2017, %v2018
  %v2020 = vand.u32 %v2019, 4294901760
  %2021 = vmatpush1.msra.mxu0 %v2020
  %v2022 = vand.u32 %v232, 4294901760
  %v2023 = vsub.f32 %v232, %v2022
  %v2024 = vand.u32 %v2023, 4294901760
  %v2025 = vsub.f32 %v2023, %v2024
  %v2026 = vand.u32 %v2025, 4294901760
  %2027 = vmatprep.subr.mxu0 %v2026
  %v2028 = vand.u32 %v231, 4294901760
  %v2029 = vsub.f32 %v231, %v2028
  %v2030 = vand.u32 %v2029, 4294901760
  %v2031 = vsub.f32 %v2029, %v2030
  %v2032 = vand.u32 %v2031, 4294901760
  %2033 = vmatpush1.msra.mxu0 %v2032
  %v2034 = vand.u32 %v240, 4294901760
  %v2035 = vsub.f32 %v240, %v2034
  %v2036 = vand.u32 %v2035, 4294901760
  %v2037 = vsub.f32 %v2035, %v2036
  %v2038 = vand.u32 %v2037, 4294901760
  %2039 = vmatprep.subr.mxu0 %v2038
  %v2040 = vand.u32 %v239, 4294901760
  %v2041 = vsub.f32 %v239, %v2040
  %v2042 = vand.u32 %v2041, 4294901760
  %v2043 = vsub.f32 %v2041, %v2042
  %v2044 = vand.u32 %v2043, 4294901760
  %2045 = vmatpush1.msra.mxu0 %v2044
  %v2046 = vand.u32 %v248, 4294901760
  %v2047 = vsub.f32 %v248, %v2046
  %v2048 = vand.u32 %v2047, 4294901760
  %v2049 = vsub.f32 %v2047, %v2048
  %v2050 = vand.u32 %v2049, 4294901760
  %2051 = vmatprep.subr.mxu0 %v2050
  %v2052 = vand.u32 %v247, 4294901760
  %v2053 = vsub.f32 %v247, %v2052
  %v2054 = vand.u32 %v2053, 4294901760
  %v2055 = vsub.f32 %v2053, %v2054
  %v2056 = vand.u32 %v2055, 4294901760
  %2057 = vmatpush1.msra.mxu0 %v2056
  %v2058 = vand.u32 %v256, 4294901760
  %v2059 = vsub.f32 %v256, %v2058
  %v2060 = vand.u32 %v2059, 4294901760
  %v2061 = vsub.f32 %v2059, %v2060
  %v2062 = vand.u32 %v2061, 4294901760
  %2063 = vmatprep.subr.mxu0 %v2062
  %v2064 = vand.u32 %v255, 4294901760
  %v2065 = vsub.f32 %v255, %v2064
  %v2066 = vand.u32 %v2065, 4294901760
  %v2067 = vsub.f32 %v2065, %v2066
  %v2068 = vand.u32 %v2067, 4294901760
  %2069 = vmatpush1.msra.mxu0 %v2068
  %v2070 = vand.u32 %v264, 4294901760
  %v2071 = vsub.f32 %v264, %v2070
  %v2072 = vand.u32 %v2071, 4294901760
  %v2073 = vsub.f32 %v2071, %v2072
  %v2074 = vand.u32 %v2073, 4294901760
  %2075 = vmatprep.subr.mxu0 %v2074
  %v2076 = vand.u32 %v263, 4294901760
  %v2077 = vsub.f32 %v263, %v2076
  %v2078 = vand.u32 %v2077, 4294901760
  %v2079 = vsub.f32 %v2077, %v2078
  %v2080 = vand.u32 %v2079, 4294901760
  %2081 = vmatpush1.msra.mxu0 %v2080
  %v2082 = vand.u32 %v12, 4294901760
  %2083 = vmatprep.mubr.f32.mxu0 %v2082
  %v2084 = vand.u32 %v11, 4294901760
  %2085 = vmatmul.mubr.f32.gmra.mrb[0].mxu0 %v2084
  %v2086 = vpop.f32.mrb[0].mxu0
  %v2087 = vadd.f32 %v1694, %v2086
  %v2088 = vpop.f32.mrb[0].mxu0
  %v2089 = vadd.f32 %v1696, %v2088
  %2090 = vdwg.mxu0
  %v2091 = vand.u32 %v16, 4294901760
  %v2092 = vsub.f32 %v16, %v2091
  %2093 = vmatprep.subr.mxu0 %v2092
  %v2094 = vand.u32 %v15, 4294901760
  %v2095 = vsub.f32 %v15, %v2094
  %2096 = vmatpush1.msra.mxu0 %v2095
  %v2097 = vand.u32 %v24, 4294901760
  %v2098 = vsub.f32 %v24, %v2097
  %2099 = vmatprep.subr.mxu0 %v2098
  %v2100 = vand.u32 %v23, 4294901760
  %v2101 = vsub.f32 %v23, %v2100
  %2102 = vmatpush1.msra.mxu0 %v2101
  %v2103 = vand.u32 %v32, 4294901760
  %v2104 = vsub.f32 %v32, %v2103
  %2105 = vmatprep.subr.mxu0 %v2104
  %v2106 = vand.u32 %v31, 4294901760
  %v2107 = vsub.f32 %v31, %v2106
  %2108 = vmatpush1.msra.mxu0 %v2107
  %v2109 = vand.u32 %v40, 4294901760
  %v2110 = vsub.f32 %v40, %v2109
  %2111 = vmatprep.subr.mxu0 %v2110
  %v2112 = vand.u32 %v39, 4294901760
  %v2113 = vsub.f32 %v39, %v2112
  %2114 = vmatpush1.msra.mxu0 %v2113
  %v2115 = vand.u32 %v48, 4294901760
  %v2116 = vsub.f32 %v48, %v2115
  %2117 = vmatprep.subr.mxu0 %v2116
  %v2118 = vand.u32 %v47, 4294901760
  %v2119 = vsub.f32 %v47, %v2118
  %2120 = vmatpush1.msra.mxu0 %v2119
  %v2121 = vand.u32 %v56, 4294901760
  %v2122 = vsub.f32 %v56, %v2121
  %2123 = vmatprep.subr.mxu0 %v2122
  %v2124 = vand.u32 %v55, 4294901760
  %v2125 = vsub.f32 %v55, %v2124
  %2126 = vmatpush1.msra.mxu0 %v2125
  %v2127 = vand.u32 %v64, 4294901760
  %v2128 = vsub.f32 %v64, %v2127
  %2129 = vmatprep.subr.mxu0 %v2128
  %v2130 = vand.u32 %v63, 4294901760
  %v2131 = vsub.f32 %v63, %v2130
  %2132 = vmatpush1.msra.mxu0 %v2131
  %v2133 = vand.u32 %v72, 4294901760
  %v2134 = vsub.f32 %v72, %v2133
  %2135 = vmatprep.subr.mxu0 %v2134
  %v2136 = vand.u32 %v71, 4294901760
  %v2137 = vsub.f32 %v71, %v2136
  %2138 = vmatpush1.msra.mxu0 %v2137
  %v2139 = vand.u32 %v80, 4294901760
  %v2140 = vsub.f32 %v80, %v2139
  %2141 = vmatprep.subr.mxu0 %v2140
  %v2142 = vand.u32 %v79, 4294901760
  %v2143 = vsub.f32 %v79, %v2142
  %2144 = vmatpush1.msra.mxu0 %v2143
  %v2145 = vand.u32 %v88, 4294901760
  %v2146 = vsub.f32 %v88, %v2145
  %2147 = vmatprep.subr.mxu0 %v2146
  %v2148 = vand.u32 %v87, 4294901760
  %v2149 = vsub.f32 %v87, %v2148
  %2150 = vmatpush1.msra.mxu0 %v2149
  %v2151 = vand.u32 %v96, 4294901760
  %v2152 = vsub.f32 %v96, %v2151
  %2153 = vmatprep.subr.mxu0 %v2152
  %v2154 = vand.u32 %v95, 4294901760
  %v2155 = vsub.f32 %v95, %v2154
  %2156 = vmatpush1.msra.mxu0 %v2155
  %v2157 = vand.u32 %v104, 4294901760
  %v2158 = vsub.f32 %v104, %v2157
  %2159 = vmatprep.subr.mxu0 %v2158
  %v2160 = vand.u32 %v103, 4294901760
  %v2161 = vsub.f32 %v103, %v2160
  %2162 = vmatpush1.msra.mxu0 %v2161
  %v2163 = vand.u32 %v112, 4294901760
  %v2164 = vsub.f32 %v112, %v2163
  %2165 = vmatprep.subr.mxu0 %v2164
  %v2166 = vand.u32 %v111, 4294901760
  %v2167 = vsub.f32 %v111, %v2166
  %2168 = vmatpush1.msra.mxu0 %v2167
  %v2169 = vand.u32 %v120, 4294901760
  %v2170 = vsub.f32 %v120, %v2169
  %2171 = vmatprep.subr.mxu0 %v2170
  %v2172 = vand.u32 %v119, 4294901760
  %v2173 = vsub.f32 %v119, %v2172
  %2174 = vmatpush1.msra.mxu0 %v2173
  %v2175 = vand.u32 %v128, 4294901760
  %v2176 = vsub.f32 %v128, %v2175
  %2177 = vmatprep.subr.mxu0 %v2176
  %v2178 = vand.u32 %v127, 4294901760
  %v2179 = vsub.f32 %v127, %v2178
  %2180 = vmatpush1.msra.mxu0 %v2179
  %v2181 = vand.u32 %v136, 4294901760
  %v2182 = vsub.f32 %v136, %v2181
  %2183 = vmatprep.subr.mxu0 %v2182
  %v2184 = vand.u32 %v135, 4294901760
  %v2185 = vsub.f32 %v135, %v2184
  %2186 = vmatpush1.msra.mxu0 %v2185
  %v2187 = vand.u32 %v144, 4294901760
  %v2188 = vsub.f32 %v144, %v2187
  %2189 = vmatprep.subr.mxu0 %v2188
  %v2190 = vand.u32 %v143, 4294901760
  %v2191 = vsub.f32 %v143, %v2190
  %2192 = vmatpush1.msra.mxu0 %v2191
  %v2193 = vand.u32 %v152, 4294901760
  %v2194 = vsub.f32 %v152, %v2193
  %2195 = vmatprep.subr.mxu0 %v2194
  %v2196 = vand.u32 %v151, 4294901760
  %v2197 = vsub.f32 %v151, %v2196
  %2198 = vmatpush1.msra.mxu0 %v2197
  %v2199 = vand.u32 %v160, 4294901760
  %v2200 = vsub.f32 %v160, %v2199
  %2201 = vmatprep.subr.mxu0 %v2200
  %v2202 = vand.u32 %v159, 4294901760
  %v2203 = vsub.f32 %v159, %v2202
  %2204 = vmatpush1.msra.mxu0 %v2203
  %v2205 = vand.u32 %v168, 4294901760
  %v2206 = vsub.f32 %v168, %v2205
  %2207 = vmatprep.subr.mxu0 %v2206
  %v2208 = vand.u32 %v167, 4294901760
  %v2209 = vsub.f32 %v167, %v2208
  %2210 = vmatpush1.msra.mxu0 %v2209
  %v2211 = vand.u32 %v176, 4294901760
  %v2212 = vsub.f32 %v176, %v2211
  %2213 = vmatprep.subr.mxu0 %v2212
  %v2214 = vand.u32 %v175, 4294901760
  %v2215 = vsub.f32 %v175, %v2214
  %2216 = vmatpush1.msra.mxu0 %v2215
  %v2217 = vand.u32 %v184, 4294901760
  %v2218 = vsub.f32 %v184, %v2217
  %2219 = vmatprep.subr.mxu0 %v2218
  %v2220 = vand.u32 %v183, 4294901760
  %v2221 = vsub.f32 %v183, %v2220
  %2222 = vmatpush1.msra.mxu0 %v2221
  %v2223 = vand.u32 %v192, 4294901760
  %v2224 = vsub.f32 %v192, %v2223
  %2225 = vmatprep.subr.mxu0 %v2224
  %v2226 = vand.u32 %v191, 4294901760
  %v2227 = vsub.f32 %v191, %v2226
  %2228 = vmatpush1.msra.mxu0 %v2227
  %v2229 = vand.u32 %v200, 4294901760
  %v2230 = vsub.f32 %v200, %v2229
  %2231 = vmatprep.subr.mxu0 %v2230
  %v2232 = vand.u32 %v199, 4294901760
  %v2233 = vsub.f32 %v199, %v2232
  %2234 = vmatpush1.msra.mxu0 %v2233
  %v2235 = vand.u32 %v208, 4294901760
  %v2236 = vsub.f32 %v208, %v2235
  %2237 = vmatprep.subr.mxu0 %v2236
  %v2238 = vand.u32 %v207, 4294901760
  %v2239 = vsub.f32 %v207, %v2238
  %2240 = vmatpush1.msra.mxu0 %v2239
  %v2241 = vand.u32 %v216, 4294901760
  %v2242 = vsub.f32 %v216, %v2241
  %2243 = vmatprep.subr.mxu0 %v2242
  %v2244 = vand.u32 %v215, 4294901760
  %v2245 = vsub.f32 %v215, %v2244
  %2246 = vmatpush1.msra.mxu0 %v2245
  %v2247 = vand.u32 %v224, 4294901760
  %v2248 = vsub.f32 %v224, %v2247
  %2249 = vmatprep.subr.mxu0 %v2248
  %v2250 = vand.u32 %v223, 4294901760
  %v2251 = vsub.f32 %v223, %v2250
  %2252 = vmatpush1.msra.mxu0 %v2251
  %v2253 = vand.u32 %v232, 4294901760
  %v2254 = vsub.f32 %v232, %v2253
  %2255 = vmatprep.subr.mxu0 %v2254
  %v2256 = vand.u32 %v231, 4294901760
  %v2257 = vsub.f32 %v231, %v2256
  %2258 = vmatpush1.msra.mxu0 %v2257
  %v2259 = vand.u32 %v240, 4294901760
  %v2260 = vsub.f32 %v240, %v2259
  %2261 = vmatprep.subr.mxu0 %v2260
  %v2262 = vand.u32 %v239, 4294901760
  %v2263 = vsub.f32 %v239, %v2262
  %2264 = vmatpush1.msra.mxu0 %v2263
  %v2265 = vand.u32 %v248, 4294901760
  %v2266 = vsub.f32 %v248, %v2265
  %2267 = vmatprep.subr.mxu0 %v2266
  %v2268 = vand.u32 %v247, 4294901760
  %v2269 = vsub.f32 %v247, %v2268
  %2270 = vmatpush1.msra.mxu0 %v2269
  %v2271 = vand.u32 %v256, 4294901760
  %v2272 = vsub.f32 %v256, %v2271
  %2273 = vmatprep.subr.mxu0 %v2272
  %v2274 = vand.u32 %v255, 4294901760
  %v2275 = vsub.f32 %v255, %v2274
  %2276 = vmatpush1.msra.mxu0 %v2275
  %v2277 = vand.u32 %v264, 4294901760
  %v2278 = vsub.f32 %v264, %v2277
  %2279 = vmatprep.subr.mxu0 %v2278
  %v2280 = vand.u32 %v263, 4294901760
  %v2281 = vsub.f32 %v263, %v2280
  %2282 = vmatpush1.msra.mxu0 %v2281
  %v2283 = vand.u32 %v12, 4294901760
  %v2284 = vsub.f32 %v12, %v2283
  %2285 = vmatprep.mubr.f32.mxu0 %v2284
  %v2286 = vand.u32 %v11, 4294901760
  %v2287 = vsub.f32 %v11, %v2286
  %2288 = vmatmul.mubr.f32.gmra.mrb[0].mxu0 %v2287
  %v2289 = vpop.f32.mrb[0].mxu0
  %v2290 = vadd.f32 %v2087, %v2289
  %v2291 = vpop.f32.mrb[0].mxu0
  %v2292 = vadd.f32 %v2089, %v2291
  %2293 = vdwg.mxu0
  %v2294 = vand.u32 %v16, 4294901760
  %2295 = vmatprep.subr.mxu0 %v2294
  %v2296 = vand.u32 %v15, 4294901760
  %2297 = vmatpush1.msra.mxu0 %v2296
  %v2298 = vand.u32 %v24, 4294901760
  %2299 = vmatprep.subr.mxu0 %v2298
  %v2300 = vand.u32 %v23, 4294901760
  %2301 = vmatpush1.msra.mxu0 %v2300
  %v2302 = vand.u32 %v32, 4294901760
  %2303 = vmatprep.subr.mxu0 %v2302
  %v2304 = vand.u32 %v31, 4294901760
  %2305 = vmatpush1.msra.mxu0 %v2304
  %v2306 = vand.u32 %v40, 4294901760
  %2307 = vmatprep.subr.mxu0 %v2306
  %v2308 = vand.u32 %v39, 4294901760
  %2309 = vmatpush1.msra.mxu0 %v2308
  %v2310 = vand.u32 %v48, 4294901760
  %2311 = vmatprep.subr.mxu0 %v2310
  %v2312 = vand.u32 %v47, 4294901760
  %2313 = vmatpush1.msra.mxu0 %v2312
  %v2314 = vand.u32 %v56, 4294901760
  %2315 = vmatprep.subr.mxu0 %v2314
  %v2316 = vand.u32 %v55, 4294901760
  %2317 = vmatpush1.msra.mxu0 %v2316
  %v2318 = vand.u32 %v64, 4294901760
  %2319 = vmatprep.subr.mxu0 %v2318
  %v2320 = vand.u32 %v63, 4294901760
  %2321 = vmatpush1.msra.mxu0 %v2320
  %v2322 = vand.u32 %v72, 4294901760
  %2323 = vmatprep.subr.mxu0 %v2322
  %v2324 = vand.u32 %v71, 4294901760
  %2325 = vmatpush1.msra.mxu0 %v2324
  %v2326 = vand.u32 %v80, 4294901760
  %2327 = vmatprep.subr.mxu0 %v2326
  %v2328 = vand.u32 %v79, 4294901760
  %2329 = vmatpush1.msra.mxu0 %v2328
  %v2330 = vand.u32 %v88, 4294901760
  %2331 = vmatprep.subr.mxu0 %v2330
  %v2332 = vand.u32 %v87, 4294901760
  %2333 = vmatpush1.msra.mxu0 %v2332
  %v2334 = vand.u32 %v96, 4294901760
  %2335 = vmatprep.subr.mxu0 %v2334
  %v2336 = vand.u32 %v95, 4294901760
  %2337 = vmatpush1.msra.mxu0 %v2336
  %v2338 = vand.u32 %v104, 4294901760
  %2339 = vmatprep.subr.mxu0 %v2338
  %v2340 = vand.u32 %v103, 4294901760
  %2341 = vmatpush1.msra.mxu0 %v2340
  %v2342 = vand.u32 %v112, 4294901760
  %2343 = vmatprep.subr.mxu0 %v2342
  %v2344 = vand.u32 %v111, 4294901760
  %2345 = vmatpush1.msra.mxu0 %v2344
  %v2346 = vand.u32 %v120, 4294901760
  %2347 = vmatprep.subr.mxu0 %v2346
  %v2348 = vand.u32 %v119, 4294901760
  %2349 = vmatpush1.msra.mxu0 %v2348
  %v2350 = vand.u32 %v128, 4294901760
  %2351 = vmatprep.subr.mxu0 %v2350
  %v2352 = vand.u32 %v127, 4294901760
  %2353 = vmatpush1.msra.mxu0 %v2352
  %v2354 = vand.u32 %v136, 4294901760
  %2355 = vmatprep.subr.mxu0 %v2354
  %v2356 = vand.u32 %v135, 4294901760
  %2357 = vmatpush1.msra.mxu0 %v2356
  %v2358 = vand.u32 %v144, 4294901760
  %2359 = vmatprep.subr.mxu0 %v2358
  %v2360 = vand.u32 %v143, 4294901760
  %2361 = vmatpush1.msra.mxu0 %v2360
  %v2362 = vand.u32 %v152, 4294901760
  %2363 = vmatprep.subr.mxu0 %v2362
  %v2364 = vand.u32 %v151, 4294901760
  %2365 = vmatpush1.msra.mxu0 %v2364
  %v2366 = vand.u32 %v160, 4294901760
  %2367 = vmatprep.subr.mxu0 %v2366
  %v2368 = vand.u32 %v159, 4294901760
  %2369 = vmatpush1.msra.mxu0 %v2368
  %v2370 = vand.u32 %v168, 4294901760
  %2371 = vmatprep.subr.mxu0 %v2370
  %v2372 = vand.u32 %v167, 4294901760
  %2373 = vmatpush1.msra.mxu0 %v2372
  %v2374 = vand.u32 %v176, 4294901760
  %2375 = vmatprep.subr.mxu0 %v2374
  %v2376 = vand.u32 %v175, 4294901760
  %2377 = vmatpush1.msra.mxu0 %v2376
  %v2378 = vand.u32 %v184, 4294901760
  %2379 = vmatprep.subr.mxu0 %v2378
  %v2380 = vand.u32 %v183, 4294901760
  %2381 = vmatpush1.msra.mxu0 %v2380
  %v2382 = vand.u32 %v192, 4294901760
  %2383 = vmatprep.subr.mxu0 %v2382
  %v2384 = vand.u32 %v191, 4294901760
  %2385 = vmatpush1.msra.mxu0 %v2384
  %v2386 = vand.u32 %v200, 4294901760
  %2387 = vmatprep.subr.mxu0 %v2386
  %v2388 = vand.u32 %v199, 4294901760
  %2389 = vmatpush1.msra.mxu0 %v2388
  %v2390 = vand.u32 %v208, 4294901760
  %2391 = vmatprep.subr.mxu0 %v2390
  %v2392 = vand.u32 %v207, 4294901760
  %2393 = vmatpush1.msra.mxu0 %v2392
  %v2394 = vand.u32 %v216, 4294901760
  %2395 = vmatprep.subr.mxu0 %v2394
  %v2396 = vand.u32 %v215, 4294901760
  %2397 = vmatpush1.msra.mxu0 %v2396
  %v2398 = vand.u32 %v224, 4294901760
  %2399 = vmatprep.subr.mxu0 %v2398
  %v2400 = vand.u32 %v223, 4294901760
  %2401 = vmatpush1.msra.mxu0 %v2400
  %v2402 = vand.u32 %v232, 4294901760
  %2403 = vmatprep.subr.mxu0 %v2402
  %v2404 = vand.u32 %v231, 4294901760
  %2405 = vmatpush1.msra.mxu0 %v2404
  %v2406 = vand.u32 %v240, 4294901760
  %2407 = vmatprep.subr.mxu0 %v2406
  %v2408 = vand.u32 %v239, 4294901760
  %2409 = vmatpush1.msra.mxu0 %v2408
  %v2410 = vand.u32 %v248, 4294901760
  %2411 = vmatprep.subr.mxu0 %v2410
  %v2412 = vand.u32 %v247, 4294901760
  %2413 = vmatpush1.msra.mxu0 %v2412
  %v2414 = vand.u32 %v256, 4294901760
  %2415 = vmatprep.subr.mxu0 %v2414
  %v2416 = vand.u32 %v255, 4294901760
  %2417 = vmatpush1.msra.mxu0 %v2416
  %v2418 = vand.u32 %v264, 4294901760
  %2419 = vmatprep.subr.mxu0 %v2418
  %v2420 = vand.u32 %v263, 4294901760
  %2421 = vmatpush1.msra.mxu0 %v2420
  %v2422 = vand.u32 %v12, 4294901760
  %v2423 = vsub.f32 %v12, %v2422
  %v2424 = vand.u32 %v2423, 4294901760
  %2425 = vmatprep.mubr.f32.mxu0 %v2424
  %v2426 = vand.u32 %v11, 4294901760
  %v2427 = vsub.f32 %v11, %v2426
  %v2428 = vand.u32 %v2427, 4294901760
  %2429 = vmatmul.mubr.f32.gmra.mrb[0].mxu0 %v2428
  %v2430 = vpop.f32.mrb[0].mxu0
  %v2431 = vadd.f32 %v2290, %v2430
  %v2432 = vpop.f32.mrb[0].mxu0
  %v2433 = vadd.f32 %v2292, %v2432
  %2434 = vdwg.mxu0
  %v2435 = vand.u32 %v16, 4294901760
  %v2436 = vsub.f32 %v16, %v2435
  %v2437 = vand.u32 %v2436, 4294901760
  %2438 = vmatprep.subr.mxu0 %v2437
  %v2439 = vand.u32 %v15, 4294901760
  %v2440 = vsub.f32 %v15, %v2439
  %v2441 = vand.u32 %v2440, 4294901760
  %2442 = vmatpush1.msra.mxu0 %v2441
  %v2443 = vand.u32 %v24, 4294901760
  %v2444 = vsub.f32 %v24, %v2443
  %v2445 = vand.u32 %v2444, 4294901760
  %2446 = vmatprep.subr.mxu0 %v2445
  %v2447 = vand.u32 %v23, 4294901760
  %v2448 = vsub.f32 %v23, %v2447
  %v2449 = vand.u32 %v2448, 4294901760
  %2450 = vmatpush1.msra.mxu0 %v2449
  %v2451 = vand.u32 %v32, 4294901760
  %v2452 = vsub.f32 %v32, %v2451
  %v2453 = vand.u32 %v2452, 4294901760
  %2454 = vmatprep.subr.mxu0 %v2453
  %v2455 = vand.u32 %v31, 4294901760
  %v2456 = vsub.f32 %v31, %v2455
  %v2457 = vand.u32 %v2456, 4294901760
  %2458 = vmatpush1.msra.mxu0 %v2457
  %v2459 = vand.u32 %v40, 4294901760
  %v2460 = vsub.f32 %v40, %v2459
  %v2461 = vand.u32 %v2460, 4294901760
  %2462 = vmatprep.subr.mxu0 %v2461
  %v2463 = vand.u32 %v39, 4294901760
  %v2464 = vsub.f32 %v39, %v2463
  %v2465 = vand.u32 %v2464, 4294901760
  %2466 = vmatpush1.msra.mxu0 %v2465
  %v2467 = vand.u32 %v48, 4294901760
  %v2468 = vsub.f32 %v48, %v2467
  %v2469 = vand.u32 %v2468, 4294901760
  %2470 = vmatprep.subr.mxu0 %v2469
  %v2471 = vand.u32 %v47, 4294901760
  %v2472 = vsub.f32 %v47, %v2471
  %v2473 = vand.u32 %v2472, 4294901760
  %2474 = vmatpush1.msra.mxu0 %v2473
  %v2475 = vand.u32 %v56, 4294901760
  %v2476 = vsub.f32 %v56, %v2475
  %v2477 = vand.u32 %v2476, 4294901760
  %2478 = vmatprep.subr.mxu0 %v2477
  %v2479 = vand.u32 %v55, 4294901760
  %v2480 = vsub.f32 %v55, %v2479
  %v2481 = vand.u32 %v2480, 4294901760
  %2482 = vmatpush1.msra.mxu0 %v2481
  %v2483 = vand.u32 %v64, 4294901760
  %v2484 = vsub.f32 %v64, %v2483
  %v2485 = vand.u32 %v2484, 4294901760
  %2486 = vmatprep.subr.mxu0 %v2485
  %v2487 = vand.u32 %v63, 4294901760
  %v2488 = vsub.f32 %v63, %v2487
  %v2489 = vand.u32 %v2488, 4294901760
  %2490 = vmatpush1.msra.mxu0 %v2489
  %v2491 = vand.u32 %v72, 4294901760
  %v2492 = vsub.f32 %v72, %v2491
  %v2493 = vand.u32 %v2492, 4294901760
  %2494 = vmatprep.subr.mxu0 %v2493
  %v2495 = vand.u32 %v71, 4294901760
  %v2496 = vsub.f32 %v71, %v2495
  %v2497 = vand.u32 %v2496, 4294901760
  %2498 = vmatpush1.msra.mxu0 %v2497
  %v2499 = vand.u32 %v80, 4294901760
  %v2500 = vsub.f32 %v80, %v2499
  %v2501 = vand.u32 %v2500, 4294901760
  %2502 = vmatprep.subr.mxu0 %v2501
  %v2503 = vand.u32 %v79, 4294901760
  %v2504 = vsub.f32 %v79, %v2503
  %v2505 = vand.u32 %v2504, 4294901760
  %2506 = vmatpush1.msra.mxu0 %v2505
  %v2507 = vand.u32 %v88, 4294901760
  %v2508 = vsub.f32 %v88, %v2507
  %v2509 = vand.u32 %v2508, 4294901760
  %2510 = vmatprep.subr.mxu0 %v2509
  %v2511 = vand.u32 %v87, 4294901760
  %v2512 = vsub.f32 %v87, %v2511
  %v2513 = vand.u32 %v2512, 4294901760
  %2514 = vmatpush1.msra.mxu0 %v2513
  %v2515 = vand.u32 %v96, 4294901760
  %v2516 = vsub.f32 %v96, %v2515
  %v2517 = vand.u32 %v2516, 4294901760
  %2518 = vmatprep.subr.mxu0 %v2517
  %v2519 = vand.u32 %v95, 4294901760
  %v2520 = vsub.f32 %v95, %v2519
  %v2521 = vand.u32 %v2520, 4294901760
  %2522 = vmatpush1.msra.mxu0 %v2521
  %v2523 = vand.u32 %v104, 4294901760
  %v2524 = vsub.f32 %v104, %v2523
  %v2525 = vand.u32 %v2524, 4294901760
  %2526 = vmatprep.subr.mxu0 %v2525
  %v2527 = vand.u32 %v103, 4294901760
  %v2528 = vsub.f32 %v103, %v2527
  %v2529 = vand.u32 %v2528, 4294901760
  %2530 = vmatpush1.msra.mxu0 %v2529
  %v2531 = vand.u32 %v112, 4294901760
  %v2532 = vsub.f32 %v112, %v2531
  %v2533 = vand.u32 %v2532, 4294901760
  %2534 = vmatprep.subr.mxu0 %v2533
  %v2535 = vand.u32 %v111, 4294901760
  %v2536 = vsub.f32 %v111, %v2535
  %v2537 = vand.u32 %v2536, 4294901760
  %2538 = vmatpush1.msra.mxu0 %v2537
  %v2539 = vand.u32 %v120, 4294901760
  %v2540 = vsub.f32 %v120, %v2539
  %v2541 = vand.u32 %v2540, 4294901760
  %2542 = vmatprep.subr.mxu0 %v2541
  %v2543 = vand.u32 %v119, 4294901760
  %v2544 = vsub.f32 %v119, %v2543
  %v2545 = vand.u32 %v2544, 4294901760
  %2546 = vmatpush1.msra.mxu0 %v2545
  %v2547 = vand.u32 %v128, 4294901760
  %v2548 = vsub.f32 %v128, %v2547
  %v2549 = vand.u32 %v2548, 4294901760
  %2550 = vmatprep.subr.mxu0 %v2549
  %v2551 = vand.u32 %v127, 4294901760
  %v2552 = vsub.f32 %v127, %v2551
  %v2553 = vand.u32 %v2552, 4294901760
  %2554 = vmatpush1.msra.mxu0 %v2553
  %v2555 = vand.u32 %v136, 4294901760
  %v2556 = vsub.f32 %v136, %v2555
  %v2557 = vand.u32 %v2556, 4294901760
  %2558 = vmatprep.subr.mxu0 %v2557
  %v2559 = vand.u32 %v135, 4294901760
  %v2560 = vsub.f32 %v135, %v2559
  %v2561 = vand.u32 %v2560, 4294901760
  %2562 = vmatpush1.msra.mxu0 %v2561
  %v2563 = vand.u32 %v144, 4294901760
  %v2564 = vsub.f32 %v144, %v2563
  %v2565 = vand.u32 %v2564, 4294901760
  %2566 = vmatprep.subr.mxu0 %v2565
  %v2567 = vand.u32 %v143, 4294901760
  %v2568 = vsub.f32 %v143, %v2567
  %v2569 = vand.u32 %v2568, 4294901760
  %2570 = vmatpush1.msra.mxu0 %v2569
  %v2571 = vand.u32 %v152, 4294901760
  %v2572 = vsub.f32 %v152, %v2571
  %v2573 = vand.u32 %v2572, 4294901760
  %2574 = vmatprep.subr.mxu0 %v2573
  %v2575 = vand.u32 %v151, 4294901760
  %v2576 = vsub.f32 %v151, %v2575
  %v2577 = vand.u32 %v2576, 4294901760
  %2578 = vmatpush1.msra.mxu0 %v2577
  %v2579 = vand.u32 %v160, 4294901760
  %v2580 = vsub.f32 %v160, %v2579
  %v2581 = vand.u32 %v2580, 4294901760
  %2582 = vmatprep.subr.mxu0 %v2581
  %v2583 = vand.u32 %v159, 4294901760
  %v2584 = vsub.f32 %v159, %v2583
  %v2585 = vand.u32 %v2584, 4294901760
  %2586 = vmatpush1.msra.mxu0 %v2585
  %v2587 = vand.u32 %v168, 4294901760
  %v2588 = vsub.f32 %v168, %v2587
  %v2589 = vand.u32 %v2588, 4294901760
  %2590 = vmatprep.subr.mxu0 %v2589
  %v2591 = vand.u32 %v167, 4294901760
  %v2592 = vsub.f32 %v167, %v2591
  %v2593 = vand.u32 %v2592, 4294901760
  %2594 = vmatpush1.msra.mxu0 %v2593
  %v2595 = vand.u32 %v176, 4294901760
  %v2596 = vsub.f32 %v176, %v2595
  %v2597 = vand.u32 %v2596, 4294901760
  %2598 = vmatprep.subr.mxu0 %v2597
  %v2599 = vand.u32 %v175, 4294901760
  %v2600 = vsub.f32 %v175, %v2599
  %v2601 = vand.u32 %v2600, 4294901760
  %2602 = vmatpush1.msra.mxu0 %v2601
  %v2603 = vand.u32 %v184, 4294901760
  %v2604 = vsub.f32 %v184, %v2603
  %v2605 = vand.u32 %v2604, 4294901760
  %2606 = vmatprep.subr.mxu0 %v2605
  %v2607 = vand.u32 %v183, 4294901760
  %v2608 = vsub.f32 %v183, %v2607
  %v2609 = vand.u32 %v2608, 4294901760
  %2610 = vmatpush1.msra.mxu0 %v2609
  %v2611 = vand.u32 %v192, 4294901760
  %v2612 = vsub.f32 %v192, %v2611
  %v2613 = vand.u32 %v2612, 4294901760
  %2614 = vmatprep.subr.mxu0 %v2613
  %v2615 = vand.u32 %v191, 4294901760
  %v2616 = vsub.f32 %v191, %v2615
  %v2617 = vand.u32 %v2616, 4294901760
  %2618 = vmatpush1.msra.mxu0 %v2617
  %v2619 = vand.u32 %v200, 4294901760
  %v2620 = vsub.f32 %v200, %v2619
  %v2621 = vand.u32 %v2620, 4294901760
  %2622 = vmatprep.subr.mxu0 %v2621
  %v2623 = vand.u32 %v199, 4294901760
  %v2624 = vsub.f32 %v199, %v2623
  %v2625 = vand.u32 %v2624, 4294901760
  %2626 = vmatpush1.msra.mxu0 %v2625
  %v2627 = vand.u32 %v208, 4294901760
  %v2628 = vsub.f32 %v208, %v2627
  %v2629 = vand.u32 %v2628, 4294901760
  %2630 = vmatprep.subr.mxu0 %v2629
  %v2631 = vand.u32 %v207, 4294901760
  %v2632 = vsub.f32 %v207, %v2631
  %v2633 = vand.u32 %v2632, 4294901760
  %2634 = vmatpush1.msra.mxu0 %v2633
  %v2635 = vand.u32 %v216, 4294901760
  %v2636 = vsub.f32 %v216, %v2635
  %v2637 = vand.u32 %v2636, 4294901760
  %2638 = vmatprep.subr.mxu0 %v2637
  %v2639 = vand.u32 %v215, 4294901760
  %v2640 = vsub.f32 %v215, %v2639
  %v2641 = vand.u32 %v2640, 4294901760
  %2642 = vmatpush1.msra.mxu0 %v2641
  %v2643 = vand.u32 %v224, 4294901760
  %v2644 = vsub.f32 %v224, %v2643
  %v2645 = vand.u32 %v2644, 4294901760
  %2646 = vmatprep.subr.mxu0 %v2645
  %v2647 = vand.u32 %v223, 4294901760
  %v2648 = vsub.f32 %v223, %v2647
  %v2649 = vand.u32 %v2648, 4294901760
  %2650 = vmatpush1.msra.mxu0 %v2649
  %v2651 = vand.u32 %v232, 4294901760
  %v2652 = vsub.f32 %v232, %v2651
  %v2653 = vand.u32 %v2652, 4294901760
  %2654 = vmatprep.subr.mxu0 %v2653
  %v2655 = vand.u32 %v231, 4294901760
  %v2656 = vsub.f32 %v231, %v2655
  %v2657 = vand.u32 %v2656, 4294901760
  %2658 = vmatpush1.msra.mxu0 %v2657
  %v2659 = vand.u32 %v240, 4294901760
  %v2660 = vsub.f32 %v240, %v2659
  %v2661 = vand.u32 %v2660, 4294901760
  %2662 = vmatprep.subr.mxu0 %v2661
  %v2663 = vand.u32 %v239, 4294901760
  %v2664 = vsub.f32 %v239, %v2663
  %v2665 = vand.u32 %v2664, 4294901760
  %2666 = vmatpush1.msra.mxu0 %v2665
  %v2667 = vand.u32 %v248, 4294901760
  %v2668 = vsub.f32 %v248, %v2667
  %v2669 = vand.u32 %v2668, 4294901760
  %2670 = vmatprep.subr.mxu0 %v2669
  %v2671 = vand.u32 %v247, 4294901760
  %v2672 = vsub.f32 %v247, %v2671
  %v2673 = vand.u32 %v2672, 4294901760
  %2674 = vmatpush1.msra.mxu0 %v2673
  %v2675 = vand.u32 %v256, 4294901760
  %v2676 = vsub.f32 %v256, %v2675
  %v2677 = vand.u32 %v2676, 4294901760
  %2678 = vmatprep.subr.mxu0 %v2677
  %v2679 = vand.u32 %v255, 4294901760
  %v2680 = vsub.f32 %v255, %v2679
  %v2681 = vand.u32 %v2680, 4294901760
  %2682 = vmatpush1.msra.mxu0 %v2681
  %v2683 = vand.u32 %v264, 4294901760
  %v2684 = vsub.f32 %v264, %v2683
  %v2685 = vand.u32 %v2684, 4294901760
  %2686 = vmatprep.subr.mxu0 %v2685
  %v2687 = vand.u32 %v263, 4294901760
  %v2688 = vsub.f32 %v263, %v2687
  %v2689 = vand.u32 %v2688, 4294901760
  %2690 = vmatpush1.msra.mxu0 %v2689
  %v2691 = vand.u32 %v12, 4294901760
  %2692 = vmatprep.mubr.f32.mxu0 %v2691
  %v2693 = vand.u32 %v11, 4294901760
  %2694 = vmatmul.mubr.f32.gmra.mrb[0].mxu0 %v2693
  %v2695 = vpop.f32.mrb[0].mxu0
  %v2696 = vadd.f32 %v2431, %v2695
  %v2697 = vpop.f32.mrb[0].mxu0
  %v2698 = vadd.f32 %v2433, %v2697
  %2699 = vdwg.mxu0
  %v2700 = vand.u32 %v16, 4294901760
  %2701 = vmatprep.subr.mxu0 %v2700
  %v2702 = vand.u32 %v15, 4294901760
  %2703 = vmatpush1.msra.mxu0 %v2702
  %v2704 = vand.u32 %v24, 4294901760
  %2705 = vmatprep.subr.mxu0 %v2704
  %v2706 = vand.u32 %v23, 4294901760
  %2707 = vmatpush1.msra.mxu0 %v2706
  %v2708 = vand.u32 %v32, 4294901760
  %2709 = vmatprep.subr.mxu0 %v2708
  %v2710 = vand.u32 %v31, 4294901760
  %2711 = vmatpush1.msra.mxu0 %v2710
  %v2712 = vand.u32 %v40, 4294901760
  %2713 = vmatprep.subr.mxu0 %v2712
  %v2714 = vand.u32 %v39, 4294901760
  %2715 = vmatpush1.msra.mxu0 %v2714
  %v2716 = vand.u32 %v48, 4294901760
  %2717 = vmatprep.subr.mxu0 %v2716
  %v2718 = vand.u32 %v47, 4294901760
  %2719 = vmatpush1.msra.mxu0 %v2718
  %v2720 = vand.u32 %v56, 4294901760
  %2721 = vmatprep.subr.mxu0 %v2720
  %v2722 = vand.u32 %v55, 4294901760
  %2723 = vmatpush1.msra.mxu0 %v2722
  %v2724 = vand.u32 %v64, 4294901760
  %2725 = vmatprep.subr.mxu0 %v2724
  %v2726 = vand.u32 %v63, 4294901760
  %2727 = vmatpush1.msra.mxu0 %v2726
  %v2728 = vand.u32 %v72, 4294901760
  %2729 = vmatprep.subr.mxu0 %v2728
  %v2730 = vand.u32 %v71, 4294901760
  %2731 = vmatpush1.msra.mxu0 %v2730
  %v2732 = vand.u32 %v80, 4294901760
  %2733 = vmatprep.subr.mxu0 %v2732
  %v2734 = vand.u32 %v79, 4294901760
  %2735 = vmatpush1.msra.mxu0 %v2734
  %v2736 = vand.u32 %v88, 4294901760
  %2737 = vmatprep.subr.mxu0 %v2736
  %v2738 = vand.u32 %v87, 4294901760
  %2739 = vmatpush1.msra.mxu0 %v2738
  %v2740 = vand.u32 %v96, 4294901760
  %2741 = vmatprep.subr.mxu0 %v2740
  %v2742 = vand.u32 %v95, 4294901760
  %2743 = vmatpush1.msra.mxu0 %v2742
  %v2744 = vand.u32 %v104, 4294901760
  %2745 = vmatprep.subr.mxu0 %v2744
  %v2746 = vand.u32 %v103, 4294901760
  %2747 = vmatpush1.msra.mxu0 %v2746
  %v2748 = vand.u32 %v112, 4294901760
  %2749 = vmatprep.subr.mxu0 %v2748
  %v2750 = vand.u32 %v111, 4294901760
  %2751 = vmatpush1.msra.mxu0 %v2750
  %v2752 = vand.u32 %v120, 4294901760
  %2753 = vmatprep.subr.mxu0 %v2752
  %v2754 = vand.u32 %v119, 4294901760
  %2755 = vmatpush1.msra.mxu0 %v2754
  %v2756 = vand.u32 %v128, 4294901760
  %2757 = vmatprep.subr.mxu0 %v2756
  %v2758 = vand.u32 %v127, 4294901760
  %2759 = vmatpush1.msra.mxu0 %v2758
  %v2760 = vand.u32 %v136, 4294901760
  %2761 = vmatprep.subr.mxu0 %v2760
  %v2762 = vand.u32 %v135, 4294901760
  %2763 = vmatpush1.msra.mxu0 %v2762
  %v2764 = vand.u32 %v144, 4294901760
  %2765 = vmatprep.subr.mxu0 %v2764
  %v2766 = vand.u32 %v143, 4294901760
  %2767 = vmatpush1.msra.mxu0 %v2766
  %v2768 = vand.u32 %v152, 4294901760
  %2769 = vmatprep.subr.mxu0 %v2768
  %v2770 = vand.u32 %v151, 4294901760
  %2771 = vmatpush1.msra.mxu0 %v2770
  %v2772 = vand.u32 %v160, 4294901760
  %2773 = vmatprep.subr.mxu0 %v2772
  %v2774 = vand.u32 %v159, 4294901760
  %2775 = vmatpush1.msra.mxu0 %v2774
  %v2776 = vand.u32 %v168, 4294901760
  %2777 = vmatprep.subr.mxu0 %v2776
  %v2778 = vand.u32 %v167, 4294901760
  %2779 = vmatpush1.msra.mxu0 %v2778
  %v2780 = vand.u32 %v176, 4294901760
  %2781 = vmatprep.subr.mxu0 %v2780
  %v2782 = vand.u32 %v175, 4294901760
  %2783 = vmatpush1.msra.mxu0 %v2782
  %v2784 = vand.u32 %v184, 4294901760
  %2785 = vmatprep.subr.mxu0 %v2784
  %v2786 = vand.u32 %v183, 4294901760
  %2787 = vmatpush1.msra.mxu0 %v2786
  %v2788 = vand.u32 %v192, 4294901760
  %2789 = vmatprep.subr.mxu0 %v2788
  %v2790 = vand.u32 %v191, 4294901760
  %2791 = vmatpush1.msra.mxu0 %v2790
  %v2792 = vand.u32 %v200, 4294901760
  %2793 = vmatprep.subr.mxu0 %v2792
  %v2794 = vand.u32 %v199, 4294901760
  %2795 = vmatpush1.msra.mxu0 %v2794
  %v2796 = vand.u32 %v208, 4294901760
  %2797 = vmatprep.subr.mxu0 %v2796
  %v2798 = vand.u32 %v207, 4294901760
  %2799 = vmatpush1.msra.mxu0 %v2798
  %v2800 = vand.u32 %v216, 4294901760
  %2801 = vmatprep.subr.mxu0 %v2800
  %v2802 = vand.u32 %v215, 4294901760
  %2803 = vmatpush1.msra.mxu0 %v2802
  %v2804 = vand.u32 %v224, 4294901760
  %2805 = vmatprep.subr.mxu0 %v2804
  %v2806 = vand.u32 %v223, 4294901760
  %2807 = vmatpush1.msra.mxu0 %v2806
  %v2808 = vand.u32 %v232, 4294901760
  %2809 = vmatprep.subr.mxu0 %v2808
  %v2810 = vand.u32 %v231, 4294901760
  %2811 = vmatpush1.msra.mxu0 %v2810
  %v2812 = vand.u32 %v240, 4294901760
  %2813 = vmatprep.subr.mxu0 %v2812
  %v2814 = vand.u32 %v239, 4294901760
  %2815 = vmatpush1.msra.mxu0 %v2814
  %v2816 = vand.u32 %v248, 4294901760
  %2817 = vmatprep.subr.mxu0 %v2816
  %v2818 = vand.u32 %v247, 4294901760
  %2819 = vmatpush1.msra.mxu0 %v2818
  %v2820 = vand.u32 %v256, 4294901760
  %2821 = vmatprep.subr.mxu0 %v2820
  %v2822 = vand.u32 %v255, 4294901760
  %2823 = vmatpush1.msra.mxu0 %v2822
  %v2824 = vand.u32 %v264, 4294901760
  %2825 = vmatprep.subr.mxu0 %v2824
  %v2826 = vand.u32 %v263, 4294901760
  %2827 = vmatpush1.msra.mxu0 %v2826
  %v2828 = vand.u32 %v12, 4294901760
  %2829 = vmatprep.mubr.f32.mxu0 %v2828
  %v2830 = vand.u32 %v11, 4294901760
  %2831 = vmatmul.mubr.f32.gmra.mrb[0].mxu0 %v2830
  %v2832 = vpop.f32.mrb[0].mxu0
  %v2833 = vadd.f32 %v2696, %v2832
  %v2834 = vpop.f32.mrb[0].mxu0
  %v2835 = vadd.f32 %v2698, %v2834
  %2836 = vdwg.mxu0
  %v2837 = vand.u32 %v18, 4294901760
  %2838 = vmatprep.subr.mxu0 %v2837
  %v2839 = vand.u32 %v17, 4294901760
  %2840 = vmatpush1.msra.mxu0 %v2839
  %v2841 = vand.u32 %v26, 4294901760
  %2842 = vmatprep.subr.mxu0 %v2841
  %v2843 = vand.u32 %v25, 4294901760
  %2844 = vmatpush1.msra.mxu0 %v2843
  %v2845 = vand.u32 %v34, 4294901760
  %2846 = vmatprep.subr.mxu0 %v2845
  %v2847 = vand.u32 %v33, 4294901760
  %2848 = vmatpush1.msra.mxu0 %v2847
  %v2849 = vand.u32 %v42, 4294901760
  %2850 = vmatprep.subr.mxu0 %v2849
  %v2851 = vand.u32 %v41, 4294901760
  %2852 = vmatpush1.msra.mxu0 %v2851
  %v2853 = vand.u32 %v50, 4294901760
  %2854 = vmatprep.subr.mxu0 %v2853
  %v2855 = vand.u32 %v49, 4294901760
  %2856 = vmatpush1.msra.mxu0 %v2855
  %v2857 = vand.u32 %v58, 4294901760
  %2858 = vmatprep.subr.mxu0 %v2857
  %v2859 = vand.u32 %v57, 4294901760
  %2860 = vmatpush1.msra.mxu0 %v2859
  %v2861 = vand.u32 %v66, 4294901760
  %2862 = vmatprep.subr.mxu0 %v2861
  %v2863 = vand.u32 %v65, 4294901760
  %2864 = vmatpush1.msra.mxu0 %v2863
  %v2865 = vand.u32 %v74, 4294901760
  %2866 = vmatprep.subr.mxu0 %v2865
  %v2867 = vand.u32 %v73, 4294901760
  %2868 = vmatpush1.msra.mxu0 %v2867
  %v2869 = vand.u32 %v82, 4294901760
  %2870 = vmatprep.subr.mxu0 %v2869
  %v2871 = vand.u32 %v81, 4294901760
  %2872 = vmatpush1.msra.mxu0 %v2871
  %v2873 = vand.u32 %v90, 4294901760
  %2874 = vmatprep.subr.mxu0 %v2873
  %v2875 = vand.u32 %v89, 4294901760
  %2876 = vmatpush1.msra.mxu0 %v2875
  %v2877 = vand.u32 %v98, 4294901760
  %2878 = vmatprep.subr.mxu0 %v2877
  %v2879 = vand.u32 %v97, 4294901760
  %2880 = vmatpush1.msra.mxu0 %v2879
  %v2881 = vand.u32 %v106, 4294901760
  %2882 = vmatprep.subr.mxu0 %v2881
  %v2883 = vand.u32 %v105, 4294901760
  %2884 = vmatpush1.msra.mxu0 %v2883
  %v2885 = vand.u32 %v114, 4294901760
  %2886 = vmatprep.subr.mxu0 %v2885
  %v2887 = vand.u32 %v113, 4294901760
  %2888 = vmatpush1.msra.mxu0 %v2887
  %v2889 = vand.u32 %v122, 4294901760
  %2890 = vmatprep.subr.mxu0 %v2889
  %v2891 = vand.u32 %v121, 4294901760
  %2892 = vmatpush1.msra.mxu0 %v2891
  %v2893 = vand.u32 %v130, 4294901760
  %2894 = vmatprep.subr.mxu0 %v2893
  %v2895 = vand.u32 %v129, 4294901760
  %2896 = vmatpush1.msra.mxu0 %v2895
  %v2897 = vand.u32 %v138, 4294901760
  %2898 = vmatprep.subr.mxu0 %v2897
  %v2899 = vand.u32 %v137, 4294901760
  %2900 = vmatpush1.msra.mxu0 %v2899
  %v2901 = vand.u32 %v146, 4294901760
  %2902 = vmatprep.subr.mxu0 %v2901
  %v2903 = vand.u32 %v145, 4294901760
  %2904 = vmatpush1.msra.mxu0 %v2903
  %v2905 = vand.u32 %v154, 4294901760
  %2906 = vmatprep.subr.mxu0 %v2905
  %v2907 = vand.u32 %v153, 4294901760
  %2908 = vmatpush1.msra.mxu0 %v2907
  %v2909 = vand.u32 %v162, 4294901760
  %2910 = vmatprep.subr.mxu0 %v2909
  %v2911 = vand.u32 %v161, 4294901760
  %2912 = vmatpush1.msra.mxu0 %v2911
  %v2913 = vand.u32 %v170, 4294901760
  %2914 = vmatprep.subr.mxu0 %v2913
  %v2915 = vand.u32 %v169, 4294901760
  %2916 = vmatpush1.msra.mxu0 %v2915
  %v2917 = vand.u32 %v178, 4294901760
  %2918 = vmatprep.subr.mxu0 %v2917
  %v2919 = vand.u32 %v177, 4294901760
  %2920 = vmatpush1.msra.mxu0 %v2919
  %v2921 = vand.u32 %v186, 4294901760
  %2922 = vmatprep.subr.mxu0 %v2921
  %v2923 = vand.u32 %v185, 4294901760
  %2924 = vmatpush1.msra.mxu0 %v2923
  %v2925 = vand.u32 %v194, 4294901760
  %2926 = vmatprep.subr.mxu0 %v2925
  %v2927 = vand.u32 %v193, 4294901760
  %2928 = vmatpush1.msra.mxu0 %v2927
  %v2929 = vand.u32 %v202, 4294901760
  %2930 = vmatprep.subr.mxu0 %v2929
  %v2931 = vand.u32 %v201, 4294901760
  %2932 = vmatpush1.msra.mxu0 %v2931
  %v2933 = vand.u32 %v210, 4294901760
  %2934 = vmatprep.subr.mxu0 %v2933
  %v2935 = vand.u32 %v209, 4294901760
  %2936 = vmatpush1.msra.mxu0 %v2935
  %v2937 = vand.u32 %v218, 4294901760
  %2938 = vmatprep.subr.mxu0 %v2937
  %v2939 = vand.u32 %v217, 4294901760
  %2940 = vmatpush1.msra.mxu0 %v2939
  %v2941 = vand.u32 %v226, 4294901760
  %2942 = vmatprep.subr.mxu0 %v2941
  %v2943 = vand.u32 %v225, 4294901760
  %2944 = vmatpush1.msra.mxu0 %v2943
  %v2945 = vand.u32 %v234, 4294901760
  %2946 = vmatprep.subr.mxu0 %v2945
  %v2947 = vand.u32 %v233, 4294901760
  %2948 = vmatpush1.msra.mxu0 %v2947
  %v2949 = vand.u32 %v242, 4294901760
  %2950 = vmatprep.subr.mxu0 %v2949
  %v2951 = vand.u32 %v241, 4294901760
  %2952 = vmatpush1.msra.mxu0 %v2951
  %v2953 = vand.u32 %v250, 4294901760
  %2954 = vmatprep.subr.mxu0 %v2953
  %v2955 = vand.u32 %v249, 4294901760
  %2956 = vmatpush1.msra.mxu0 %v2955
  %v2957 = vand.u32 %v258, 4294901760
  %2958 = vmatprep.subr.mxu0 %v2957
  %v2959 = vand.u32 %v257, 4294901760
  %2960 = vmatpush1.msra.mxu0 %v2959
  %v2961 = vand.u32 %v266, 4294901760
  %2962 = vmatprep.subr.mxu0 %v2961
  %v2963 = vand.u32 %v265, 4294901760
  %2964 = vmatpush1.msra.mxu0 %v2963
  %v2965 = vand.u32 %v12, 4294901760
  %v2966 = vsub.f32 %v12, %v2965
  %v2967 = vand.u32 %v2966, 4294901760
  %v2968 = vsub.f32 %v2966, %v2967
  %v2969 = vand.u32 %v2968, 4294901760
  %2970 = vmatprep.mubr.f32.mxu0 %v2969
  %v2971 = vand.u32 %v11, 4294901760
  %v2972 = vsub.f32 %v11, %v2971
  %v2973 = vand.u32 %v2972, 4294901760
  %v2974 = vsub.f32 %v2972, %v2973
  %v2975 = vand.u32 %v2974, 4294901760
  %2976 = vmatmul.mubr.f32.gmra.mrb[0].mxu0 %v2975
  %v2977 = vpop.f32.mrb[0].mxu0
  %v2978 = vadd.f32 0.0, %v2977
  %v2979 = vpop.f32.mrb[0].mxu0
  %v2980 = vadd.f32 0.0, %v2979
  %2981 = vdwg.mxu0
  %v2982 = vand.u32 %v18, 4294901760
  %v2983 = vsub.f32 %v18, %v2982
  %v2984 = vand.u32 %v2983, 4294901760
  %v2985 = vsub.f32 %v2983, %v2984
  %v2986 = vand.u32 %v2985, 4294901760
  %2987 = vmatprep.subr.mxu0 %v2986
  %v2988 = vand.u32 %v17, 4294901760
  %v2989 = vsub.f32 %v17, %v2988
  %v2990 = vand.u32 %v2989, 4294901760
  %v2991 = vsub.f32 %v2989, %v2990
  %v2992 = vand.u32 %v2991, 4294901760
  %2993 = vmatpush1.msra.mxu0 %v2992
  %v2994 = vand.u32 %v26, 4294901760
  %v2995 = vsub.f32 %v26, %v2994
  %v2996 = vand.u32 %v2995, 4294901760
  %v2997 = vsub.f32 %v2995, %v2996
  %v2998 = vand.u32 %v2997, 4294901760
  %2999 = vmatprep.subr.mxu0 %v2998
  %v3000 = vand.u32 %v25, 4294901760
  %v3001 = vsub.f32 %v25, %v3000
  %v3002 = vand.u32 %v3001, 4294901760
  %v3003 = vsub.f32 %v3001, %v3002
  %v3004 = vand.u32 %v3003, 4294901760
  %3005 = vmatpush1.msra.mxu0 %v3004
  %v3006 = vand.u32 %v34, 4294901760
  %v3007 = vsub.f32 %v34, %v3006
  %v3008 = vand.u32 %v3007, 4294901760
  %v3009 = vsub.f32 %v3007, %v3008
  %v3010 = vand.u32 %v3009, 4294901760
  %3011 = vmatprep.subr.mxu0 %v3010
  %v3012 = vand.u32 %v33, 4294901760
  %v3013 = vsub.f32 %v33, %v3012
  %v3014 = vand.u32 %v3013, 4294901760
  %v3015 = vsub.f32 %v3013, %v3014
  %v3016 = vand.u32 %v3015, 4294901760
  %3017 = vmatpush1.msra.mxu0 %v3016
  %v3018 = vand.u32 %v42, 4294901760
  %v3019 = vsub.f32 %v42, %v3018
  %v3020 = vand.u32 %v3019, 4294901760
  %v3021 = vsub.f32 %v3019, %v3020
  %v3022 = vand.u32 %v3021, 4294901760
  %3023 = vmatprep.subr.mxu0 %v3022
  %v3024 = vand.u32 %v41, 4294901760
  %v3025 = vsub.f32 %v41, %v3024
  %v3026 = vand.u32 %v3025, 4294901760
  %v3027 = vsub.f32 %v3025, %v3026
  %v3028 = vand.u32 %v3027, 4294901760
  %3029 = vmatpush1.msra.mxu0 %v3028
  %v3030 = vand.u32 %v50, 4294901760
  %v3031 = vsub.f32 %v50, %v3030
  %v3032 = vand.u32 %v3031, 4294901760
  %v3033 = vsub.f32 %v3031, %v3032
  %v3034 = vand.u32 %v3033, 4294901760
  %3035 = vmatprep.subr.mxu0 %v3034
  %v3036 = vand.u32 %v49, 4294901760
  %v3037 = vsub.f32 %v49, %v3036
  %v3038 = vand.u32 %v3037, 4294901760
  %v3039 = vsub.f32 %v3037, %v3038
  %v3040 = vand.u32 %v3039, 4294901760
  %3041 = vmatpush1.msra.mxu0 %v3040
  %v3042 = vand.u32 %v58, 4294901760
  %v3043 = vsub.f32 %v58, %v3042
  %v3044 = vand.u32 %v3043, 4294901760
  %v3045 = vsub.f32 %v3043, %v3044
  %v3046 = vand.u32 %v3045, 4294901760
  %3047 = vmatprep.subr.mxu0 %v3046
  %v3048 = vand.u32 %v57, 4294901760
  %v3049 = vsub.f32 %v57, %v3048
  %v3050 = vand.u32 %v3049, 4294901760
  %v3051 = vsub.f32 %v3049, %v3050
  %v3052 = vand.u32 %v3051, 4294901760
  %3053 = vmatpush1.msra.mxu0 %v3052
  %v3054 = vand.u32 %v66, 4294901760
  %v3055 = vsub.f32 %v66, %v3054
  %v3056 = vand.u32 %v3055, 4294901760
  %v3057 = vsub.f32 %v3055, %v3056
  %v3058 = vand.u32 %v3057, 4294901760
  %3059 = vmatprep.subr.mxu0 %v3058
  %v3060 = vand.u32 %v65, 4294901760
  %v3061 = vsub.f32 %v65, %v3060
  %v3062 = vand.u32 %v3061, 4294901760
  %v3063 = vsub.f32 %v3061, %v3062
  %v3064 = vand.u32 %v3063, 4294901760
  %3065 = vmatpush1.msra.mxu0 %v3064
  %v3066 = vand.u32 %v74, 4294901760
  %v3067 = vsub.f32 %v74, %v3066
  %v3068 = vand.u32 %v3067, 4294901760
  %v3069 = vsub.f32 %v3067, %v3068
  %v3070 = vand.u32 %v3069, 4294901760
  %3071 = vmatprep.subr.mxu0 %v3070
  %v3072 = vand.u32 %v73, 4294901760
  %v3073 = vsub.f32 %v73, %v3072
  %v3074 = vand.u32 %v3073, 4294901760
  %v3075 = vsub.f32 %v3073, %v3074
  %v3076 = vand.u32 %v3075, 4294901760
  %3077 = vmatpush1.msra.mxu0 %v3076
  %v3078 = vand.u32 %v82, 4294901760
  %v3079 = vsub.f32 %v82, %v3078
  %v3080 = vand.u32 %v3079, 4294901760
  %v3081 = vsub.f32 %v3079, %v3080
  %v3082 = vand.u32 %v3081, 4294901760
  %3083 = vmatprep.subr.mxu0 %v3082
  %v3084 = vand.u32 %v81, 4294901760
  %v3085 = vsub.f32 %v81, %v3084
  %v3086 = vand.u32 %v3085, 4294901760
  %v3087 = vsub.f32 %v3085, %v3086
  %v3088 = vand.u32 %v3087, 4294901760
  %3089 = vmatpush1.msra.mxu0 %v3088
  %v3090 = vand.u32 %v90, 4294901760
  %v3091 = vsub.f32 %v90, %v3090
  %v3092 = vand.u32 %v3091, 4294901760
  %v3093 = vsub.f32 %v3091, %v3092
  %v3094 = vand.u32 %v3093, 4294901760
  %3095 = vmatprep.subr.mxu0 %v3094
  %v3096 = vand.u32 %v89, 4294901760
  %v3097 = vsub.f32 %v89, %v3096
  %v3098 = vand.u32 %v3097, 4294901760
  %v3099 = vsub.f32 %v3097, %v3098
  %v3100 = vand.u32 %v3099, 4294901760
  %3101 = vmatpush1.msra.mxu0 %v3100
  %v3102 = vand.u32 %v98, 4294901760
  %v3103 = vsub.f32 %v98, %v3102
  %v3104 = vand.u32 %v3103, 4294901760
  %v3105 = vsub.f32 %v3103, %v3104
  %v3106 = vand.u32 %v3105, 4294901760
  %3107 = vmatprep.subr.mxu0 %v3106
  %v3108 = vand.u32 %v97, 4294901760
  %v3109 = vsub.f32 %v97, %v3108
  %v3110 = vand.u32 %v3109, 4294901760
  %v3111 = vsub.f32 %v3109, %v3110
  %v3112 = vand.u32 %v3111, 4294901760
  %3113 = vmatpush1.msra.mxu0 %v3112
  %v3114 = vand.u32 %v106, 4294901760
  %v3115 = vsub.f32 %v106, %v3114
  %v3116 = vand.u32 %v3115, 4294901760
  %v3117 = vsub.f32 %v3115, %v3116
  %v3118 = vand.u32 %v3117, 4294901760
  %3119 = vmatprep.subr.mxu0 %v3118
  %v3120 = vand.u32 %v105, 4294901760
  %v3121 = vsub.f32 %v105, %v3120
  %v3122 = vand.u32 %v3121, 4294901760
  %v3123 = vsub.f32 %v3121, %v3122
  %v3124 = vand.u32 %v3123, 4294901760
  %3125 = vmatpush1.msra.mxu0 %v3124
  %v3126 = vand.u32 %v114, 4294901760
  %v3127 = vsub.f32 %v114, %v3126
  %v3128 = vand.u32 %v3127, 4294901760
  %v3129 = vsub.f32 %v3127, %v3128
  %v3130 = vand.u32 %v3129, 4294901760
  %3131 = vmatprep.subr.mxu0 %v3130
  %v3132 = vand.u32 %v113, 4294901760
  %v3133 = vsub.f32 %v113, %v3132
  %v3134 = vand.u32 %v3133, 4294901760
  %v3135 = vsub.f32 %v3133, %v3134
  %v3136 = vand.u32 %v3135, 4294901760
  %3137 = vmatpush1.msra.mxu0 %v3136
  %v3138 = vand.u32 %v122, 4294901760
  %v3139 = vsub.f32 %v122, %v3138
  %v3140 = vand.u32 %v3139, 4294901760
  %v3141 = vsub.f32 %v3139, %v3140
  %v3142 = vand.u32 %v3141, 4294901760
  %3143 = vmatprep.subr.mxu0 %v3142
  %v3144 = vand.u32 %v121, 4294901760
  %v3145 = vsub.f32 %v121, %v3144
  %v3146 = vand.u32 %v3145, 4294901760
  %v3147 = vsub.f32 %v3145, %v3146
  %v3148 = vand.u32 %v3147, 4294901760
  %3149 = vmatpush1.msra.mxu0 %v3148
  %v3150 = vand.u32 %v130, 4294901760
  %v3151 = vsub.f32 %v130, %v3150
  %v3152 = vand.u32 %v3151, 4294901760
  %v3153 = vsub.f32 %v3151, %v3152
  %v3154 = vand.u32 %v3153, 4294901760
  %3155 = vmatprep.subr.mxu0 %v3154
  %v3156 = vand.u32 %v129, 4294901760
  %v3157 = vsub.f32 %v129, %v3156
  %v3158 = vand.u32 %v3157, 4294901760
  %v3159 = vsub.f32 %v3157, %v3158
  %v3160 = vand.u32 %v3159, 4294901760
  %3161 = vmatpush1.msra.mxu0 %v3160
  %v3162 = vand.u32 %v138, 4294901760
  %v3163 = vsub.f32 %v138, %v3162
  %v3164 = vand.u32 %v3163, 4294901760
  %v3165 = vsub.f32 %v3163, %v3164
  %v3166 = vand.u32 %v3165, 4294901760
  %3167 = vmatprep.subr.mxu0 %v3166
  %v3168 = vand.u32 %v137, 4294901760
  %v3169 = vsub.f32 %v137, %v3168
  %v3170 = vand.u32 %v3169, 4294901760
  %v3171 = vsub.f32 %v3169, %v3170
  %v3172 = vand.u32 %v3171, 4294901760
  %3173 = vmatpush1.msra.mxu0 %v3172
  %v3174 = vand.u32 %v146, 4294901760
  %v3175 = vsub.f32 %v146, %v3174
  %v3176 = vand.u32 %v3175, 4294901760
  %v3177 = vsub.f32 %v3175, %v3176
  %v3178 = vand.u32 %v3177, 4294901760
  %3179 = vmatprep.subr.mxu0 %v3178
  %v3180 = vand.u32 %v145, 4294901760
  %v3181 = vsub.f32 %v145, %v3180
  %v3182 = vand.u32 %v3181, 4294901760
  %v3183 = vsub.f32 %v3181, %v3182
  %v3184 = vand.u32 %v3183, 4294901760
  %3185 = vmatpush1.msra.mxu0 %v3184
  %v3186 = vand.u32 %v154, 4294901760
  %v3187 = vsub.f32 %v154, %v3186
  %v3188 = vand.u32 %v3187, 4294901760
  %v3189 = vsub.f32 %v3187, %v3188
  %v3190 = vand.u32 %v3189, 4294901760
  %3191 = vmatprep.subr.mxu0 %v3190
  %v3192 = vand.u32 %v153, 4294901760
  %v3193 = vsub.f32 %v153, %v3192
  %v3194 = vand.u32 %v3193, 4294901760
  %v3195 = vsub.f32 %v3193, %v3194
  %v3196 = vand.u32 %v3195, 4294901760
  %3197 = vmatpush1.msra.mxu0 %v3196
  %v3198 = vand.u32 %v162, 4294901760
  %v3199 = vsub.f32 %v162, %v3198
  %v3200 = vand.u32 %v3199, 4294901760
  %v3201 = vsub.f32 %v3199, %v3200
  %v3202 = vand.u32 %v3201, 4294901760
  %3203 = vmatprep.subr.mxu0 %v3202
  %v3204 = vand.u32 %v161, 4294901760
  %v3205 = vsub.f32 %v161, %v3204
  %v3206 = vand.u32 %v3205, 4294901760
  %v3207 = vsub.f32 %v3205, %v3206
  %v3208 = vand.u32 %v3207, 4294901760
  %3209 = vmatpush1.msra.mxu0 %v3208
  %v3210 = vand.u32 %v170, 4294901760
  %v3211 = vsub.f32 %v170, %v3210
  %v3212 = vand.u32 %v3211, 4294901760
  %v3213 = vsub.f32 %v3211, %v3212
  %v3214 = vand.u32 %v3213, 4294901760
  %3215 = vmatprep.subr.mxu0 %v3214
  %v3216 = vand.u32 %v169, 4294901760
  %v3217 = vsub.f32 %v169, %v3216
  %v3218 = vand.u32 %v3217, 4294901760
  %v3219 = vsub.f32 %v3217, %v3218
  %v3220 = vand.u32 %v3219, 4294901760
  %3221 = vmatpush1.msra.mxu0 %v3220
  %v3222 = vand.u32 %v178, 4294901760
  %v3223 = vsub.f32 %v178, %v3222
  %v3224 = vand.u32 %v3223, 4294901760
  %v3225 = vsub.f32 %v3223, %v3224
  %v3226 = vand.u32 %v3225, 4294901760
  %3227 = vmatprep.subr.mxu0 %v3226
  %v3228 = vand.u32 %v177, 4294901760
  %v3229 = vsub.f32 %v177, %v3228
  %v3230 = vand.u32 %v3229, 4294901760
  %v3231 = vsub.f32 %v3229, %v3230
  %v3232 = vand.u32 %v3231, 4294901760
  %3233 = vmatpush1.msra.mxu0 %v3232
  %v3234 = vand.u32 %v186, 4294901760
  %v3235 = vsub.f32 %v186, %v3234
  %v3236 = vand.u32 %v3235, 4294901760
  %v3237 = vsub.f32 %v3235, %v3236
  %v3238 = vand.u32 %v3237, 4294901760
  %3239 = vmatprep.subr.mxu0 %v3238
  %v3240 = vand.u32 %v185, 4294901760
  %v3241 = vsub.f32 %v185, %v3240
  %v3242 = vand.u32 %v3241, 4294901760
  %v3243 = vsub.f32 %v3241, %v3242
  %v3244 = vand.u32 %v3243, 4294901760
  %3245 = vmatpush1.msra.mxu0 %v3244
  %v3246 = vand.u32 %v194, 4294901760
  %v3247 = vsub.f32 %v194, %v3246
  %v3248 = vand.u32 %v3247, 4294901760
  %v3249 = vsub.f32 %v3247, %v3248
  %v3250 = vand.u32 %v3249, 4294901760
  %3251 = vmatprep.subr.mxu0 %v3250
  %v3252 = vand.u32 %v193, 4294901760
  %v3253 = vsub.f32 %v193, %v3252
  %v3254 = vand.u32 %v3253, 4294901760
  %v3255 = vsub.f32 %v3253, %v3254
  %v3256 = vand.u32 %v3255, 4294901760
  %3257 = vmatpush1.msra.mxu0 %v3256
  %v3258 = vand.u32 %v202, 4294901760
  %v3259 = vsub.f32 %v202, %v3258
  %v3260 = vand.u32 %v3259, 4294901760
  %v3261 = vsub.f32 %v3259, %v3260
  %v3262 = vand.u32 %v3261, 4294901760
  %3263 = vmatprep.subr.mxu0 %v3262
  %v3264 = vand.u32 %v201, 4294901760
  %v3265 = vsub.f32 %v201, %v3264
  %v3266 = vand.u32 %v3265, 4294901760
  %v3267 = vsub.f32 %v3265, %v3266
  %v3268 = vand.u32 %v3267, 4294901760
  %3269 = vmatpush1.msra.mxu0 %v3268
  %v3270 = vand.u32 %v210, 4294901760
  %v3271 = vsub.f32 %v210, %v3270
  %v3272 = vand.u32 %v3271, 4294901760
  %v3273 = vsub.f32 %v3271, %v3272
  %v3274 = vand.u32 %v3273, 4294901760
  %3275 = vmatprep.subr.mxu0 %v3274
  %v3276 = vand.u32 %v209, 4294901760
  %v3277 = vsub.f32 %v209, %v3276
  %v3278 = vand.u32 %v3277, 4294901760
  %v3279 = vsub.f32 %v3277, %v3278
  %v3280 = vand.u32 %v3279, 4294901760
  %3281 = vmatpush1.msra.mxu0 %v3280
  %v3282 = vand.u32 %v218, 4294901760
  %v3283 = vsub.f32 %v218, %v3282
  %v3284 = vand.u32 %v3283, 4294901760
  %v3285 = vsub.f32 %v3283, %v3284
  %v3286 = vand.u32 %v3285, 4294901760
  %3287 = vmatprep.subr.mxu0 %v3286
  %v3288 = vand.u32 %v217, 4294901760
  %v3289 = vsub.f32 %v217, %v3288
  %v3290 = vand.u32 %v3289, 4294901760
  %v3291 = vsub.f32 %v3289, %v3290
  %v3292 = vand.u32 %v3291, 4294901760
  %3293 = vmatpush1.msra.mxu0 %v3292
  %v3294 = vand.u32 %v226, 4294901760
  %v3295 = vsub.f32 %v226, %v3294
  %v3296 = vand.u32 %v3295, 4294901760
  %v3297 = vsub.f32 %v3295, %v3296
  %v3298 = vand.u32 %v3297, 4294901760
  %3299 = vmatprep.subr.mxu0 %v3298
  %v3300 = vand.u32 %v225, 4294901760
  %v3301 = vsub.f32 %v225, %v3300
  %v3302 = vand.u32 %v3301, 4294901760
  %v3303 = vsub.f32 %v3301, %v3302
  %v3304 = vand.u32 %v3303, 4294901760
  %3305 = vmatpush1.msra.mxu0 %v3304
  %v3306 = vand.u32 %v234, 4294901760
  %v3307 = vsub.f32 %v234, %v3306
  %v3308 = vand.u32 %v3307, 4294901760
  %v3309 = vsub.f32 %v3307, %v3308
  %v3310 = vand.u32 %v3309, 4294901760
  %3311 = vmatprep.subr.mxu0 %v3310
  %v3312 = vand.u32 %v233, 4294901760
  %v3313 = vsub.f32 %v233, %v3312
  %v3314 = vand.u32 %v3313, 4294901760
  %v3315 = vsub.f32 %v3313, %v3314
  %v3316 = vand.u32 %v3315, 4294901760
  %3317 = vmatpush1.msra.mxu0 %v3316
  %v3318 = vand.u32 %v242, 4294901760
  %v3319 = vsub.f32 %v242, %v3318
  %v3320 = vand.u32 %v3319, 4294901760
  %v3321 = vsub.f32 %v3319, %v3320
  %v3322 = vand.u32 %v3321, 4294901760
  %3323 = vmatprep.subr.mxu0 %v3322
  %v3324 = vand.u32 %v241, 4294901760
  %v3325 = vsub.f32 %v241, %v3324
  %v3326 = vand.u32 %v3325, 4294901760
  %v3327 = vsub.f32 %v3325, %v3326
  %v3328 = vand.u32 %v3327, 4294901760
  %3329 = vmatpush1.msra.mxu0 %v3328
  %v3330 = vand.u32 %v250, 4294901760
  %v3331 = vsub.f32 %v250, %v3330
  %v3332 = vand.u32 %v3331, 4294901760
  %v3333 = vsub.f32 %v3331, %v3332
  %v3334 = vand.u32 %v3333, 4294901760
  %3335 = vmatprep.subr.mxu0 %v3334
  %v3336 = vand.u32 %v249, 4294901760
  %v3337 = vsub.f32 %v249, %v3336
  %v3338 = vand.u32 %v3337, 4294901760
  %v3339 = vsub.f32 %v3337, %v3338
  %v3340 = vand.u32 %v3339, 4294901760
  %3341 = vmatpush1.msra.mxu0 %v3340
  %v3342 = vand.u32 %v258, 4294901760
  %v3343 = vsub.f32 %v258, %v3342
  %v3344 = vand.u32 %v3343, 4294901760
  %v3345 = vsub.f32 %v3343, %v3344
  %v3346 = vand.u32 %v3345, 4294901760
  %3347 = vmatprep.subr.mxu0 %v3346
  %v3348 = vand.u32 %v257, 4294901760
  %v3349 = vsub.f32 %v257, %v3348
  %v3350 = vand.u32 %v3349, 4294901760
  %v3351 = vsub.f32 %v3349, %v3350
  %v3352 = vand.u32 %v3351, 4294901760
  %3353 = vmatpush1.msra.mxu0 %v3352
  %v3354 = vand.u32 %v266, 4294901760
  %v3355 = vsub.f32 %v266, %v3354
  %v3356 = vand.u32 %v3355, 4294901760
  %v3357 = vsub.f32 %v3355, %v3356
  %v3358 = vand.u32 %v3357, 4294901760
  %3359 = vmatprep.subr.mxu0 %v3358
  %v3360 = vand.u32 %v265, 4294901760
  %v3361 = vsub.f32 %v265, %v3360
  %v3362 = vand.u32 %v3361, 4294901760
  %v3363 = vsub.f32 %v3361, %v3362
  %v3364 = vand.u32 %v3363, 4294901760
  %3365 = vmatpush1.msra.mxu0 %v3364
  %v3366 = vand.u32 %v12, 4294901760
  %3367 = vmatprep.mubr.f32.mxu0 %v3366
  %v3368 = vand.u32 %v11, 4294901760
  %3369 = vmatmul.mubr.f32.gmra.mrb[0].mxu0 %v3368
  %v3370 = vpop.f32.mrb[0].mxu0
  %v3371 = vadd.f32 %v2978, %v3370
  %v3372 = vpop.f32.mrb[0].mxu0
  %v3373 = vadd.f32 %v2980, %v3372
  %3374 = vdwg.mxu0
  %v3375 = vand.u32 %v18, 4294901760
  %v3376 = vsub.f32 %v18, %v3375
  %3377 = vmatprep.subr.mxu0 %v3376
  %v3378 = vand.u32 %v17, 4294901760
  %v3379 = vsub.f32 %v17, %v3378
  %3380 = vmatpush1.msra.mxu0 %v3379
  %v3381 = vand.u32 %v26, 4294901760
  %v3382 = vsub.f32 %v26, %v3381
  %3383 = vmatprep.subr.mxu0 %v3382
  %v3384 = vand.u32 %v25, 4294901760
  %v3385 = vsub.f32 %v25, %v3384
  %3386 = vmatpush1.msra.mxu0 %v3385
  %v3387 = vand.u32 %v34, 4294901760
  %v3388 = vsub.f32 %v34, %v3387
  %3389 = vmatprep.subr.mxu0 %v3388
  %v3390 = vand.u32 %v33, 4294901760
  %v3391 = vsub.f32 %v33, %v3390
  %3392 = vmatpush1.msra.mxu0 %v3391
  %v3393 = vand.u32 %v42, 4294901760
  %v3394 = vsub.f32 %v42, %v3393
  %3395 = vmatprep.subr.mxu0 %v3394
  %v3396 = vand.u32 %v41, 4294901760
  %v3397 = vsub.f32 %v41, %v3396
  %3398 = vmatpush1.msra.mxu0 %v3397
  %v3399 = vand.u32 %v50, 4294901760
  %v3400 = vsub.f32 %v50, %v3399
  %3401 = vmatprep.subr.mxu0 %v3400
  %v3402 = vand.u32 %v49, 4294901760
  %v3403 = vsub.f32 %v49, %v3402
  %3404 = vmatpush1.msra.mxu0 %v3403
  %v3405 = vand.u32 %v58, 4294901760
  %v3406 = vsub.f32 %v58, %v3405
  %3407 = vmatprep.subr.mxu0 %v3406
  %v3408 = vand.u32 %v57, 4294901760
  %v3409 = vsub.f32 %v57, %v3408
  %3410 = vmatpush1.msra.mxu0 %v3409
  %v3411 = vand.u32 %v66, 4294901760
  %v3412 = vsub.f32 %v66, %v3411
  %3413 = vmatprep.subr.mxu0 %v3412
  %v3414 = vand.u32 %v65, 4294901760
  %v3415 = vsub.f32 %v65, %v3414
  %3416 = vmatpush1.msra.mxu0 %v3415
  %v3417 = vand.u32 %v74, 4294901760
  %v3418 = vsub.f32 %v74, %v3417
  %3419 = vmatprep.subr.mxu0 %v3418
  %v3420 = vand.u32 %v73, 4294901760
  %v3421 = vsub.f32 %v73, %v3420
  %3422 = vmatpush1.msra.mxu0 %v3421
  %v3423 = vand.u32 %v82, 4294901760
  %v3424 = vsub.f32 %v82, %v3423
  %3425 = vmatprep.subr.mxu0 %v3424
  %v3426 = vand.u32 %v81, 4294901760
  %v3427 = vsub.f32 %v81, %v3426
  %3428 = vmatpush1.msra.mxu0 %v3427
  %v3429 = vand.u32 %v90, 4294901760
  %v3430 = vsub.f32 %v90, %v3429
  %3431 = vmatprep.subr.mxu0 %v3430
  %v3432 = vand.u32 %v89, 4294901760
  %v3433 = vsub.f32 %v89, %v3432
  %3434 = vmatpush1.msra.mxu0 %v3433
  %v3435 = vand.u32 %v98, 4294901760
  %v3436 = vsub.f32 %v98, %v3435
  %3437 = vmatprep.subr.mxu0 %v3436
  %v3438 = vand.u32 %v97, 4294901760
  %v3439 = vsub.f32 %v97, %v3438
  %3440 = vmatpush1.msra.mxu0 %v3439
  %v3441 = vand.u32 %v106, 4294901760
  %v3442 = vsub.f32 %v106, %v3441
  %3443 = vmatprep.subr.mxu0 %v3442
  %v3444 = vand.u32 %v105, 4294901760
  %v3445 = vsub.f32 %v105, %v3444
  %3446 = vmatpush1.msra.mxu0 %v3445
  %v3447 = vand.u32 %v114, 4294901760
  %v3448 = vsub.f32 %v114, %v3447
  %3449 = vmatprep.subr.mxu0 %v3448
  %v3450 = vand.u32 %v113, 4294901760
  %v3451 = vsub.f32 %v113, %v3450
  %3452 = vmatpush1.msra.mxu0 %v3451
  %v3453 = vand.u32 %v122, 4294901760
  %v3454 = vsub.f32 %v122, %v3453
  %3455 = vmatprep.subr.mxu0 %v3454
  %v3456 = vand.u32 %v121, 4294901760
  %v3457 = vsub.f32 %v121, %v3456
  %3458 = vmatpush1.msra.mxu0 %v3457
  %v3459 = vand.u32 %v130, 4294901760
  %v3460 = vsub.f32 %v130, %v3459
  %3461 = vmatprep.subr.mxu0 %v3460
  %v3462 = vand.u32 %v129, 4294901760
  %v3463 = vsub.f32 %v129, %v3462
  %3464 = vmatpush1.msra.mxu0 %v3463
  %v3465 = vand.u32 %v138, 4294901760
  %v3466 = vsub.f32 %v138, %v3465
  %3467 = vmatprep.subr.mxu0 %v3466
  %v3468 = vand.u32 %v137, 4294901760
  %v3469 = vsub.f32 %v137, %v3468
  %3470 = vmatpush1.msra.mxu0 %v3469
  %v3471 = vand.u32 %v146, 4294901760
  %v3472 = vsub.f32 %v146, %v3471
  %3473 = vmatprep.subr.mxu0 %v3472
  %v3474 = vand.u32 %v145, 4294901760
  %v3475 = vsub.f32 %v145, %v3474
  %3476 = vmatpush1.msra.mxu0 %v3475
  %v3477 = vand.u32 %v154, 4294901760
  %v3478 = vsub.f32 %v154, %v3477
  %3479 = vmatprep.subr.mxu0 %v3478
  %v3480 = vand.u32 %v153, 4294901760
  %v3481 = vsub.f32 %v153, %v3480
  %3482 = vmatpush1.msra.mxu0 %v3481
  %v3483 = vand.u32 %v162, 4294901760
  %v3484 = vsub.f32 %v162, %v3483
  %3485 = vmatprep.subr.mxu0 %v3484
  %v3486 = vand.u32 %v161, 4294901760
  %v3487 = vsub.f32 %v161, %v3486
  %3488 = vmatpush1.msra.mxu0 %v3487
  %v3489 = vand.u32 %v170, 4294901760
  %v3490 = vsub.f32 %v170, %v3489
  %3491 = vmatprep.subr.mxu0 %v3490
  %v3492 = vand.u32 %v169, 4294901760
  %v3493 = vsub.f32 %v169, %v3492
  %3494 = vmatpush1.msra.mxu0 %v3493
  %v3495 = vand.u32 %v178, 4294901760
  %v3496 = vsub.f32 %v178, %v3495
  %3497 = vmatprep.subr.mxu0 %v3496
  %v3498 = vand.u32 %v177, 4294901760
  %v3499 = vsub.f32 %v177, %v3498
  %3500 = vmatpush1.msra.mxu0 %v3499
  %v3501 = vand.u32 %v186, 4294901760
  %v3502 = vsub.f32 %v186, %v3501
  %3503 = vmatprep.subr.mxu0 %v3502
  %v3504 = vand.u32 %v185, 4294901760
  %v3505 = vsub.f32 %v185, %v3504
  %3506 = vmatpush1.msra.mxu0 %v3505
  %v3507 = vand.u32 %v194, 4294901760
  %v3508 = vsub.f32 %v194, %v3507
  %3509 = vmatprep.subr.mxu0 %v3508
  %v3510 = vand.u32 %v193, 4294901760
  %v3511 = vsub.f32 %v193, %v3510
  %3512 = vmatpush1.msra.mxu0 %v3511
  %v3513 = vand.u32 %v202, 4294901760
  %v3514 = vsub.f32 %v202, %v3513
  %3515 = vmatprep.subr.mxu0 %v3514
  %v3516 = vand.u32 %v201, 4294901760
  %v3517 = vsub.f32 %v201, %v3516
  %3518 = vmatpush1.msra.mxu0 %v3517
  %v3519 = vand.u32 %v210, 4294901760
  %v3520 = vsub.f32 %v210, %v3519
  %3521 = vmatprep.subr.mxu0 %v3520
  %v3522 = vand.u32 %v209, 4294901760
  %v3523 = vsub.f32 %v209, %v3522
  %3524 = vmatpush1.msra.mxu0 %v3523
  %v3525 = vand.u32 %v218, 4294901760
  %v3526 = vsub.f32 %v218, %v3525
  %3527 = vmatprep.subr.mxu0 %v3526
  %v3528 = vand.u32 %v217, 4294901760
  %v3529 = vsub.f32 %v217, %v3528
  %3530 = vmatpush1.msra.mxu0 %v3529
  %v3531 = vand.u32 %v226, 4294901760
  %v3532 = vsub.f32 %v226, %v3531
  %3533 = vmatprep.subr.mxu0 %v3532
  %v3534 = vand.u32 %v225, 4294901760
  %v3535 = vsub.f32 %v225, %v3534
  %3536 = vmatpush1.msra.mxu0 %v3535
  %v3537 = vand.u32 %v234, 4294901760
  %v3538 = vsub.f32 %v234, %v3537
  %3539 = vmatprep.subr.mxu0 %v3538
  %v3540 = vand.u32 %v233, 4294901760
  %v3541 = vsub.f32 %v233, %v3540
  %3542 = vmatpush1.msra.mxu0 %v3541
  %v3543 = vand.u32 %v242, 4294901760
  %v3544 = vsub.f32 %v242, %v3543
  %3545 = vmatprep.subr.mxu0 %v3544
  %v3546 = vand.u32 %v241, 4294901760
  %v3547 = vsub.f32 %v241, %v3546
  %3548 = vmatpush1.msra.mxu0 %v3547
  %v3549 = vand.u32 %v250, 4294901760
  %v3550 = vsub.f32 %v250, %v3549
  %3551 = vmatprep.subr.mxu0 %v3550
  %v3552 = vand.u32 %v249, 4294901760
  %v3553 = vsub.f32 %v249, %v3552
  %3554 = vmatpush1.msra.mxu0 %v3553
  %v3555 = vand.u32 %v258, 4294901760
  %v3556 = vsub.f32 %v258, %v3555
  %3557 = vmatprep.subr.mxu0 %v3556
  %v3558 = vand.u32 %v257, 4294901760
  %v3559 = vsub.f32 %v257, %v3558
  %3560 = vmatpush1.msra.mxu0 %v3559
  %v3561 = vand.u32 %v266, 4294901760
  %v3562 = vsub.f32 %v266, %v3561
  %3563 = vmatprep.subr.mxu0 %v3562
  %v3564 = vand.u32 %v265, 4294901760
  %v3565 = vsub.f32 %v265, %v3564
  %3566 = vmatpush1.msra.mxu0 %v3565
  %v3567 = vand.u32 %v12, 4294901760
  %v3568 = vsub.f32 %v12, %v3567
  %3569 = vmatprep.mubr.f32.mxu0 %v3568
  %v3570 = vand.u32 %v11, 4294901760
  %v3571 = vsub.f32 %v11, %v3570
  %3572 = vmatmul.mubr.f32.gmra.mrb[0].mxu0 %v3571
  %v3573 = vpop.f32.mrb[0].mxu0
  %v3574 = vadd.f32 %v3371, %v3573
  %v3575 = vpop.f32.mrb[0].mxu0
  %v3576 = vadd.f32 %v3373, %v3575
  %3577 = vdwg.mxu0
  %v3578 = vand.u32 %v18, 4294901760
  %3579 = vmatprep.subr.mxu0 %v3578
  %v3580 = vand.u32 %v17, 4294901760
  %3581 = vmatpush1.msra.mxu0 %v3580
  %v3582 = vand.u32 %v26, 4294901760
  %3583 = vmatprep.subr.mxu0 %v3582
  %v3584 = vand.u32 %v25, 4294901760
  %3585 = vmatpush1.msra.mxu0 %v3584
  %v3586 = vand.u32 %v34, 4294901760
  %3587 = vmatprep.subr.mxu0 %v3586
  %v3588 = vand.u32 %v33, 4294901760
  %3589 = vmatpush1.msra.mxu0 %v3588
  %v3590 = vand.u32 %v42, 4294901760
  %3591 = vmatprep.subr.mxu0 %v3590
  %v3592 = vand.u32 %v41, 4294901760
  %3593 = vmatpush1.msra.mxu0 %v3592
  %v3594 = vand.u32 %v50, 4294901760
  %3595 = vmatprep.subr.mxu0 %v3594
  %v3596 = vand.u32 %v49, 4294901760
  %3597 = vmatpush1.msra.mxu0 %v3596
  %v3598 = vand.u32 %v58, 4294901760
  %3599 = vmatprep.subr.mxu0 %v3598
  %v3600 = vand.u32 %v57, 4294901760
  %3601 = vmatpush1.msra.mxu0 %v3600
  %v3602 = vand.u32 %v66, 4294901760
  %3603 = vmatprep.subr.mxu0 %v3602
  %v3604 = vand.u32 %v65, 4294901760
  %3605 = vmatpush1.msra.mxu0 %v3604
  %v3606 = vand.u32 %v74, 4294901760
  %3607 = vmatprep.subr.mxu0 %v3606
  %v3608 = vand.u32 %v73, 4294901760
  %3609 = vmatpush1.msra.mxu0 %v3608
  %v3610 = vand.u32 %v82, 4294901760
  %3611 = vmatprep.subr.mxu0 %v3610
  %v3612 = vand.u32 %v81, 4294901760
  %3613 = vmatpush1.msra.mxu0 %v3612
  %v3614 = vand.u32 %v90, 4294901760
  %3615 = vmatprep.subr.mxu0 %v3614
  %v3616 = vand.u32 %v89, 4294901760
  %3617 = vmatpush1.msra.mxu0 %v3616
  %v3618 = vand.u32 %v98, 4294901760
  %3619 = vmatprep.subr.mxu0 %v3618
  %v3620 = vand.u32 %v97, 4294901760
  %3621 = vmatpush1.msra.mxu0 %v3620
  %v3622 = vand.u32 %v106, 4294901760
  %3623 = vmatprep.subr.mxu0 %v3622
  %v3624 = vand.u32 %v105, 4294901760
  %3625 = vmatpush1.msra.mxu0 %v3624
  %v3626 = vand.u32 %v114, 4294901760
  %3627 = vmatprep.subr.mxu0 %v3626
  %v3628 = vand.u32 %v113, 4294901760
  %3629 = vmatpush1.msra.mxu0 %v3628
  %v3630 = vand.u32 %v122, 4294901760
  %3631 = vmatprep.subr.mxu0 %v3630
  %v3632 = vand.u32 %v121, 4294901760
  %3633 = vmatpush1.msra.mxu0 %v3632
  %v3634 = vand.u32 %v130, 4294901760
  %3635 = vmatprep.subr.mxu0 %v3634
  %v3636 = vand.u32 %v129, 4294901760
  %3637 = vmatpush1.msra.mxu0 %v3636
  %v3638 = vand.u32 %v138, 4294901760
  %3639 = vmatprep.subr.mxu0 %v3638
  %v3640 = vand.u32 %v137, 4294901760
  %3641 = vmatpush1.msra.mxu0 %v3640
  %v3642 = vand.u32 %v146, 4294901760
  %3643 = vmatprep.subr.mxu0 %v3642
  %v3644 = vand.u32 %v145, 4294901760
  %3645 = vmatpush1.msra.mxu0 %v3644
  %v3646 = vand.u32 %v154, 4294901760
  %3647 = vmatprep.subr.mxu0 %v3646
  %v3648 = vand.u32 %v153, 4294901760
  %3649 = vmatpush1.msra.mxu0 %v3648
  %v3650 = vand.u32 %v162, 4294901760
  %3651 = vmatprep.subr.mxu0 %v3650
  %v3652 = vand.u32 %v161, 4294901760
  %3653 = vmatpush1.msra.mxu0 %v3652
  %v3654 = vand.u32 %v170, 4294901760
  %3655 = vmatprep.subr.mxu0 %v3654
  %v3656 = vand.u32 %v169, 4294901760
  %3657 = vmatpush1.msra.mxu0 %v3656
  %v3658 = vand.u32 %v178, 4294901760
  %3659 = vmatprep.subr.mxu0 %v3658
  %v3660 = vand.u32 %v177, 4294901760
  %3661 = vmatpush1.msra.mxu0 %v3660
  %v3662 = vand.u32 %v186, 4294901760
  %3663 = vmatprep.subr.mxu0 %v3662
  %v3664 = vand.u32 %v185, 4294901760
  %3665 = vmatpush1.msra.mxu0 %v3664
  %v3666 = vand.u32 %v194, 4294901760
  %3667 = vmatprep.subr.mxu0 %v3666
  %v3668 = vand.u32 %v193, 4294901760
  %3669 = vmatpush1.msra.mxu0 %v3668
  %v3670 = vand.u32 %v202, 4294901760
  %3671 = vmatprep.subr.mxu0 %v3670
  %v3672 = vand.u32 %v201, 4294901760
  %3673 = vmatpush1.msra.mxu0 %v3672
  %v3674 = vand.u32 %v210, 4294901760
  %3675 = vmatprep.subr.mxu0 %v3674
  %v3676 = vand.u32 %v209, 4294901760
  %3677 = vmatpush1.msra.mxu0 %v3676
  %v3678 = vand.u32 %v218, 4294901760
  %3679 = vmatprep.subr.mxu0 %v3678
  %v3680 = vand.u32 %v217, 4294901760
  %3681 = vmatpush1.msra.mxu0 %v3680
  %v3682 = vand.u32 %v226, 4294901760
  %3683 = vmatprep.subr.mxu0 %v3682
  %v3684 = vand.u32 %v225, 4294901760
  %3685 = vmatpush1.msra.mxu0 %v3684
  %v3686 = vand.u32 %v234, 4294901760
  %3687 = vmatprep.subr.mxu0 %v3686
  %v3688 = vand.u32 %v233, 4294901760
  %3689 = vmatpush1.msra.mxu0 %v3688
  %v3690 = vand.u32 %v242, 4294901760
  %3691 = vmatprep.subr.mxu0 %v3690
  %v3692 = vand.u32 %v241, 4294901760
  %3693 = vmatpush1.msra.mxu0 %v3692
  %v3694 = vand.u32 %v250, 4294901760
  %3695 = vmatprep.subr.mxu0 %v3694
  %v3696 = vand.u32 %v249, 4294901760
  %3697 = vmatpush1.msra.mxu0 %v3696
  %v3698 = vand.u32 %v258, 4294901760
  %3699 = vmatprep.subr.mxu0 %v3698
  %v3700 = vand.u32 %v257, 4294901760
  %3701 = vmatpush1.msra.mxu0 %v3700
  %v3702 = vand.u32 %v266, 4294901760
  %3703 = vmatprep.subr.mxu0 %v3702
  %v3704 = vand.u32 %v265, 4294901760
  %3705 = vmatpush1.msra.mxu0 %v3704
  %v3706 = vand.u32 %v12, 4294901760
  %v3707 = vsub.f32 %v12, %v3706
  %v3708 = vand.u32 %v3707, 4294901760
  %3709 = vmatprep.mubr.f32.mxu0 %v3708
  %v3710 = vand.u32 %v11, 4294901760
  %v3711 = vsub.f32 %v11, %v3710
  %v3712 = vand.u32 %v3711, 4294901760
  %3713 = vmatmul.mubr.f32.gmra.mrb[0].mxu0 %v3712
  %v3714 = vpop.f32.mrb[0].mxu0
  %v3715 = vadd.f32 %v3574, %v3714
  %v3716 = vpop.f32.mrb[0].mxu0
  %v3717 = vadd.f32 %v3576, %v3716
  %3718 = vdwg.mxu0
  %v3719 = vand.u32 %v18, 4294901760
  %v3720 = vsub.f32 %v18, %v3719
  %v3721 = vand.u32 %v3720, 4294901760
  %3722 = vmatprep.subr.mxu0 %v3721
  %v3723 = vand.u32 %v17, 4294901760
  %v3724 = vsub.f32 %v17, %v3723
  %v3725 = vand.u32 %v3724, 4294901760
  %3726 = vmatpush1.msra.mxu0 %v3725
  %v3727 = vand.u32 %v26, 4294901760
  %v3728 = vsub.f32 %v26, %v3727
  %v3729 = vand.u32 %v3728, 4294901760
  %3730 = vmatprep.subr.mxu0 %v3729
  %v3731 = vand.u32 %v25, 4294901760
  %v3732 = vsub.f32 %v25, %v3731
  %v3733 = vand.u32 %v3732, 4294901760
  %3734 = vmatpush1.msra.mxu0 %v3733
  %v3735 = vand.u32 %v34, 4294901760
  %v3736 = vsub.f32 %v34, %v3735
  %v3737 = vand.u32 %v3736, 4294901760
  %3738 = vmatprep.subr.mxu0 %v3737
  %v3739 = vand.u32 %v33, 4294901760
  %v3740 = vsub.f32 %v33, %v3739
  %v3741 = vand.u32 %v3740, 4294901760
  %3742 = vmatpush1.msra.mxu0 %v3741
  %v3743 = vand.u32 %v42, 4294901760
  %v3744 = vsub.f32 %v42, %v3743
  %v3745 = vand.u32 %v3744, 4294901760
  %3746 = vmatprep.subr.mxu0 %v3745
  %v3747 = vand.u32 %v41, 4294901760
  %v3748 = vsub.f32 %v41, %v3747
  %v3749 = vand.u32 %v3748, 4294901760
  %3750 = vmatpush1.msra.mxu0 %v3749
  %v3751 = vand.u32 %v50, 4294901760
  %v3752 = vsub.f32 %v50, %v3751
  %v3753 = vand.u32 %v3752, 4294901760
  %3754 = vmatprep.subr.mxu0 %v3753
  %v3755 = vand.u32 %v49, 4294901760
  %v3756 = vsub.f32 %v49, %v3755
  %v3757 = vand.u32 %v3756, 4294901760
  %3758 = vmatpush1.msra.mxu0 %v3757
  %v3759 = vand.u32 %v58, 4294901760
  %v3760 = vsub.f32 %v58, %v3759
  %v3761 = vand.u32 %v3760, 4294901760
  %3762 = vmatprep.subr.mxu0 %v3761
  %v3763 = vand.u32 %v57, 4294901760
  %v3764 = vsub.f32 %v57, %v3763
  %v3765 = vand.u32 %v3764, 4294901760
  %3766 = vmatpush1.msra.mxu0 %v3765
  %v3767 = vand.u32 %v66, 4294901760
  %v3768 = vsub.f32 %v66, %v3767
  %v3769 = vand.u32 %v3768, 4294901760
  %3770 = vmatprep.subr.mxu0 %v3769
  %v3771 = vand.u32 %v65, 4294901760
  %v3772 = vsub.f32 %v65, %v3771
  %v3773 = vand.u32 %v3772, 4294901760
  %3774 = vmatpush1.msra.mxu0 %v3773
  %v3775 = vand.u32 %v74, 4294901760
  %v3776 = vsub.f32 %v74, %v3775
  %v3777 = vand.u32 %v3776, 4294901760
  %3778 = vmatprep.subr.mxu0 %v3777
  %v3779 = vand.u32 %v73, 4294901760
  %v3780 = vsub.f32 %v73, %v3779
  %v3781 = vand.u32 %v3780, 4294901760
  %3782 = vmatpush1.msra.mxu0 %v3781
  %v3783 = vand.u32 %v82, 4294901760
  %v3784 = vsub.f32 %v82, %v3783
  %v3785 = vand.u32 %v3784, 4294901760
  %3786 = vmatprep.subr.mxu0 %v3785
  %v3787 = vand.u32 %v81, 4294901760
  %v3788 = vsub.f32 %v81, %v3787
  %v3789 = vand.u32 %v3788, 4294901760
  %3790 = vmatpush1.msra.mxu0 %v3789
  %v3791 = vand.u32 %v90, 4294901760
  %v3792 = vsub.f32 %v90, %v3791
  %v3793 = vand.u32 %v3792, 4294901760
  %3794 = vmatprep.subr.mxu0 %v3793
  %v3795 = vand.u32 %v89, 4294901760
  %v3796 = vsub.f32 %v89, %v3795
  %v3797 = vand.u32 %v3796, 4294901760
  %3798 = vmatpush1.msra.mxu0 %v3797
  %v3799 = vand.u32 %v98, 4294901760
  %v3800 = vsub.f32 %v98, %v3799
  %v3801 = vand.u32 %v3800, 4294901760
  %3802 = vmatprep.subr.mxu0 %v3801
  %v3803 = vand.u32 %v97, 4294901760
  %v3804 = vsub.f32 %v97, %v3803
  %v3805 = vand.u32 %v3804, 4294901760
  %3806 = vmatpush1.msra.mxu0 %v3805
  %v3807 = vand.u32 %v106, 4294901760
  %v3808 = vsub.f32 %v106, %v3807
  %v3809 = vand.u32 %v3808, 4294901760
  %3810 = vmatprep.subr.mxu0 %v3809
  %v3811 = vand.u32 %v105, 4294901760
  %v3812 = vsub.f32 %v105, %v3811
  %v3813 = vand.u32 %v3812, 4294901760
  %3814 = vmatpush1.msra.mxu0 %v3813
  %v3815 = vand.u32 %v114, 4294901760
  %v3816 = vsub.f32 %v114, %v3815
  %v3817 = vand.u32 %v3816, 4294901760
  %3818 = vmatprep.subr.mxu0 %v3817
  %v3819 = vand.u32 %v113, 4294901760
  %v3820 = vsub.f32 %v113, %v3819
  %v3821 = vand.u32 %v3820, 4294901760
  %3822 = vmatpush1.msra.mxu0 %v3821
  %v3823 = vand.u32 %v122, 4294901760
  %v3824 = vsub.f32 %v122, %v3823
  %v3825 = vand.u32 %v3824, 4294901760
  %3826 = vmatprep.subr.mxu0 %v3825
  %v3827 = vand.u32 %v121, 4294901760
  %v3828 = vsub.f32 %v121, %v3827
  %v3829 = vand.u32 %v3828, 4294901760
  %3830 = vmatpush1.msra.mxu0 %v3829
  %v3831 = vand.u32 %v130, 4294901760
  %v3832 = vsub.f32 %v130, %v3831
  %v3833 = vand.u32 %v3832, 4294901760
  %3834 = vmatprep.subr.mxu0 %v3833
  %v3835 = vand.u32 %v129, 4294901760
  %v3836 = vsub.f32 %v129, %v3835
  %v3837 = vand.u32 %v3836, 4294901760
  %3838 = vmatpush1.msra.mxu0 %v3837
  %v3839 = vand.u32 %v138, 4294901760
  %v3840 = vsub.f32 %v138, %v3839
  %v3841 = vand.u32 %v3840, 4294901760
  %3842 = vmatprep.subr.mxu0 %v3841
  %v3843 = vand.u32 %v137, 4294901760
  %v3844 = vsub.f32 %v137, %v3843
  %v3845 = vand.u32 %v3844, 4294901760
  %3846 = vmatpush1.msra.mxu0 %v3845
  %v3847 = vand.u32 %v146, 4294901760
  %v3848 = vsub.f32 %v146, %v3847
  %v3849 = vand.u32 %v3848, 4294901760
  %3850 = vmatprep.subr.mxu0 %v3849
  %v3851 = vand.u32 %v145, 4294901760
  %v3852 = vsub.f32 %v145, %v3851
  %v3853 = vand.u32 %v3852, 4294901760
  %3854 = vmatpush1.msra.mxu0 %v3853
  %v3855 = vand.u32 %v154, 4294901760
  %v3856 = vsub.f32 %v154, %v3855
  %v3857 = vand.u32 %v3856, 4294901760
  %3858 = vmatprep.subr.mxu0 %v3857
  %v3859 = vand.u32 %v153, 4294901760
  %v3860 = vsub.f32 %v153, %v3859
  %v3861 = vand.u32 %v3860, 4294901760
  %3862 = vmatpush1.msra.mxu0 %v3861
  %v3863 = vand.u32 %v162, 4294901760
  %v3864 = vsub.f32 %v162, %v3863
  %v3865 = vand.u32 %v3864, 4294901760
  %3866 = vmatprep.subr.mxu0 %v3865
  %v3867 = vand.u32 %v161, 4294901760
  %v3868 = vsub.f32 %v161, %v3867
  %v3869 = vand.u32 %v3868, 4294901760
  %3870 = vmatpush1.msra.mxu0 %v3869
  %v3871 = vand.u32 %v170, 4294901760
  %v3872 = vsub.f32 %v170, %v3871
  %v3873 = vand.u32 %v3872, 4294901760
  %3874 = vmatprep.subr.mxu0 %v3873
  %v3875 = vand.u32 %v169, 4294901760
  %v3876 = vsub.f32 %v169, %v3875
  %v3877 = vand.u32 %v3876, 4294901760
  %3878 = vmatpush1.msra.mxu0 %v3877
  %v3879 = vand.u32 %v178, 4294901760
  %v3880 = vsub.f32 %v178, %v3879
  %v3881 = vand.u32 %v3880, 4294901760
  %3882 = vmatprep.subr.mxu0 %v3881
  %v3883 = vand.u32 %v177, 4294901760
  %v3884 = vsub.f32 %v177, %v3883
  %v3885 = vand.u32 %v3884, 4294901760
  %3886 = vmatpush1.msra.mxu0 %v3885
  %v3887 = vand.u32 %v186, 4294901760
  %v3888 = vsub.f32 %v186, %v3887
  %v3889 = vand.u32 %v3888, 4294901760
  %3890 = vmatprep.subr.mxu0 %v3889
  %v3891 = vand.u32 %v185, 4294901760
  %v3892 = vsub.f32 %v185, %v3891
  %v3893 = vand.u32 %v3892, 4294901760
  %3894 = vmatpush1.msra.mxu0 %v3893
  %v3895 = vand.u32 %v194, 4294901760
  %v3896 = vsub.f32 %v194, %v3895
  %v3897 = vand.u32 %v3896, 4294901760
  %3898 = vmatprep.subr.mxu0 %v3897
  %v3899 = vand.u32 %v193, 4294901760
  %v3900 = vsub.f32 %v193, %v3899
  %v3901 = vand.u32 %v3900, 4294901760
  %3902 = vmatpush1.msra.mxu0 %v3901
  %v3903 = vand.u32 %v202, 4294901760
  %v3904 = vsub.f32 %v202, %v3903
  %v3905 = vand.u32 %v3904, 4294901760
  %3906 = vmatprep.subr.mxu0 %v3905
  %v3907 = vand.u32 %v201, 4294901760
  %v3908 = vsub.f32 %v201, %v3907
  %v3909 = vand.u32 %v3908, 4294901760
  %3910 = vmatpush1.msra.mxu0 %v3909
  %v3911 = vand.u32 %v210, 4294901760
  %v3912 = vsub.f32 %v210, %v3911
  %v3913 = vand.u32 %v3912, 4294901760
  %3914 = vmatprep.subr.mxu0 %v3913
  %v3915 = vand.u32 %v209, 4294901760
  %v3916 = vsub.f32 %v209, %v3915
  %v3917 = vand.u32 %v3916, 4294901760
  %3918 = vmatpush1.msra.mxu0 %v3917
  %v3919 = vand.u32 %v218, 4294901760
  %v3920 = vsub.f32 %v218, %v3919
  %v3921 = vand.u32 %v3920, 4294901760
  %3922 = vmatprep.subr.mxu0 %v3921
  %v3923 = vand.u32 %v217, 4294901760
  %v3924 = vsub.f32 %v217, %v3923
  %v3925 = vand.u32 %v3924, 4294901760
  %3926 = vmatpush1.msra.mxu0 %v3925
  %v3927 = vand.u32 %v226, 4294901760
  %v3928 = vsub.f32 %v226, %v3927
  %v3929 = vand.u32 %v3928, 4294901760
  %3930 = vmatprep.subr.mxu0 %v3929
  %v3931 = vand.u32 %v225, 4294901760
  %v3932 = vsub.f32 %v225, %v3931
  %v3933 = vand.u32 %v3932, 4294901760
  %3934 = vmatpush1.msra.mxu0 %v3933
  %v3935 = vand.u32 %v234, 4294901760
  %v3936 = vsub.f32 %v234, %v3935
  %v3937 = vand.u32 %v3936, 4294901760
  %3938 = vmatprep.subr.mxu0 %v3937
  %v3939 = vand.u32 %v233, 4294901760
  %v3940 = vsub.f32 %v233, %v3939
  %v3941 = vand.u32 %v3940, 4294901760
  %3942 = vmatpush1.msra.mxu0 %v3941
  %v3943 = vand.u32 %v242, 4294901760
  %v3944 = vsub.f32 %v242, %v3943
  %v3945 = vand.u32 %v3944, 4294901760
  %3946 = vmatprep.subr.mxu0 %v3945
  %v3947 = vand.u32 %v241, 4294901760
  %v3948 = vsub.f32 %v241, %v3947
  %v3949 = vand.u32 %v3948, 4294901760
  %3950 = vmatpush1.msra.mxu0 %v3949
  %v3951 = vand.u32 %v250, 4294901760
  %v3952 = vsub.f32 %v250, %v3951
  %v3953 = vand.u32 %v3952, 4294901760
  %3954 = vmatprep.subr.mxu0 %v3953
  %v3955 = vand.u32 %v249, 4294901760
  %v3956 = vsub.f32 %v249, %v3955
  %v3957 = vand.u32 %v3956, 4294901760
  %3958 = vmatpush1.msra.mxu0 %v3957
  %v3959 = vand.u32 %v258, 4294901760
  %v3960 = vsub.f32 %v258, %v3959
  %v3961 = vand.u32 %v3960, 4294901760
  %3962 = vmatprep.subr.mxu0 %v3961
  %v3963 = vand.u32 %v257, 4294901760
  %v3964 = vsub.f32 %v257, %v3963
  %v3965 = vand.u32 %v3964, 4294901760
  %3966 = vmatpush1.msra.mxu0 %v3965
  %v3967 = vand.u32 %v266, 4294901760
  %v3968 = vsub.f32 %v266, %v3967
  %v3969 = vand.u32 %v3968, 4294901760
  %3970 = vmatprep.subr.mxu0 %v3969
  %v3971 = vand.u32 %v265, 4294901760
  %v3972 = vsub.f32 %v265, %v3971
  %v3973 = vand.u32 %v3972, 4294901760
  %3974 = vmatpush1.msra.mxu0 %v3973
  %v3975 = vand.u32 %v12, 4294901760
  %3976 = vmatprep.mubr.f32.mxu0 %v3975
  %v3977 = vand.u32 %v11, 4294901760
  %3978 = vmatmul.mubr.f32.gmra.mrb[0].mxu0 %v3977
  %v3979 = vpop.f32.mrb[0].mxu0
  %v3980 = vadd.f32 %v3715, %v3979
  %v3981 = vpop.f32.mrb[0].mxu0
  %v3982 = vadd.f32 %v3717, %v3981
  %3983 = vdwg.mxu0
  %v3984 = vand.u32 %v18, 4294901760
  %3985 = vmatprep.subr.mxu0 %v3984
  %v3986 = vand.u32 %v17, 4294901760
  %3987 = vmatpush1.msra.mxu0 %v3986
  %v3988 = vand.u32 %v26, 4294901760
  %3989 = vmatprep.subr.mxu0 %v3988
  %v3990 = vand.u32 %v25, 4294901760
  %3991 = vmatpush1.msra.mxu0 %v3990
  %v3992 = vand.u32 %v34, 4294901760
  %3993 = vmatprep.subr.mxu0 %v3992
  %v3994 = vand.u32 %v33, 4294901760
  %3995 = vmatpush1.msra.mxu0 %v3994
  %v3996 = vand.u32 %v42, 4294901760
  %3997 = vmatprep.subr.mxu0 %v3996
  %v3998 = vand.u32 %v41, 4294901760
  %3999 = vmatpush1.msra.mxu0 %v3998
  %v4000 = vand.u32 %v50, 4294901760
  %4001 = vmatprep.subr.mxu0 %v4000
  %v4002 = vand.u32 %v49, 4294901760
  %4003 = vmatpush1.msra.mxu0 %v4002
  %v4004 = vand.u32 %v58, 4294901760
  %4005 = vmatprep.subr.mxu0 %v4004
  %v4006 = vand.u32 %v57, 4294901760
  %4007 = vmatpush1.msra.mxu0 %v4006
  %v4008 = vand.u32 %v66, 4294901760
  %4009 = vmatprep.subr.mxu0 %v4008
  %v4010 = vand.u32 %v65, 4294901760
  %4011 = vmatpush1.msra.mxu0 %v4010
  %v4012 = vand.u32 %v74, 4294901760
  %4013 = vmatprep.subr.mxu0 %v4012
  %v4014 = vand.u32 %v73, 4294901760
  %4015 = vmatpush1.msra.mxu0 %v4014
  %v4016 = vand.u32 %v82, 4294901760
  %4017 = vmatprep.subr.mxu0 %v4016
  %v4018 = vand.u32 %v81, 4294901760
  %4019 = vmatpush1.msra.mxu0 %v4018
  %v4020 = vand.u32 %v90, 4294901760
  %4021 = vmatprep.subr.mxu0 %v4020
  %v4022 = vand.u32 %v89, 4294901760
  %4023 = vmatpush1.msra.mxu0 %v4022
  %v4024 = vand.u32 %v98, 4294901760
  %4025 = vmatprep.subr.mxu0 %v4024
  %v4026 = vand.u32 %v97, 4294901760
  %4027 = vmatpush1.msra.mxu0 %v4026
  %v4028 = vand.u32 %v106, 4294901760
  %4029 = vmatprep.subr.mxu0 %v4028
  %v4030 = vand.u32 %v105, 4294901760
  %4031 = vmatpush1.msra.mxu0 %v4030
  %v4032 = vand.u32 %v114, 4294901760
  %4033 = vmatprep.subr.mxu0 %v4032
  %v4034 = vand.u32 %v113, 4294901760
  %4035 = vmatpush1.msra.mxu0 %v4034
  %v4036 = vand.u32 %v122, 4294901760
  %4037 = vmatprep.subr.mxu0 %v4036
  %v4038 = vand.u32 %v121, 4294901760
  %4039 = vmatpush1.msra.mxu0 %v4038
  %v4040 = vand.u32 %v130, 4294901760
  %4041 = vmatprep.subr.mxu0 %v4040
  %v4042 = vand.u32 %v129, 4294901760
  %4043 = vmatpush1.msra.mxu0 %v4042
  %v4044 = vand.u32 %v138, 4294901760
  %4045 = vmatprep.subr.mxu0 %v4044
  %v4046 = vand.u32 %v137, 4294901760
  %4047 = vmatpush1.msra.mxu0 %v4046
  %v4048 = vand.u32 %v146, 4294901760
  %4049 = vmatprep.subr.mxu0 %v4048
  %v4050 = vand.u32 %v145, 4294901760
  %4051 = vmatpush1.msra.mxu0 %v4050
  %v4052 = vand.u32 %v154, 4294901760
  %4053 = vmatprep.subr.mxu0 %v4052
  %v4054 = vand.u32 %v153, 4294901760
  %4055 = vmatpush1.msra.mxu0 %v4054
  %v4056 = vand.u32 %v162, 4294901760
  %4057 = vmatprep.subr.mxu0 %v4056
  %v4058 = vand.u32 %v161, 4294901760
  %4059 = vmatpush1.msra.mxu0 %v4058
  %v4060 = vand.u32 %v170, 4294901760
  %4061 = vmatprep.subr.mxu0 %v4060
  %v4062 = vand.u32 %v169, 4294901760
  %4063 = vmatpush1.msra.mxu0 %v4062
  %v4064 = vand.u32 %v178, 4294901760
  %4065 = vmatprep.subr.mxu0 %v4064
  %v4066 = vand.u32 %v177, 4294901760
  %4067 = vmatpush1.msra.mxu0 %v4066
  %v4068 = vand.u32 %v186, 4294901760
  %4069 = vmatprep.subr.mxu0 %v4068
  %v4070 = vand.u32 %v185, 4294901760
  %4071 = vmatpush1.msra.mxu0 %v4070
  %v4072 = vand.u32 %v194, 4294901760
  %4073 = vmatprep.subr.mxu0 %v4072
  %v4074 = vand.u32 %v193, 4294901760
  %4075 = vmatpush1.msra.mxu0 %v4074
  %v4076 = vand.u32 %v202, 4294901760
  %4077 = vmatprep.subr.mxu0 %v4076
  %v4078 = vand.u32 %v201, 4294901760
  %4079 = vmatpush1.msra.mxu0 %v4078
  %v4080 = vand.u32 %v210, 4294901760
  %4081 = vmatprep.subr.mxu0 %v4080
  %v4082 = vand.u32 %v209, 4294901760
  %4083 = vmatpush1.msra.mxu0 %v4082
  %v4084 = vand.u32 %v218, 4294901760
  %4085 = vmatprep.subr.mxu0 %v4084
  %v4086 = vand.u32 %v217, 4294901760
  %4087 = vmatpush1.msra.mxu0 %v4086
  %v4088 = vand.u32 %v226, 4294901760
  %4089 = vmatprep.subr.mxu0 %v4088
  %v4090 = vand.u32 %v225, 4294901760
  %4091 = vmatpush1.msra.mxu0 %v4090
  %v4092 = vand.u32 %v234, 4294901760
  %4093 = vmatprep.subr.mxu0 %v4092
  %v4094 = vand.u32 %v233, 4294901760
  %4095 = vmatpush1.msra.mxu0 %v4094
  %v4096 = vand.u32 %v242, 4294901760
  %4097 = vmatprep.subr.mxu0 %v4096
  %v4098 = vand.u32 %v241, 4294901760
  %4099 = vmatpush1.msra.mxu0 %v4098
  %v4100 = vand.u32 %v250, 4294901760
  %4101 = vmatprep.subr.mxu0 %v4100
  %v4102 = vand.u32 %v249, 4294901760
  %4103 = vmatpush1.msra.mxu0 %v4102
  %v4104 = vand.u32 %v258, 4294901760
  %4105 = vmatprep.subr.mxu0 %v4104
  %v4106 = vand.u32 %v257, 4294901760
  %4107 = vmatpush1.msra.mxu0 %v4106
  %v4108 = vand.u32 %v266, 4294901760
  %4109 = vmatprep.subr.mxu0 %v4108
  %v4110 = vand.u32 %v265, 4294901760
  %4111 = vmatpush1.msra.mxu0 %v4110
  %v4112 = vand.u32 %v12, 4294901760
  %4113 = vmatprep.mubr.f32.mxu0 %v4112
  %v4114 = vand.u32 %v11, 4294901760
  %4115 = vmatmul.mubr.f32.gmra.mrb[0].mxu0 %v4114
  %v4116 = vpop.f32.mrb[0].mxu0
  %v4117 = vadd.f32 %v3980, %v4116
  %v4118 = vpop.f32.mrb[0].mxu0
  %v4119 = vadd.f32 %v3982, %v4118
  %4120 = vdwg.mxu0
  %v4121 = vand.u32 %v20, 4294901760
  %4122 = vmatprep.subr.mxu0 %v4121
  %v4123 = vand.u32 %v19, 4294901760
  %4124 = vmatpush1.msra.mxu0 %v4123
  %v4125 = vand.u32 %v28, 4294901760
  %4126 = vmatprep.subr.mxu0 %v4125
  %v4127 = vand.u32 %v27, 4294901760
  %4128 = vmatpush1.msra.mxu0 %v4127
  %v4129 = vand.u32 %v36, 4294901760
  %4130 = vmatprep.subr.mxu0 %v4129
  %v4131 = vand.u32 %v35, 4294901760
  %4132 = vmatpush1.msra.mxu0 %v4131
  %v4133 = vand.u32 %v44, 4294901760
  %4134 = vmatprep.subr.mxu0 %v4133
  %v4135 = vand.u32 %v43, 4294901760
  %4136 = vmatpush1.msra.mxu0 %v4135
  %v4137 = vand.u32 %v52, 4294901760
  %4138 = vmatprep.subr.mxu0 %v4137
  %v4139 = vand.u32 %v51, 4294901760
  %4140 = vmatpush1.msra.mxu0 %v4139
  %v4141 = vand.u32 %v60, 4294901760
  %4142 = vmatprep.subr.mxu0 %v4141
  %v4143 = vand.u32 %v59, 4294901760
  %4144 = vmatpush1.msra.mxu0 %v4143
  %v4145 = vand.u32 %v68, 4294901760
  %4146 = vmatprep.subr.mxu0 %v4145
  %v4147 = vand.u32 %v67, 4294901760
  %4148 = vmatpush1.msra.mxu0 %v4147
  %v4149 = vand.u32 %v76, 4294901760
  %4150 = vmatprep.subr.mxu0 %v4149
  %v4151 = vand.u32 %v75, 4294901760
  %4152 = vmatpush1.msra.mxu0 %v4151
  %v4153 = vand.u32 %v84, 4294901760
  %4154 = vmatprep.subr.mxu0 %v4153
  %v4155 = vand.u32 %v83, 4294901760
  %4156 = vmatpush1.msra.mxu0 %v4155
  %v4157 = vand.u32 %v92, 4294901760
  %4158 = vmatprep.subr.mxu0 %v4157
  %v4159 = vand.u32 %v91, 4294901760
  %4160 = vmatpush1.msra.mxu0 %v4159
  %v4161 = vand.u32 %v100, 4294901760
  %4162 = vmatprep.subr.mxu0 %v4161
  %v4163 = vand.u32 %v99, 4294901760
  %4164 = vmatpush1.msra.mxu0 %v4163
  %v4165 = vand.u32 %v108, 4294901760
  %4166 = vmatprep.subr.mxu0 %v4165
  %v4167 = vand.u32 %v107, 4294901760
  %4168 = vmatpush1.msra.mxu0 %v4167
  %v4169 = vand.u32 %v116, 4294901760
  %4170 = vmatprep.subr.mxu0 %v4169
  %v4171 = vand.u32 %v115, 4294901760
  %4172 = vmatpush1.msra.mxu0 %v4171
  %v4173 = vand.u32 %v124, 4294901760
  %4174 = vmatprep.subr.mxu0 %v4173
  %v4175 = vand.u32 %v123, 4294901760
  %4176 = vmatpush1.msra.mxu0 %v4175
  %v4177 = vand.u32 %v132, 4294901760
  %4178 = vmatprep.subr.mxu0 %v4177
  %v4179 = vand.u32 %v131, 4294901760
  %4180 = vmatpush1.msra.mxu0 %v4179
  %v4181 = vand.u32 %v140, 4294901760
  %4182 = vmatprep.subr.mxu0 %v4181
  %v4183 = vand.u32 %v139, 4294901760
  %4184 = vmatpush1.msra.mxu0 %v4183
  %v4185 = vand.u32 %v148, 4294901760
  %4186 = vmatprep.subr.mxu0 %v4185
  %v4187 = vand.u32 %v147, 4294901760
  %4188 = vmatpush1.msra.mxu0 %v4187
  %v4189 = vand.u32 %v156, 4294901760
  %4190 = vmatprep.subr.mxu0 %v4189
  %v4191 = vand.u32 %v155, 4294901760
  %4192 = vmatpush1.msra.mxu0 %v4191
  %v4193 = vand.u32 %v164, 4294901760
  %4194 = vmatprep.subr.mxu0 %v4193
  %v4195 = vand.u32 %v163, 4294901760
  %4196 = vmatpush1.msra.mxu0 %v4195
  %v4197 = vand.u32 %v172, 4294901760
  %4198 = vmatprep.subr.mxu0 %v4197
  %v4199 = vand.u32 %v171, 4294901760
  %4200 = vmatpush1.msra.mxu0 %v4199
  %v4201 = vand.u32 %v180, 4294901760
  %4202 = vmatprep.subr.mxu0 %v4201
  %v4203 = vand.u32 %v179, 4294901760
  %4204 = vmatpush1.msra.mxu0 %v4203
  %v4205 = vand.u32 %v188, 4294901760
  %4206 = vmatprep.subr.mxu0 %v4205
  %v4207 = vand.u32 %v187, 4294901760
  %4208 = vmatpush1.msra.mxu0 %v4207
  %v4209 = vand.u32 %v196, 4294901760
  %4210 = vmatprep.subr.mxu0 %v4209
  %v4211 = vand.u32 %v195, 4294901760
  %4212 = vmatpush1.msra.mxu0 %v4211
  %v4213 = vand.u32 %v204, 4294901760
  %4214 = vmatprep.subr.mxu0 %v4213
  %v4215 = vand.u32 %v203, 4294901760
  %4216 = vmatpush1.msra.mxu0 %v4215
  %v4217 = vand.u32 %v212, 4294901760
  %4218 = vmatprep.subr.mxu0 %v4217
  %v4219 = vand.u32 %v211, 4294901760
  %4220 = vmatpush1.msra.mxu0 %v4219
  %v4221 = vand.u32 %v220, 4294901760
  %4222 = vmatprep.subr.mxu0 %v4221
  %v4223 = vand.u32 %v219, 4294901760
  %4224 = vmatpush1.msra.mxu0 %v4223
  %v4225 = vand.u32 %v228, 4294901760
  %4226 = vmatprep.subr.mxu0 %v4225
  %v4227 = vand.u32 %v227, 4294901760
  %4228 = vmatpush1.msra.mxu0 %v4227
  %v4229 = vand.u32 %v236, 4294901760
  %4230 = vmatprep.subr.mxu0 %v4229
  %v4231 = vand.u32 %v235, 4294901760
  %4232 = vmatpush1.msra.mxu0 %v4231
  %v4233 = vand.u32 %v244, 4294901760
  %4234 = vmatprep.subr.mxu0 %v4233
  %v4235 = vand.u32 %v243, 4294901760
  %4236 = vmatpush1.msra.mxu0 %v4235
  %v4237 = vand.u32 %v252, 4294901760
  %4238 = vmatprep.subr.mxu0 %v4237
  %v4239 = vand.u32 %v251, 4294901760
  %4240 = vmatpush1.msra.mxu0 %v4239
  %v4241 = vand.u32 %v260, 4294901760
  %4242 = vmatprep.subr.mxu0 %v4241
  %v4243 = vand.u32 %v259, 4294901760
  %4244 = vmatpush1.msra.mxu0 %v4243
  %v4245 = vand.u32 %v268, 4294901760
  %4246 = vmatprep.subr.mxu0 %v4245
  %v4247 = vand.u32 %v267, 4294901760
  %4248 = vmatpush1.msra.mxu0 %v4247
  %v4249 = vand.u32 %v12, 4294901760
  %v4250 = vsub.f32 %v12, %v4249
  %v4251 = vand.u32 %v4250, 4294901760
  %v4252 = vsub.f32 %v4250, %v4251
  %v4253 = vand.u32 %v4252, 4294901760
  %4254 = vmatprep.mubr.f32.mxu0 %v4253
  %v4255 = vand.u32 %v11, 4294901760
  %v4256 = vsub.f32 %v11, %v4255
  %v4257 = vand.u32 %v4256, 4294901760
  %v4258 = vsub.f32 %v4256, %v4257
  %v4259 = vand.u32 %v4258, 4294901760
  %4260 = vmatmul.mubr.f32.gmra.mrb[0].mxu0 %v4259
  %v4261 = vpop.f32.mrb[0].mxu0
  %v4262 = vadd.f32 0.0, %v4261
  %v4263 = vpop.f32.mrb[0].mxu0
  %v4264 = vadd.f32 0.0, %v4263
  %4265 = vdwg.mxu0
  %v4266 = vand.u32 %v20, 4294901760
  %v4267 = vsub.f32 %v20, %v4266
  %v4268 = vand.u32 %v4267, 4294901760
  %v4269 = vsub.f32 %v4267, %v4268
  %v4270 = vand.u32 %v4269, 4294901760
  %4271 = vmatprep.subr.mxu0 %v4270
  %v4272 = vand.u32 %v19, 4294901760
  %v4273 = vsub.f32 %v19, %v4272
  %v4274 = vand.u32 %v4273, 4294901760
  %v4275 = vsub.f32 %v4273, %v4274
  %v4276 = vand.u32 %v4275, 4294901760
  %4277 = vmatpush1.msra.mxu0 %v4276
  %v4278 = vand.u32 %v28, 4294901760
  %v4279 = vsub.f32 %v28, %v4278
  %v4280 = vand.u32 %v4279, 4294901760
  %v4281 = vsub.f32 %v4279, %v4280
  %v4282 = vand.u32 %v4281, 4294901760
  %4283 = vmatprep.subr.mxu0 %v4282
  %v4284 = vand.u32 %v27, 4294901760
  %v4285 = vsub.f32 %v27, %v4284
  %v4286 = vand.u32 %v4285, 4294901760
  %v4287 = vsub.f32 %v4285, %v4286
  %v4288 = vand.u32 %v4287, 4294901760
  %4289 = vmatpush1.msra.mxu0 %v4288
  %v4290 = vand.u32 %v36, 4294901760
  %v4291 = vsub.f32 %v36, %v4290
  %v4292 = vand.u32 %v4291, 4294901760
  %v4293 = vsub.f32 %v4291, %v4292
  %v4294 = vand.u32 %v4293, 4294901760
  %4295 = vmatprep.subr.mxu0 %v4294
  %v4296 = vand.u32 %v35, 4294901760
  %v4297 = vsub.f32 %v35, %v4296
  %v4298 = vand.u32 %v4297, 4294901760
  %v4299 = vsub.f32 %v4297, %v4298
  %v4300 = vand.u32 %v4299, 4294901760
  %4301 = vmatpush1.msra.mxu0 %v4300
  %v4302 = vand.u32 %v44, 4294901760
  %v4303 = vsub.f32 %v44, %v4302
  %v4304 = vand.u32 %v4303, 4294901760
  %v4305 = vsub.f32 %v4303, %v4304
  %v4306 = vand.u32 %v4305, 4294901760
  %4307 = vmatprep.subr.mxu0 %v4306
  %v4308 = vand.u32 %v43, 4294901760
  %v4309 = vsub.f32 %v43, %v4308
  %v4310 = vand.u32 %v4309, 4294901760
  %v4311 = vsub.f32 %v4309, %v4310
  %v4312 = vand.u32 %v4311, 4294901760
  %4313 = vmatpush1.msra.mxu0 %v4312
  %v4314 = vand.u32 %v52, 4294901760
  %v4315 = vsub.f32 %v52, %v4314
  %v4316 = vand.u32 %v4315, 4294901760
  %v4317 = vsub.f32 %v4315, %v4316
  %v4318 = vand.u32 %v4317, 4294901760
  %4319 = vmatprep.subr.mxu0 %v4318
  %v4320 = vand.u32 %v51, 4294901760
  %v4321 = vsub.f32 %v51, %v4320
  %v4322 = vand.u32 %v4321, 4294901760
  %v4323 = vsub.f32 %v4321, %v4322
  %v4324 = vand.u32 %v4323, 4294901760
  %4325 = vmatpush1.msra.mxu0 %v4324
  %v4326 = vand.u32 %v60, 4294901760
  %v4327 = vsub.f32 %v60, %v4326
  %v4328 = vand.u32 %v4327, 4294901760
  %v4329 = vsub.f32 %v4327, %v4328
  %v4330 = vand.u32 %v4329, 4294901760
  %4331 = vmatprep.subr.mxu0 %v4330
  %v4332 = vand.u32 %v59, 4294901760
  %v4333 = vsub.f32 %v59, %v4332
  %v4334 = vand.u32 %v4333, 4294901760
  %v4335 = vsub.f32 %v4333, %v4334
  %v4336 = vand.u32 %v4335, 4294901760
  %4337 = vmatpush1.msra.mxu0 %v4336
  %v4338 = vand.u32 %v68, 4294901760
  %v4339 = vsub.f32 %v68, %v4338
  %v4340 = vand.u32 %v4339, 4294901760
  %v4341 = vsub.f32 %v4339, %v4340
  %v4342 = vand.u32 %v4341, 4294901760
  %4343 = vmatprep.subr.mxu0 %v4342
  %v4344 = vand.u32 %v67, 4294901760
  %v4345 = vsub.f32 %v67, %v4344
  %v4346 = vand.u32 %v4345, 4294901760
  %v4347 = vsub.f32 %v4345, %v4346
  %v4348 = vand.u32 %v4347, 4294901760
  %4349 = vmatpush1.msra.mxu0 %v4348
  %v4350 = vand.u32 %v76, 4294901760
  %v4351 = vsub.f32 %v76, %v4350
  %v4352 = vand.u32 %v4351, 4294901760
  %v4353 = vsub.f32 %v4351, %v4352
  %v4354 = vand.u32 %v4353, 4294901760
  %4355 = vmatprep.subr.mxu0 %v4354
  %v4356 = vand.u32 %v75, 4294901760
  %v4357 = vsub.f32 %v75, %v4356
  %v4358 = vand.u32 %v4357, 4294901760
  %v4359 = vsub.f32 %v4357, %v4358
  %v4360 = vand.u32 %v4359, 4294901760
  %4361 = vmatpush1.msra.mxu0 %v4360
  %v4362 = vand.u32 %v84, 4294901760
  %v4363 = vsub.f32 %v84, %v4362
  %v4364 = vand.u32 %v4363, 4294901760
  %v4365 = vsub.f32 %v4363, %v4364
  %v4366 = vand.u32 %v4365, 4294901760
  %4367 = vmatprep.subr.mxu0 %v4366
  %v4368 = vand.u32 %v83, 4294901760
  %v4369 = vsub.f32 %v83, %v4368
  %v4370 = vand.u32 %v4369, 4294901760
  %v4371 = vsub.f32 %v4369, %v4370
  %v4372 = vand.u32 %v4371, 4294901760
  %4373 = vmatpush1.msra.mxu0 %v4372
  %v4374 = vand.u32 %v92, 4294901760
  %v4375 = vsub.f32 %v92, %v4374
  %v4376 = vand.u32 %v4375, 4294901760
  %v4377 = vsub.f32 %v4375, %v4376
  %v4378 = vand.u32 %v4377, 4294901760
  %4379 = vmatprep.subr.mxu0 %v4378
  %v4380 = vand.u32 %v91, 4294901760
  %v4381 = vsub.f32 %v91, %v4380
  %v4382 = vand.u32 %v4381, 4294901760
  %v4383 = vsub.f32 %v4381, %v4382
  %v4384 = vand.u32 %v4383, 4294901760
  %4385 = vmatpush1.msra.mxu0 %v4384
  %v4386 = vand.u32 %v100, 4294901760
  %v4387 = vsub.f32 %v100, %v4386
  %v4388 = vand.u32 %v4387, 4294901760
  %v4389 = vsub.f32 %v4387, %v4388
  %v4390 = vand.u32 %v4389, 4294901760
  %4391 = vmatprep.subr.mxu0 %v4390
  %v4392 = vand.u32 %v99, 4294901760
  %v4393 = vsub.f32 %v99, %v4392
  %v4394 = vand.u32 %v4393, 4294901760
  %v4395 = vsub.f32 %v4393, %v4394
  %v4396 = vand.u32 %v4395, 4294901760
  %4397 = vmatpush1.msra.mxu0 %v4396
  %v4398 = vand.u32 %v108, 4294901760
  %v4399 = vsub.f32 %v108, %v4398
  %v4400 = vand.u32 %v4399, 4294901760
  %v4401 = vsub.f32 %v4399, %v4400
  %v4402 = vand.u32 %v4401, 4294901760
  %4403 = vmatprep.subr.mxu0 %v4402
  %v4404 = vand.u32 %v107, 4294901760
  %v4405 = vsub.f32 %v107, %v4404
  %v4406 = vand.u32 %v4405, 4294901760
  %v4407 = vsub.f32 %v4405, %v4406
  %v4408 = vand.u32 %v4407, 4294901760
  %4409 = vmatpush1.msra.mxu0 %v4408
  %v4410 = vand.u32 %v116, 4294901760
  %v4411 = vsub.f32 %v116, %v4410
  %v4412 = vand.u32 %v4411, 4294901760
  %v4413 = vsub.f32 %v4411, %v4412
  %v4414 = vand.u32 %v4413, 4294901760
  %4415 = vmatprep.subr.mxu0 %v4414
  %v4416 = vand.u32 %v115, 4294901760
  %v4417 = vsub.f32 %v115, %v4416
  %v4418 = vand.u32 %v4417, 4294901760
  %v4419 = vsub.f32 %v4417, %v4418
  %v4420 = vand.u32 %v4419, 4294901760
  %4421 = vmatpush1.msra.mxu0 %v4420
  %v4422 = vand.u32 %v124, 4294901760
  %v4423 = vsub.f32 %v124, %v4422
  %v4424 = vand.u32 %v4423, 4294901760
  %v4425 = vsub.f32 %v4423, %v4424
  %v4426 = vand.u32 %v4425, 4294901760
  %4427 = vmatprep.subr.mxu0 %v4426
  %v4428 = vand.u32 %v123, 4294901760
  %v4429 = vsub.f32 %v123, %v4428
  %v4430 = vand.u32 %v4429, 4294901760
  %v4431 = vsub.f32 %v4429, %v4430
  %v4432 = vand.u32 %v4431, 4294901760
  %4433 = vmatpush1.msra.mxu0 %v4432
  %v4434 = vand.u32 %v132, 4294901760
  %v4435 = vsub.f32 %v132, %v4434
  %v4436 = vand.u32 %v4435, 4294901760
  %v4437 = vsub.f32 %v4435, %v4436
  %v4438 = vand.u32 %v4437, 4294901760
  %4439 = vmatprep.subr.mxu0 %v4438
  %v4440 = vand.u32 %v131, 4294901760
  %v4441 = vsub.f32 %v131, %v4440
  %v4442 = vand.u32 %v4441, 4294901760
  %v4443 = vsub.f32 %v4441, %v4442
  %v4444 = vand.u32 %v4443, 4294901760
  %4445 = vmatpush1.msra.mxu0 %v4444
  %v4446 = vand.u32 %v140, 4294901760
  %v4447 = vsub.f32 %v140, %v4446
  %v4448 = vand.u32 %v4447, 4294901760
  %v4449 = vsub.f32 %v4447, %v4448
  %v4450 = vand.u32 %v4449, 4294901760
  %4451 = vmatprep.subr.mxu0 %v4450
  %v4452 = vand.u32 %v139, 4294901760
  %v4453 = vsub.f32 %v139, %v4452
  %v4454 = vand.u32 %v4453, 4294901760
  %v4455 = vsub.f32 %v4453, %v4454
  %v4456 = vand.u32 %v4455, 4294901760
  %4457 = vmatpush1.msra.mxu0 %v4456
  %v4458 = vand.u32 %v148, 4294901760
  %v4459 = vsub.f32 %v148, %v4458
  %v4460 = vand.u32 %v4459, 4294901760
  %v4461 = vsub.f32 %v4459, %v4460
  %v4462 = vand.u32 %v4461, 4294901760
  %4463 = vmatprep.subr.mxu0 %v4462
  %v4464 = vand.u32 %v147, 4294901760
  %v4465 = vsub.f32 %v147, %v4464
  %v4466 = vand.u32 %v4465, 4294901760
  %v4467 = vsub.f32 %v4465, %v4466
  %v4468 = vand.u32 %v4467, 4294901760
  %4469 = vmatpush1.msra.mxu0 %v4468
  %v4470 = vand.u32 %v156, 4294901760
  %v4471 = vsub.f32 %v156, %v4470
  %v4472 = vand.u32 %v4471, 4294901760
  %v4473 = vsub.f32 %v4471, %v4472
  %v4474 = vand.u32 %v4473, 4294901760
  %4475 = vmatprep.subr.mxu0 %v4474
  %v4476 = vand.u32 %v155, 4294901760
  %v4477 = vsub.f32 %v155, %v4476
  %v4478 = vand.u32 %v4477, 4294901760
  %v4479 = vsub.f32 %v4477, %v4478
  %v4480 = vand.u32 %v4479, 4294901760
  %4481 = vmatpush1.msra.mxu0 %v4480
  %v4482 = vand.u32 %v164, 4294901760
  %v4483 = vsub.f32 %v164, %v4482
  %v4484 = vand.u32 %v4483, 4294901760
  %v4485 = vsub.f32 %v4483, %v4484
  %v4486 = vand.u32 %v4485, 4294901760
  %4487 = vmatprep.subr.mxu0 %v4486
  %v4488 = vand.u32 %v163, 4294901760
  %v4489 = vsub.f32 %v163, %v4488
  %v4490 = vand.u32 %v4489, 4294901760
  %v4491 = vsub.f32 %v4489, %v4490
  %v4492 = vand.u32 %v4491, 4294901760
  %4493 = vmatpush1.msra.mxu0 %v4492
  %v4494 = vand.u32 %v172, 4294901760
  %v4495 = vsub.f32 %v172, %v4494
  %v4496 = vand.u32 %v4495, 4294901760
  %v4497 = vsub.f32 %v4495, %v4496
  %v4498 = vand.u32 %v4497, 4294901760
  %4499 = vmatprep.subr.mxu0 %v4498
  %v4500 = vand.u32 %v171, 4294901760
  %v4501 = vsub.f32 %v171, %v4500
  %v4502 = vand.u32 %v4501, 4294901760
  %v4503 = vsub.f32 %v4501, %v4502
  %v4504 = vand.u32 %v4503, 4294901760
  %4505 = vmatpush1.msra.mxu0 %v4504
  %v4506 = vand.u32 %v180, 4294901760
  %v4507 = vsub.f32 %v180, %v4506
  %v4508 = vand.u32 %v4507, 4294901760
  %v4509 = vsub.f32 %v4507, %v4508
  %v4510 = vand.u32 %v4509, 4294901760
  %4511 = vmatprep.subr.mxu0 %v4510
  %v4512 = vand.u32 %v179, 4294901760
  %v4513 = vsub.f32 %v179, %v4512
  %v4514 = vand.u32 %v4513, 4294901760
  %v4515 = vsub.f32 %v4513, %v4514
  %v4516 = vand.u32 %v4515, 4294901760
  %4517 = vmatpush1.msra.mxu0 %v4516
  %v4518 = vand.u32 %v188, 4294901760
  %v4519 = vsub.f32 %v188, %v4518
  %v4520 = vand.u32 %v4519, 4294901760
  %v4521 = vsub.f32 %v4519, %v4520
  %v4522 = vand.u32 %v4521, 4294901760
  %4523 = vmatprep.subr.mxu0 %v4522
  %v4524 = vand.u32 %v187, 4294901760
  %v4525 = vsub.f32 %v187, %v4524
  %v4526 = vand.u32 %v4525, 4294901760
  %v4527 = vsub.f32 %v4525, %v4526
  %v4528 = vand.u32 %v4527, 4294901760
  %4529 = vmatpush1.msra.mxu0 %v4528
  %v4530 = vand.u32 %v196, 4294901760
  %v4531 = vsub.f32 %v196, %v4530
  %v4532 = vand.u32 %v4531, 4294901760
  %v4533 = vsub.f32 %v4531, %v4532
  %v4534 = vand.u32 %v4533, 4294901760
  %4535 = vmatprep.subr.mxu0 %v4534
  %v4536 = vand.u32 %v195, 4294901760
  %v4537 = vsub.f32 %v195, %v4536
  %v4538 = vand.u32 %v4537, 4294901760
  %v4539 = vsub.f32 %v4537, %v4538
  %v4540 = vand.u32 %v4539, 4294901760
  %4541 = vmatpush1.msra.mxu0 %v4540
  %v4542 = vand.u32 %v204, 4294901760
  %v4543 = vsub.f32 %v204, %v4542
  %v4544 = vand.u32 %v4543, 4294901760
  %v4545 = vsub.f32 %v4543, %v4544
  %v4546 = vand.u32 %v4545, 4294901760
  %4547 = vmatprep.subr.mxu0 %v4546
  %v4548 = vand.u32 %v203, 4294901760
  %v4549 = vsub.f32 %v203, %v4548
  %v4550 = vand.u32 %v4549, 4294901760
  %v4551 = vsub.f32 %v4549, %v4550
  %v4552 = vand.u32 %v4551, 4294901760
  %4553 = vmatpush1.msra.mxu0 %v4552
  %v4554 = vand.u32 %v212, 4294901760
  %v4555 = vsub.f32 %v212, %v4554
  %v4556 = vand.u32 %v4555, 4294901760
  %v4557 = vsub.f32 %v4555, %v4556
  %v4558 = vand.u32 %v4557, 4294901760
  %4559 = vmatprep.subr.mxu0 %v4558
  %v4560 = vand.u32 %v211, 4294901760
  %v4561 = vsub.f32 %v211, %v4560
  %v4562 = vand.u32 %v4561, 4294901760
  %v4563 = vsub.f32 %v4561, %v4562
  %v4564 = vand.u32 %v4563, 4294901760
  %4565 = vmatpush1.msra.mxu0 %v4564
  %v4566 = vand.u32 %v220, 4294901760
  %v4567 = vsub.f32 %v220, %v4566
  %v4568 = vand.u32 %v4567, 4294901760
  %v4569 = vsub.f32 %v4567, %v4568
  %v4570 = vand.u32 %v4569, 4294901760
  %4571 = vmatprep.subr.mxu0 %v4570
  %v4572 = vand.u32 %v219, 4294901760
  %v4573 = vsub.f32 %v219, %v4572
  %v4574 = vand.u32 %v4573, 4294901760
  %v4575 = vsub.f32 %v4573, %v4574
  %v4576 = vand.u32 %v4575, 4294901760
  %4577 = vmatpush1.msra.mxu0 %v4576
  %v4578 = vand.u32 %v228, 4294901760
  %v4579 = vsub.f32 %v228, %v4578
  %v4580 = vand.u32 %v4579, 4294901760
  %v4581 = vsub.f32 %v4579, %v4580
  %v4582 = vand.u32 %v4581, 4294901760
  %4583 = vmatprep.subr.mxu0 %v4582
  %v4584 = vand.u32 %v227, 4294901760
  %v4585 = vsub.f32 %v227, %v4584
  %v4586 = vand.u32 %v4585, 4294901760
  %v4587 = vsub.f32 %v4585, %v4586
  %v4588 = vand.u32 %v4587, 4294901760
  %4589 = vmatpush1.msra.mxu0 %v4588
  %v4590 = vand.u32 %v236, 4294901760
  %v4591 = vsub.f32 %v236, %v4590
  %v4592 = vand.u32 %v4591, 4294901760
  %v4593 = vsub.f32 %v4591, %v4592
  %v4594 = vand.u32 %v4593, 4294901760
  %4595 = vmatprep.subr.mxu0 %v4594
  %v4596 = vand.u32 %v235, 4294901760
  %v4597 = vsub.f32 %v235, %v4596
  %v4598 = vand.u32 %v4597, 4294901760
  %v4599 = vsub.f32 %v4597, %v4598
  %v4600 = vand.u32 %v4599, 4294901760
  %4601 = vmatpush1.msra.mxu0 %v4600
  %v4602 = vand.u32 %v244, 4294901760
  %v4603 = vsub.f32 %v244, %v4602
  %v4604 = vand.u32 %v4603, 4294901760
  %v4605 = vsub.f32 %v4603, %v4604
  %v4606 = vand.u32 %v4605, 4294901760
  %4607 = vmatprep.subr.mxu0 %v4606
  %v4608 = vand.u32 %v243, 4294901760
  %v4609 = vsub.f32 %v243, %v4608
  %v4610 = vand.u32 %v4609, 4294901760
  %v4611 = vsub.f32 %v4609, %v4610
  %v4612 = vand.u32 %v4611, 4294901760
  %4613 = vmatpush1.msra.mxu0 %v4612
  %v4614 = vand.u32 %v252, 4294901760
  %v4615 = vsub.f32 %v252, %v4614
  %v4616 = vand.u32 %v4615, 4294901760
  %v4617 = vsub.f32 %v4615, %v4616
  %v4618 = vand.u32 %v4617, 4294901760
  %4619 = vmatprep.subr.mxu0 %v4618
  %v4620 = vand.u32 %v251, 4294901760
  %v4621 = vsub.f32 %v251, %v4620
  %v4622 = vand.u32 %v4621, 4294901760
  %v4623 = vsub.f32 %v4621, %v4622
  %v4624 = vand.u32 %v4623, 4294901760
  %4625 = vmatpush1.msra.mxu0 %v4624
  %v4626 = vand.u32 %v260, 4294901760
  %v4627 = vsub.f32 %v260, %v4626
  %v4628 = vand.u32 %v4627, 4294901760
  %v4629 = vsub.f32 %v4627, %v4628
  %v4630 = vand.u32 %v4629, 4294901760
  %4631 = vmatprep.subr.mxu0 %v4630
  %v4632 = vand.u32 %v259, 4294901760
  %v4633 = vsub.f32 %v259, %v4632
  %v4634 = vand.u32 %v4633, 4294901760
  %v4635 = vsub.f32 %v4633, %v4634
  %v4636 = vand.u32 %v4635, 4294901760
  %4637 = vmatpush1.msra.mxu0 %v4636
  %v4638 = vand.u32 %v268, 4294901760
  %v4639 = vsub.f32 %v268, %v4638
  %v4640 = vand.u32 %v4639, 4294901760
  %v4641 = vsub.f32 %v4639, %v4640
  %v4642 = vand.u32 %v4641, 4294901760
  %4643 = vmatprep.subr.mxu0 %v4642
  %v4644 = vand.u32 %v267, 4294901760
  %v4645 = vsub.f32 %v267, %v4644
  %v4646 = vand.u32 %v4645, 4294901760
  %v4647 = vsub.f32 %v4645, %v4646
  %v4648 = vand.u32 %v4647, 4294901760
  %4649 = vmatpush1.msra.mxu0 %v4648
  %v4650 = vand.u32 %v12, 4294901760
  %4651 = vmatprep.mubr.f32.mxu0 %v4650
  %v4652 = vand.u32 %v11, 4294901760
  %4653 = vmatmul.mubr.f32.gmra.mrb[0].mxu0 %v4652
  %v4654 = vpop.f32.mrb[0].mxu0
  %v4655 = vadd.f32 %v4262, %v4654
  %v4656 = vpop.f32.mrb[0].mxu0
  %v4657 = vadd.f32 %v4264, %v4656
  %4658 = vdwg.mxu0
  %v4659 = vand.u32 %v20, 4294901760
  %v4660 = vsub.f32 %v20, %v4659
  %4661 = vmatprep.subr.mxu0 %v4660
  %v4662 = vand.u32 %v19, 4294901760
  %v4663 = vsub.f32 %v19, %v4662
  %4664 = vmatpush1.msra.mxu0 %v4663
  %v4665 = vand.u32 %v28, 4294901760
  %v4666 = vsub.f32 %v28, %v4665
  %4667 = vmatprep.subr.mxu0 %v4666
  %v4668 = vand.u32 %v27, 4294901760
  %v4669 = vsub.f32 %v27, %v4668
  %4670 = vmatpush1.msra.mxu0 %v4669
  %v4671 = vand.u32 %v36, 4294901760
  %v4672 = vsub.f32 %v36, %v4671
  %4673 = vmatprep.subr.mxu0 %v4672
  %v4674 = vand.u32 %v35, 4294901760
  %v4675 = vsub.f32 %v35, %v4674
  %4676 = vmatpush1.msra.mxu0 %v4675
  %v4677 = vand.u32 %v44, 4294901760
  %v4678 = vsub.f32 %v44, %v4677
  %4679 = vmatprep.subr.mxu0 %v4678
  %v4680 = vand.u32 %v43, 4294901760
  %v4681 = vsub.f32 %v43, %v4680
  %4682 = vmatpush1.msra.mxu0 %v4681
  %v4683 = vand.u32 %v52, 4294901760
  %v4684 = vsub.f32 %v52, %v4683
  %4685 = vmatprep.subr.mxu0 %v4684
  %v4686 = vand.u32 %v51, 4294901760
  %v4687 = vsub.f32 %v51, %v4686
  %4688 = vmatpush1.msra.mxu0 %v4687
  %v4689 = vand.u32 %v60, 4294901760
  %v4690 = vsub.f32 %v60, %v4689
  %4691 = vmatprep.subr.mxu0 %v4690
  %v4692 = vand.u32 %v59, 4294901760
  %v4693 = vsub.f32 %v59, %v4692
  %4694 = vmatpush1.msra.mxu0 %v4693
  %v4695 = vand.u32 %v68, 4294901760
  %v4696 = vsub.f32 %v68, %v4695
  %4697 = vmatprep.subr.mxu0 %v4696
  %v4698 = vand.u32 %v67, 4294901760
  %v4699 = vsub.f32 %v67, %v4698
  %4700 = vmatpush1.msra.mxu0 %v4699
  %v4701 = vand.u32 %v76, 4294901760
  %v4702 = vsub.f32 %v76, %v4701
  %4703 = vmatprep.subr.mxu0 %v4702
  %v4704 = vand.u32 %v75, 4294901760
  %v4705 = vsub.f32 %v75, %v4704
  %4706 = vmatpush1.msra.mxu0 %v4705
  %v4707 = vand.u32 %v84, 4294901760
  %v4708 = vsub.f32 %v84, %v4707
  %4709 = vmatprep.subr.mxu0 %v4708
  %v4710 = vand.u32 %v83, 4294901760
  %v4711 = vsub.f32 %v83, %v4710
  %4712 = vmatpush1.msra.mxu0 %v4711
  %v4713 = vand.u32 %v92, 4294901760
  %v4714 = vsub.f32 %v92, %v4713
  %4715 = vmatprep.subr.mxu0 %v4714
  %v4716 = vand.u32 %v91, 4294901760
  %v4717 = vsub.f32 %v91, %v4716
  %4718 = vmatpush1.msra.mxu0 %v4717
  %v4719 = vand.u32 %v100, 4294901760
  %v4720 = vsub.f32 %v100, %v4719
  %4721 = vmatprep.subr.mxu0 %v4720
  %v4722 = vand.u32 %v99, 4294901760
  %v4723 = vsub.f32 %v99, %v4722
  %4724 = vmatpush1.msra.mxu0 %v4723
  %v4725 = vand.u32 %v108, 4294901760
  %v4726 = vsub.f32 %v108, %v4725
  %4727 = vmatprep.subr.mxu0 %v4726
  %v4728 = vand.u32 %v107, 4294901760
  %v4729 = vsub.f32 %v107, %v4728
  %4730 = vmatpush1.msra.mxu0 %v4729
  %v4731 = vand.u32 %v116, 4294901760
  %v4732 = vsub.f32 %v116, %v4731
  %4733 = vmatprep.subr.mxu0 %v4732
  %v4734 = vand.u32 %v115, 4294901760
  %v4735 = vsub.f32 %v115, %v4734
  %4736 = vmatpush1.msra.mxu0 %v4735
  %v4737 = vand.u32 %v124, 4294901760
  %v4738 = vsub.f32 %v124, %v4737
  %4739 = vmatprep.subr.mxu0 %v4738
  %v4740 = vand.u32 %v123, 4294901760
  %v4741 = vsub.f32 %v123, %v4740
  %4742 = vmatpush1.msra.mxu0 %v4741
  %v4743 = vand.u32 %v132, 4294901760
  %v4744 = vsub.f32 %v132, %v4743
  %4745 = vmatprep.subr.mxu0 %v4744
  %v4746 = vand.u32 %v131, 4294901760
  %v4747 = vsub.f32 %v131, %v4746
  %4748 = vmatpush1.msra.mxu0 %v4747
  %v4749 = vand.u32 %v140, 4294901760
  %v4750 = vsub.f32 %v140, %v4749
  %4751 = vmatprep.subr.mxu0 %v4750
  %v4752 = vand.u32 %v139, 4294901760
  %v4753 = vsub.f32 %v139, %v4752
  %4754 = vmatpush1.msra.mxu0 %v4753
  %v4755 = vand.u32 %v148, 4294901760
  %v4756 = vsub.f32 %v148, %v4755
  %4757 = vmatprep.subr.mxu0 %v4756
  %v4758 = vand.u32 %v147, 4294901760
  %v4759 = vsub.f32 %v147, %v4758
  %4760 = vmatpush1.msra.mxu0 %v4759
  %v4761 = vand.u32 %v156, 4294901760
  %v4762 = vsub.f32 %v156, %v4761
  %4763 = vmatprep.subr.mxu0 %v4762
  %v4764 = vand.u32 %v155, 4294901760
  %v4765 = vsub.f32 %v155, %v4764
  %4766 = vmatpush1.msra.mxu0 %v4765
  %v4767 = vand.u32 %v164, 4294901760
  %v4768 = vsub.f32 %v164, %v4767
  %4769 = vmatprep.subr.mxu0 %v4768
  %v4770 = vand.u32 %v163, 4294901760
  %v4771 = vsub.f32 %v163, %v4770
  %4772 = vmatpush1.msra.mxu0 %v4771
  %v4773 = vand.u32 %v172, 4294901760
  %v4774 = vsub.f32 %v172, %v4773
  %4775 = vmatprep.subr.mxu0 %v4774
  %v4776 = vand.u32 %v171, 4294901760
  %v4777 = vsub.f32 %v171, %v4776
  %4778 = vmatpush1.msra.mxu0 %v4777
  %v4779 = vand.u32 %v180, 4294901760
  %v4780 = vsub.f32 %v180, %v4779
  %4781 = vmatprep.subr.mxu0 %v4780
  %v4782 = vand.u32 %v179, 4294901760
  %v4783 = vsub.f32 %v179, %v4782
  %4784 = vmatpush1.msra.mxu0 %v4783
  %v4785 = vand.u32 %v188, 4294901760
  %v4786 = vsub.f32 %v188, %v4785
  %4787 = vmatprep.subr.mxu0 %v4786
  %v4788 = vand.u32 %v187, 4294901760
  %v4789 = vsub.f32 %v187, %v4788
  %4790 = vmatpush1.msra.mxu0 %v4789
  %v4791 = vand.u32 %v196, 4294901760
  %v4792 = vsub.f32 %v196, %v4791
  %4793 = vmatprep.subr.mxu0 %v4792
  %v4794 = vand.u32 %v195, 4294901760
  %v4795 = vsub.f32 %v195, %v4794
  %4796 = vmatpush1.msra.mxu0 %v4795
  %v4797 = vand.u32 %v204, 4294901760
  %v4798 = vsub.f32 %v204, %v4797
  %4799 = vmatprep.subr.mxu0 %v4798
  %v4800 = vand.u32 %v203, 4294901760
  %v4801 = vsub.f32 %v203, %v4800
  %4802 = vmatpush1.msra.mxu0 %v4801
  %v4803 = vand.u32 %v212, 4294901760
  %v4804 = vsub.f32 %v212, %v4803
  %4805 = vmatprep.subr.mxu0 %v4804
  %v4806 = vand.u32 %v211, 4294901760
  %v4807 = vsub.f32 %v211, %v4806
  %4808 = vmatpush1.msra.mxu0 %v4807
  %v4809 = vand.u32 %v220, 4294901760
  %v4810 = vsub.f32 %v220, %v4809
  %4811 = vmatprep.subr.mxu0 %v4810
  %v4812 = vand.u32 %v219, 4294901760
  %v4813 = vsub.f32 %v219, %v4812
  %4814 = vmatpush1.msra.mxu0 %v4813
  %v4815 = vand.u32 %v228, 4294901760
  %v4816 = vsub.f32 %v228, %v4815
  %4817 = vmatprep.subr.mxu0 %v4816
  %v4818 = vand.u32 %v227, 4294901760
  %v4819 = vsub.f32 %v227, %v4818
  %4820 = vmatpush1.msra.mxu0 %v4819
  %v4821 = vand.u32 %v236, 4294901760
  %v4822 = vsub.f32 %v236, %v4821
  %4823 = vmatprep.subr.mxu0 %v4822
  %v4824 = vand.u32 %v235, 4294901760
  %v4825 = vsub.f32 %v235, %v4824
  %4826 = vmatpush1.msra.mxu0 %v4825
  %v4827 = vand.u32 %v244, 4294901760
  %v4828 = vsub.f32 %v244, %v4827
  %4829 = vmatprep.subr.mxu0 %v4828
  %v4830 = vand.u32 %v243, 4294901760
  %v4831 = vsub.f32 %v243, %v4830
  %4832 = vmatpush1.msra.mxu0 %v4831
  %v4833 = vand.u32 %v252, 4294901760
  %v4834 = vsub.f32 %v252, %v4833
  %4835 = vmatprep.subr.mxu0 %v4834
  %v4836 = vand.u32 %v251, 4294901760
  %v4837 = vsub.f32 %v251, %v4836
  %4838 = vmatpush1.msra.mxu0 %v4837
  %v4839 = vand.u32 %v260, 4294901760
  %v4840 = vsub.f32 %v260, %v4839
  %4841 = vmatprep.subr.mxu0 %v4840
  %v4842 = vand.u32 %v259, 4294901760
  %v4843 = vsub.f32 %v259, %v4842
  %4844 = vmatpush1.msra.mxu0 %v4843
  %v4845 = vand.u32 %v268, 4294901760
  %v4846 = vsub.f32 %v268, %v4845
  %4847 = vmatprep.subr.mxu0 %v4846
  %v4848 = vand.u32 %v267, 4294901760
  %v4849 = vsub.f32 %v267, %v4848
  %4850 = vmatpush1.msra.mxu0 %v4849
  %v4851 = vand.u32 %v12, 4294901760
  %v4852 = vsub.f32 %v12, %v4851
  %4853 = vmatprep.mubr.f32.mxu0 %v4852
  %v4854 = vand.u32 %v11, 4294901760
  %v4855 = vsub.f32 %v11, %v4854
  %4856 = vmatmul.mubr.f32.gmra.mrb[0].mxu0 %v4855
  %v4857 = vpop.f32.mrb[0].mxu0
  %v4858 = vadd.f32 %v4655, %v4857
  %v4859 = vpop.f32.mrb[0].mxu0
  %v4860 = vadd.f32 %v4657, %v4859
  %4861 = vdwg.mxu0
  %v4862 = vand.u32 %v20, 4294901760
  %4863 = vmatprep.subr.mxu0 %v4862
  %v4864 = vand.u32 %v19, 4294901760
  %4865 = vmatpush1.msra.mxu0 %v4864
  %v4866 = vand.u32 %v28, 4294901760
  %4867 = vmatprep.subr.mxu0 %v4866
  %v4868 = vand.u32 %v27, 4294901760
  %4869 = vmatpush1.msra.mxu0 %v4868
  %v4870 = vand.u32 %v36, 4294901760
  %4871 = vmatprep.subr.mxu0 %v4870
  %v4872 = vand.u32 %v35, 4294901760
  %4873 = vmatpush1.msra.mxu0 %v4872
  %v4874 = vand.u32 %v44, 4294901760
  %4875 = vmatprep.subr.mxu0 %v4874
  %v4876 = vand.u32 %v43, 4294901760
  %4877 = vmatpush1.msra.mxu0 %v4876
  %v4878 = vand.u32 %v52, 4294901760
  %4879 = vmatprep.subr.mxu0 %v4878
  %v4880 = vand.u32 %v51, 4294901760
  %4881 = vmatpush1.msra.mxu0 %v4880
  %v4882 = vand.u32 %v60, 4294901760
  %4883 = vmatprep.subr.mxu0 %v4882
  %v4884 = vand.u32 %v59, 4294901760
  %4885 = vmatpush1.msra.mxu0 %v4884
  %v4886 = vand.u32 %v68, 4294901760
  %4887 = vmatprep.subr.mxu0 %v4886
  %v4888 = vand.u32 %v67, 4294901760
  %4889 = vmatpush1.msra.mxu0 %v4888
  %v4890 = vand.u32 %v76, 4294901760
  %4891 = vmatprep.subr.mxu0 %v4890
  %v4892 = vand.u32 %v75, 4294901760
  %4893 = vmatpush1.msra.mxu0 %v4892
  %v4894 = vand.u32 %v84, 4294901760
  %4895 = vmatprep.subr.mxu0 %v4894
  %v4896 = vand.u32 %v83, 4294901760
  %4897 = vmatpush1.msra.mxu0 %v4896
  %v4898 = vand.u32 %v92, 4294901760
  %4899 = vmatprep.subr.mxu0 %v4898
  %v4900 = vand.u32 %v91, 4294901760
  %4901 = vmatpush1.msra.mxu0 %v4900
  %v4902 = vand.u32 %v100, 4294901760
  %4903 = vmatprep.subr.mxu0 %v4902
  %v4904 = vand.u32 %v99, 4294901760
  %4905 = vmatpush1.msra.mxu0 %v4904
  %v4906 = vand.u32 %v108, 4294901760
  %4907 = vmatprep.subr.mxu0 %v4906
  %v4908 = vand.u32 %v107, 4294901760
  %4909 = vmatpush1.msra.mxu0 %v4908
  %v4910 = vand.u32 %v116, 4294901760
  %4911 = vmatprep.subr.mxu0 %v4910
  %v4912 = vand.u32 %v115, 4294901760
  %4913 = vmatpush1.msra.mxu0 %v4912
  %v4914 = vand.u32 %v124, 4294901760
  %4915 = vmatprep.subr.mxu0 %v4914
  %v4916 = vand.u32 %v123, 4294901760
  %4917 = vmatpush1.msra.mxu0 %v4916
  %v4918 = vand.u32 %v132, 4294901760
  %4919 = vmatprep.subr.mxu0 %v4918
  %v4920 = vand.u32 %v131, 4294901760
  %4921 = vmatpush1.msra.mxu0 %v4920
  %v4922 = vand.u32 %v140, 4294901760
  %4923 = vmatprep.subr.mxu0 %v4922
  %v4924 = vand.u32 %v139, 4294901760
  %4925 = vmatpush1.msra.mxu0 %v4924
  %v4926 = vand.u32 %v148, 4294901760
  %4927 = vmatprep.subr.mxu0 %v4926
  %v4928 = vand.u32 %v147, 4294901760
  %4929 = vmatpush1.msra.mxu0 %v4928
  %v4930 = vand.u32 %v156, 4294901760
  %4931 = vmatprep.subr.mxu0 %v4930
  %v4932 = vand.u32 %v155, 4294901760
  %4933 = vmatpush1.msra.mxu0 %v4932
  %v4934 = vand.u32 %v164, 4294901760
  %4935 = vmatprep.subr.mxu0 %v4934
  %v4936 = vand.u32 %v163, 4294901760
  %4937 = vmatpush1.msra.mxu0 %v4936
  %v4938 = vand.u32 %v172, 4294901760
  %4939 = vmatprep.subr.mxu0 %v4938
  %v4940 = vand.u32 %v171, 4294901760
  %4941 = vmatpush1.msra.mxu0 %v4940
  %v4942 = vand.u32 %v180, 4294901760
  %4943 = vmatprep.subr.mxu0 %v4942
  %v4944 = vand.u32 %v179, 4294901760
  %4945 = vmatpush1.msra.mxu0 %v4944
  %v4946 = vand.u32 %v188, 4294901760
  %4947 = vmatprep.subr.mxu0 %v4946
  %v4948 = vand.u32 %v187, 4294901760
  %4949 = vmatpush1.msra.mxu0 %v4948
  %v4950 = vand.u32 %v196, 4294901760
  %4951 = vmatprep.subr.mxu0 %v4950
  %v4952 = vand.u32 %v195, 4294901760
  %4953 = vmatpush1.msra.mxu0 %v4952
  %v4954 = vand.u32 %v204, 4294901760
  %4955 = vmatprep.subr.mxu0 %v4954
  %v4956 = vand.u32 %v203, 4294901760
  %4957 = vmatpush1.msra.mxu0 %v4956
  %v4958 = vand.u32 %v212, 4294901760
  %4959 = vmatprep.subr.mxu0 %v4958
  %v4960 = vand.u32 %v211, 4294901760
  %4961 = vmatpush1.msra.mxu0 %v4960
  %v4962 = vand.u32 %v220, 4294901760
  %4963 = vmatprep.subr.mxu0 %v4962
  %v4964 = vand.u32 %v219, 4294901760
  %4965 = vmatpush1.msra.mxu0 %v4964
  %v4966 = vand.u32 %v228, 4294901760
  %4967 = vmatprep.subr.mxu0 %v4966
  %v4968 = vand.u32 %v227, 4294901760
  %4969 = vmatpush1.msra.mxu0 %v4968
  %v4970 = vand.u32 %v236, 4294901760
  %4971 = vmatprep.subr.mxu0 %v4970
  %v4972 = vand.u32 %v235, 4294901760
  %4973 = vmatpush1.msra.mxu0 %v4972
  %v4974 = vand.u32 %v244, 4294901760
  %4975 = vmatprep.subr.mxu0 %v4974
  %v4976 = vand.u32 %v243, 4294901760
  %4977 = vmatpush1.msra.mxu0 %v4976
  %v4978 = vand.u32 %v252, 4294901760
  %4979 = vmatprep.subr.mxu0 %v4978
  %v4980 = vand.u32 %v251, 4294901760
  %4981 = vmatpush1.msra.mxu0 %v4980
  %v4982 = vand.u32 %v260, 4294901760
  %4983 = vmatprep.subr.mxu0 %v4982
  %v4984 = vand.u32 %v259, 4294901760
  %4985 = vmatpush1.msra.mxu0 %v4984
  %v4986 = vand.u32 %v268, 4294901760
  %4987 = vmatprep.subr.mxu0 %v4986
  %v4988 = vand.u32 %v267, 4294901760
  %4989 = vmatpush1.msra.mxu0 %v4988
  %v4990 = vand.u32 %v12, 4294901760
  %v4991 = vsub.f32 %v12, %v4990
  %v4992 = vand.u32 %v4991, 4294901760
  %4993 = vmatprep.mubr.f32.mxu0 %v4992
  %v4994 = vand.u32 %v11, 4294901760
  %v4995 = vsub.f32 %v11, %v4994
  %v4996 = vand.u32 %v4995, 4294901760
  %4997 = vmatmul.mubr.f32.gmra.mrb[0].mxu0 %v4996
  %v4998 = vpop.f32.mrb[0].mxu0
  %v4999 = vadd.f32 %v4858, %v4998
  %v5000 = vpop.f32.mrb[0].mxu0
  %v5001 = vadd.f32 %v4860, %v5000
  %5002 = vdwg.mxu0
  %v5003 = vand.u32 %v20, 4294901760
  %v5004 = vsub.f32 %v20, %v5003
  %v5005 = vand.u32 %v5004, 4294901760
  %5006 = vmatprep.subr.mxu0 %v5005
  %v5007 = vand.u32 %v19, 4294901760
  %v5008 = vsub.f32 %v19, %v5007
  %v5009 = vand.u32 %v5008, 4294901760
  %5010 = vmatpush1.msra.mxu0 %v5009
  %v5011 = vand.u32 %v28, 4294901760
  %v5012 = vsub.f32 %v28, %v5011
  %v5013 = vand.u32 %v5012, 4294901760
  %5014 = vmatprep.subr.mxu0 %v5013
  %v5015 = vand.u32 %v27, 4294901760
  %v5016 = vsub.f32 %v27, %v5015
  %v5017 = vand.u32 %v5016, 4294901760
  %5018 = vmatpush1.msra.mxu0 %v5017
  %v5019 = vand.u32 %v36, 4294901760
  %v5020 = vsub.f32 %v36, %v5019
  %v5021 = vand.u32 %v5020, 4294901760
  %5022 = vmatprep.subr.mxu0 %v5021
  %v5023 = vand.u32 %v35, 4294901760
  %v5024 = vsub.f32 %v35, %v5023
  %v5025 = vand.u32 %v5024, 4294901760
  %5026 = vmatpush1.msra.mxu0 %v5025
  %v5027 = vand.u32 %v44, 4294901760
  %v5028 = vsub.f32 %v44, %v5027
  %v5029 = vand.u32 %v5028, 4294901760
  %5030 = vmatprep.subr.mxu0 %v5029
  %v5031 = vand.u32 %v43, 4294901760
  %v5032 = vsub.f32 %v43, %v5031
  %v5033 = vand.u32 %v5032, 4294901760
  %5034 = vmatpush1.msra.mxu0 %v5033
  %v5035 = vand.u32 %v52, 4294901760
  %v5036 = vsub.f32 %v52, %v5035
  %v5037 = vand.u32 %v5036, 4294901760
  %5038 = vmatprep.subr.mxu0 %v5037
  %v5039 = vand.u32 %v51, 4294901760
  %v5040 = vsub.f32 %v51, %v5039
  %v5041 = vand.u32 %v5040, 4294901760
  %5042 = vmatpush1.msra.mxu0 %v5041
  %v5043 = vand.u32 %v60, 4294901760
  %v5044 = vsub.f32 %v60, %v5043
  %v5045 = vand.u32 %v5044, 4294901760
  %5046 = vmatprep.subr.mxu0 %v5045
  %v5047 = vand.u32 %v59, 4294901760
  %v5048 = vsub.f32 %v59, %v5047
  %v5049 = vand.u32 %v5048, 4294901760
  %5050 = vmatpush1.msra.mxu0 %v5049
  %v5051 = vand.u32 %v68, 4294901760
  %v5052 = vsub.f32 %v68, %v5051
  %v5053 = vand.u32 %v5052, 4294901760
  %5054 = vmatprep.subr.mxu0 %v5053
  %v5055 = vand.u32 %v67, 4294901760
  %v5056 = vsub.f32 %v67, %v5055
  %v5057 = vand.u32 %v5056, 4294901760
  %5058 = vmatpush1.msra.mxu0 %v5057
  %v5059 = vand.u32 %v76, 4294901760
  %v5060 = vsub.f32 %v76, %v5059
  %v5061 = vand.u32 %v5060, 4294901760
  %5062 = vmatprep.subr.mxu0 %v5061
  %v5063 = vand.u32 %v75, 4294901760
  %v5064 = vsub.f32 %v75, %v5063
  %v5065 = vand.u32 %v5064, 4294901760
  %5066 = vmatpush1.msra.mxu0 %v5065
  %v5067 = vand.u32 %v84, 4294901760
  %v5068 = vsub.f32 %v84, %v5067
  %v5069 = vand.u32 %v5068, 4294901760
  %5070 = vmatprep.subr.mxu0 %v5069
  %v5071 = vand.u32 %v83, 4294901760
  %v5072 = vsub.f32 %v83, %v5071
  %v5073 = vand.u32 %v5072, 4294901760
  %5074 = vmatpush1.msra.mxu0 %v5073
  %v5075 = vand.u32 %v92, 4294901760
  %v5076 = vsub.f32 %v92, %v5075
  %v5077 = vand.u32 %v5076, 4294901760
  %5078 = vmatprep.subr.mxu0 %v5077
  %v5079 = vand.u32 %v91, 4294901760
  %v5080 = vsub.f32 %v91, %v5079
  %v5081 = vand.u32 %v5080, 4294901760
  %5082 = vmatpush1.msra.mxu0 %v5081
  %v5083 = vand.u32 %v100, 4294901760
  %v5084 = vsub.f32 %v100, %v5083
  %v5085 = vand.u32 %v5084, 4294901760
  %5086 = vmatprep.subr.mxu0 %v5085
  %v5087 = vand.u32 %v99, 4294901760
  %v5088 = vsub.f32 %v99, %v5087
  %v5089 = vand.u32 %v5088, 4294901760
  %5090 = vmatpush1.msra.mxu0 %v5089
  %v5091 = vand.u32 %v108, 4294901760
  %v5092 = vsub.f32 %v108, %v5091
  %v5093 = vand.u32 %v5092, 4294901760
  %5094 = vmatprep.subr.mxu0 %v5093
  %v5095 = vand.u32 %v107, 4294901760
  %v5096 = vsub.f32 %v107, %v5095
  %v5097 = vand.u32 %v5096, 4294901760
  %5098 = vmatpush1.msra.mxu0 %v5097
  %v5099 = vand.u32 %v116, 4294901760
  %v5100 = vsub.f32 %v116, %v5099
  %v5101 = vand.u32 %v5100, 4294901760
  %5102 = vmatprep.subr.mxu0 %v5101
  %v5103 = vand.u32 %v115, 4294901760
  %v5104 = vsub.f32 %v115, %v5103
  %v5105 = vand.u32 %v5104, 4294901760
  %5106 = vmatpush1.msra.mxu0 %v5105
  %v5107 = vand.u32 %v124, 4294901760
  %v5108 = vsub.f32 %v124, %v5107
  %v5109 = vand.u32 %v5108, 4294901760
  %5110 = vmatprep.subr.mxu0 %v5109
  %v5111 = vand.u32 %v123, 4294901760
  %v5112 = vsub.f32 %v123, %v5111
  %v5113 = vand.u32 %v5112, 4294901760
  %5114 = vmatpush1.msra.mxu0 %v5113
  %v5115 = vand.u32 %v132, 4294901760
  %v5116 = vsub.f32 %v132, %v5115
  %v5117 = vand.u32 %v5116, 4294901760
  %5118 = vmatprep.subr.mxu0 %v5117
  %v5119 = vand.u32 %v131, 4294901760
  %v5120 = vsub.f32 %v131, %v5119
  %v5121 = vand.u32 %v5120, 4294901760
  %5122 = vmatpush1.msra.mxu0 %v5121
  %v5123 = vand.u32 %v140, 4294901760
  %v5124 = vsub.f32 %v140, %v5123
  %v5125 = vand.u32 %v5124, 4294901760
  %5126 = vmatprep.subr.mxu0 %v5125
  %v5127 = vand.u32 %v139, 4294901760
  %v5128 = vsub.f32 %v139, %v5127
  %v5129 = vand.u32 %v5128, 4294901760
  %5130 = vmatpush1.msra.mxu0 %v5129
  %v5131 = vand.u32 %v148, 4294901760
  %v5132 = vsub.f32 %v148, %v5131
  %v5133 = vand.u32 %v5132, 4294901760
  %5134 = vmatprep.subr.mxu0 %v5133
  %v5135 = vand.u32 %v147, 4294901760
  %v5136 = vsub.f32 %v147, %v5135
  %v5137 = vand.u32 %v5136, 4294901760
  %5138 = vmatpush1.msra.mxu0 %v5137
  %v5139 = vand.u32 %v156, 4294901760
  %v5140 = vsub.f32 %v156, %v5139
  %v5141 = vand.u32 %v5140, 4294901760
  %5142 = vmatprep.subr.mxu0 %v5141
  %v5143 = vand.u32 %v155, 4294901760
  %v5144 = vsub.f32 %v155, %v5143
  %v5145 = vand.u32 %v5144, 4294901760
  %5146 = vmatpush1.msra.mxu0 %v5145
  %v5147 = vand.u32 %v164, 4294901760
  %v5148 = vsub.f32 %v164, %v5147
  %v5149 = vand.u32 %v5148, 4294901760
  %5150 = vmatprep.subr.mxu0 %v5149
  %v5151 = vand.u32 %v163, 4294901760
  %v5152 = vsub.f32 %v163, %v5151
  %v5153 = vand.u32 %v5152, 4294901760
  %5154 = vmatpush1.msra.mxu0 %v5153
  %v5155 = vand.u32 %v172, 4294901760
  %v5156 = vsub.f32 %v172, %v5155
  %v5157 = vand.u32 %v5156, 4294901760
  %5158 = vmatprep.subr.mxu0 %v5157
  %v5159 = vand.u32 %v171, 4294901760
  %v5160 = vsub.f32 %v171, %v5159
  %v5161 = vand.u32 %v5160, 4294901760
  %5162 = vmatpush1.msra.mxu0 %v5161
  %v5163 = vand.u32 %v180, 4294901760
  %v5164 = vsub.f32 %v180, %v5163
  %v5165 = vand.u32 %v5164, 4294901760
  %5166 = vmatprep.subr.mxu0 %v5165
  %v5167 = vand.u32 %v179, 4294901760
  %v5168 = vsub.f32 %v179, %v5167
  %v5169 = vand.u32 %v5168, 4294901760
  %5170 = vmatpush1.msra.mxu0 %v5169
  %v5171 = vand.u32 %v188, 4294901760
  %v5172 = vsub.f32 %v188, %v5171
  %v5173 = vand.u32 %v5172, 4294901760
  %5174 = vmatprep.subr.mxu0 %v5173
  %v5175 = vand.u32 %v187, 4294901760
  %v5176 = vsub.f32 %v187, %v5175
  %v5177 = vand.u32 %v5176, 4294901760
  %5178 = vmatpush1.msra.mxu0 %v5177
  %v5179 = vand.u32 %v196, 4294901760
  %v5180 = vsub.f32 %v196, %v5179
  %v5181 = vand.u32 %v5180, 4294901760
  %5182 = vmatprep.subr.mxu0 %v5181
  %v5183 = vand.u32 %v195, 4294901760
  %v5184 = vsub.f32 %v195, %v5183
  %v5185 = vand.u32 %v5184, 4294901760
  %5186 = vmatpush1.msra.mxu0 %v5185
  %v5187 = vand.u32 %v204, 4294901760
  %v5188 = vsub.f32 %v204, %v5187
  %v5189 = vand.u32 %v5188, 4294901760
  %5190 = vmatprep.subr.mxu0 %v5189
  %v5191 = vand.u32 %v203, 4294901760
  %v5192 = vsub.f32 %v203, %v5191
  %v5193 = vand.u32 %v5192, 4294901760
  %5194 = vmatpush1.msra.mxu0 %v5193
  %v5195 = vand.u32 %v212, 4294901760
  %v5196 = vsub.f32 %v212, %v5195
  %v5197 = vand.u32 %v5196, 4294901760
  %5198 = vmatprep.subr.mxu0 %v5197
  %v5199 = vand.u32 %v211, 4294901760
  %v5200 = vsub.f32 %v211, %v5199
  %v5201 = vand.u32 %v5200, 4294901760
  %5202 = vmatpush1.msra.mxu0 %v5201
  %v5203 = vand.u32 %v220, 4294901760
  %v5204 = vsub.f32 %v220, %v5203
  %v5205 = vand.u32 %v5204, 4294901760
  %5206 = vmatprep.subr.mxu0 %v5205
  %v5207 = vand.u32 %v219, 4294901760
  %v5208 = vsub.f32 %v219, %v5207
  %v5209 = vand.u32 %v5208, 4294901760
  %5210 = vmatpush1.msra.mxu0 %v5209
  %v5211 = vand.u32 %v228, 4294901760
  %v5212 = vsub.f32 %v228, %v5211
  %v5213 = vand.u32 %v5212, 4294901760
  %5214 = vmatprep.subr.mxu0 %v5213
  %v5215 = vand.u32 %v227, 4294901760
  %v5216 = vsub.f32 %v227, %v5215
  %v5217 = vand.u32 %v5216, 4294901760
  %5218 = vmatpush1.msra.mxu0 %v5217
  %v5219 = vand.u32 %v236, 4294901760
  %v5220 = vsub.f32 %v236, %v5219
  %v5221 = vand.u32 %v5220, 4294901760
  %5222 = vmatprep.subr.mxu0 %v5221
  %v5223 = vand.u32 %v235, 4294901760
  %v5224 = vsub.f32 %v235, %v5223
  %v5225 = vand.u32 %v5224, 4294901760
  %5226 = vmatpush1.msra.mxu0 %v5225
  %v5227 = vand.u32 %v244, 4294901760
  %v5228 = vsub.f32 %v244, %v5227
  %v5229 = vand.u32 %v5228, 4294901760
  %5230 = vmatprep.subr.mxu0 %v5229
  %v5231 = vand.u32 %v243, 4294901760
  %v5232 = vsub.f32 %v243, %v5231
  %v5233 = vand.u32 %v5232, 4294901760
  %5234 = vmatpush1.msra.mxu0 %v5233
  %v5235 = vand.u32 %v252, 4294901760
  %v5236 = vsub.f32 %v252, %v5235
  %v5237 = vand.u32 %v5236, 4294901760
  %5238 = vmatprep.subr.mxu0 %v5237
  %v5239 = vand.u32 %v251, 4294901760
  %v5240 = vsub.f32 %v251, %v5239
  %v5241 = vand.u32 %v5240, 4294901760
  %5242 = vmatpush1.msra.mxu0 %v5241
  %v5243 = vand.u32 %v260, 4294901760
  %v5244 = vsub.f32 %v260, %v5243
  %v5245 = vand.u32 %v5244, 4294901760
  %5246 = vmatprep.subr.mxu0 %v5245
  %v5247 = vand.u32 %v259, 4294901760
  %v5248 = vsub.f32 %v259, %v5247
  %v5249 = vand.u32 %v5248, 4294901760
  %5250 = vmatpush1.msra.mxu0 %v5249
  %v5251 = vand.u32 %v268, 4294901760
  %v5252 = vsub.f32 %v268, %v5251
  %v5253 = vand.u32 %v5252, 4294901760
  %5254 = vmatprep.subr.mxu0 %v5253
  %v5255 = vand.u32 %v267, 4294901760
  %v5256 = vsub.f32 %v267, %v5255
  %v5257 = vand.u32 %v5256, 4294901760
  %5258 = vmatpush1.msra.mxu0 %v5257
  %v5259 = vand.u32 %v12, 4294901760
  %5260 = vmatprep.mubr.f32.mxu0 %v5259
  %v5261 = vand.u32 %v11, 4294901760
  %5262 = vmatmul.mubr.f32.gmra.mrb[0].mxu0 %v5261
  %v5263 = vpop.f32.mrb[0].mxu0
  %v5264 = vadd.f32 %v4999, %v5263
  %v5265 = vpop.f32.mrb[0].mxu0
  %v5266 = vadd.f32 %v5001, %v5265
  %5267 = vdwg.mxu0
  %v5268 = vand.u32 %v20, 4294901760
  %5269 = vmatprep.subr.mxu0 %v5268
  %v5270 = vand.u32 %v19, 4294901760
  %5271 = vmatpush1.msra.mxu0 %v5270
  %v5272 = vand.u32 %v28, 4294901760
  %5273 = vmatprep.subr.mxu0 %v5272
  %v5274 = vand.u32 %v27, 4294901760
  %5275 = vmatpush1.msra.mxu0 %v5274
  %v5276 = vand.u32 %v36, 4294901760
  %5277 = vmatprep.subr.mxu0 %v5276
  %v5278 = vand.u32 %v35, 4294901760
  %5279 = vmatpush1.msra.mxu0 %v5278
  %v5280 = vand.u32 %v44, 4294901760
  %5281 = vmatprep.subr.mxu0 %v5280
  %v5282 = vand.u32 %v43, 4294901760
  %5283 = vmatpush1.msra.mxu0 %v5282
  %v5284 = vand.u32 %v52, 4294901760
  %5285 = vmatprep.subr.mxu0 %v5284
  %v5286 = vand.u32 %v51, 4294901760
  %5287 = vmatpush1.msra.mxu0 %v5286
  %v5288 = vand.u32 %v60, 4294901760
  %5289 = vmatprep.subr.mxu0 %v5288
  %v5290 = vand.u32 %v59, 4294901760
  %5291 = vmatpush1.msra.mxu0 %v5290
  %v5292 = vand.u32 %v68, 4294901760
  %5293 = vmatprep.subr.mxu0 %v5292
  %v5294 = vand.u32 %v67, 4294901760
  %5295 = vmatpush1.msra.mxu0 %v5294
  %v5296 = vand.u32 %v76, 4294901760
  %5297 = vmatprep.subr.mxu0 %v5296
  %v5298 = vand.u32 %v75, 4294901760
  %5299 = vmatpush1.msra.mxu0 %v5298
  %v5300 = vand.u32 %v84, 4294901760
  %5301 = vmatprep.subr.mxu0 %v5300
  %v5302 = vand.u32 %v83, 4294901760
  %5303 = vmatpush1.msra.mxu0 %v5302
  %v5304 = vand.u32 %v92, 4294901760
  %5305 = vmatprep.subr.mxu0 %v5304
  %v5306 = vand.u32 %v91, 4294901760
  %5307 = vmatpush1.msra.mxu0 %v5306
  %v5308 = vand.u32 %v100, 4294901760
  %5309 = vmatprep.subr.mxu0 %v5308
  %v5310 = vand.u32 %v99, 4294901760
  %5311 = vmatpush1.msra.mxu0 %v5310
  %v5312 = vand.u32 %v108, 4294901760
  %5313 = vmatprep.subr.mxu0 %v5312
  %v5314 = vand.u32 %v107, 4294901760
  %5315 = vmatpush1.msra.mxu0 %v5314
  %v5316 = vand.u32 %v116, 4294901760
  %5317 = vmatprep.subr.mxu0 %v5316
  %v5318 = vand.u32 %v115, 4294901760
  %5319 = vmatpush1.msra.mxu0 %v5318
  %v5320 = vand.u32 %v124, 4294901760
  %5321 = vmatprep.subr.mxu0 %v5320
  %v5322 = vand.u32 %v123, 4294901760
  %5323 = vmatpush1.msra.mxu0 %v5322
  %v5324 = vand.u32 %v132, 4294901760
  %5325 = vmatprep.subr.mxu0 %v5324
  %v5326 = vand.u32 %v131, 4294901760
  %5327 = vmatpush1.msra.mxu0 %v5326
  %v5328 = vand.u32 %v140, 4294901760
  %5329 = vmatprep.subr.mxu0 %v5328
  %v5330 = vand.u32 %v139, 4294901760
  %5331 = vmatpush1.msra.mxu0 %v5330
  %v5332 = vand.u32 %v148, 4294901760
  %5333 = vmatprep.subr.mxu0 %v5332
  %v5334 = vand.u32 %v147, 4294901760
  %5335 = vmatpush1.msra.mxu0 %v5334
  %v5336 = vand.u32 %v156, 4294901760
  %5337 = vmatprep.subr.mxu0 %v5336
  %v5338 = vand.u32 %v155, 4294901760
  %5339 = vmatpush1.msra.mxu0 %v5338
  %v5340 = vand.u32 %v164, 4294901760
  %5341 = vmatprep.subr.mxu0 %v5340
  %v5342 = vand.u32 %v163, 4294901760
  %5343 = vmatpush1.msra.mxu0 %v5342
  %v5344 = vand.u32 %v172, 4294901760
  %5345 = vmatprep.subr.mxu0 %v5344
  %v5346 = vand.u32 %v171, 4294901760
  %5347 = vmatpush1.msra.mxu0 %v5346
  %v5348 = vand.u32 %v180, 4294901760
  %5349 = vmatprep.subr.mxu0 %v5348
  %v5350 = vand.u32 %v179, 4294901760
  %5351 = vmatpush1.msra.mxu0 %v5350
  %v5352 = vand.u32 %v188, 4294901760
  %5353 = vmatprep.subr.mxu0 %v5352
  %v5354 = vand.u32 %v187, 4294901760
  %5355 = vmatpush1.msra.mxu0 %v5354
  %v5356 = vand.u32 %v196, 4294901760
  %5357 = vmatprep.subr.mxu0 %v5356
  %v5358 = vand.u32 %v195, 4294901760
  %5359 = vmatpush1.msra.mxu0 %v5358
  %v5360 = vand.u32 %v204, 4294901760
  %5361 = vmatprep.subr.mxu0 %v5360
  %v5362 = vand.u32 %v203, 4294901760
  %5363 = vmatpush1.msra.mxu0 %v5362
  %v5364 = vand.u32 %v212, 4294901760
  %5365 = vmatprep.subr.mxu0 %v5364
  %v5366 = vand.u32 %v211, 4294901760
  %5367 = vmatpush1.msra.mxu0 %v5366
  %v5368 = vand.u32 %v220, 4294901760
  %5369 = vmatprep.subr.mxu0 %v5368
  %v5370 = vand.u32 %v219, 4294901760
  %5371 = vmatpush1.msra.mxu0 %v5370
  %v5372 = vand.u32 %v228, 4294901760
  %5373 = vmatprep.subr.mxu0 %v5372
  %v5374 = vand.u32 %v227, 4294901760
  %5375 = vmatpush1.msra.mxu0 %v5374
  %v5376 = vand.u32 %v236, 4294901760
  %5377 = vmatprep.subr.mxu0 %v5376
  %v5378 = vand.u32 %v235, 4294901760
  %5379 = vmatpush1.msra.mxu0 %v5378
  %v5380 = vand.u32 %v244, 4294901760
  %5381 = vmatprep.subr.mxu0 %v5380
  %v5382 = vand.u32 %v243, 4294901760
  %5383 = vmatpush1.msra.mxu0 %v5382
  %v5384 = vand.u32 %v252, 4294901760
  %5385 = vmatprep.subr.mxu0 %v5384
  %v5386 = vand.u32 %v251, 4294901760
  %5387 = vmatpush1.msra.mxu0 %v5386
  %v5388 = vand.u32 %v260, 4294901760
  %5389 = vmatprep.subr.mxu0 %v5388
  %v5390 = vand.u32 %v259, 4294901760
  %5391 = vmatpush1.msra.mxu0 %v5390
  %v5392 = vand.u32 %v268, 4294901760
  %5393 = vmatprep.subr.mxu0 %v5392
  %v5394 = vand.u32 %v267, 4294901760
  %5395 = vmatpush1.msra.mxu0 %v5394
  %v5396 = vand.u32 %v12, 4294901760
  %5397 = vmatprep.mubr.f32.mxu0 %v5396
  %v5398 = vand.u32 %v11, 4294901760
  %5399 = vmatmul.mubr.f32.gmra.mrb[0].mxu0 %v5398
  %v5400 = vpop.f32.mrb[0].mxu0
  %v5401 = vadd.f32 %v5264, %v5400
  %v5402 = vpop.f32.mrb[0].mxu0
  %v5403 = vadd.f32 %v5266, %v5402
  %5404 = vdwg.mxu0
  %5405 = vst [vmem:[%s2] sm:$0xff] %v1549
  %5406 = vst [vmem:[%s2 + $0x8] sm:$0xff] %v1551
  %5407 = vst [vmem:[%s2 + $0x10] sm:$0xff] %v2833
  %5408 = vst [vmem:[%s2 + $0x18] sm:$0xff] %v2835
  %5409 = vst [vmem:[%s2 + $0x20] sm:$0xff] %v4117
  %5410 = vst [vmem:[%s2 + $0x28] sm:$0xff] %v4119
  %5411 = vst [vmem:[%s2 + $0x30] sm:$0xff] %v5401
  %5412 = vst [vmem:[%s2 + $0x38] sm:$0xff] %v5403
  // Predicated region
  $region10: #{_resize_combined.1} parent=0 // pred_check
    _
  $region11: #{_resize_combined.1} parent=0 // pred_check_branch
    %5414 = sbr.rel (0) target = $region13
  $region12: #{_resize_combined.1} parent=0 // pred_region
    _
  $region13: #{_resize_combined.1} parent=0 // pred_fallthru
    _
  // Predicated region
  $region14: #{_resize_combined.1} parent=0 // pred_check
    _
  $region15: #{_resize_combined.1} parent=0 // pred_check_branch
    %5416 = sbr.rel (0) target = $region17
  $region16: #{_resize_combined.1} parent=0 // pred_region
    _
  $region17: #{_resize_combined.1} parent=0 // pred_fallthru
    _

</llo_original>
